<compile_context>
chip_gen: v7x
topology: tpu7x:2x2x1
jax: 0.10.0
libtpu: 0.0.40
codegen_flags: <defaults>
</compile_context>

<pallas_src>
import jax
import jax.numpy as jnp
import numpy as np
from jax import lax
from jax.experimental import pallas as pl
from jax.experimental.pallas import tpu as pltpu

_TILE_VMEM_BUDGET = 24 * 1024 * 1024   # target per-tile working set


def _sigmoid(x):
    # Numerically stable sigmoid (no exp overflow), lowers to EUP tanh.
    return 0.5 * (jnp.tanh(0.5 * x) + 1.0)


def _vmem_capacity_bytes():
    try:
        return int(pltpu.get_tpu_info().vmem_capacity_bytes)
    except Exception:
        return 128 * 1024 * 1024


def _make_kernel(H, W, Wk, TM, HR, r0, r1, VOFF):
    """H, W: true image extent.  Wk: lane-padded width.  TM: rows per tile.
    HR: row-halo block height (multiple of 8, >= r0+r1).  VOFF: aligned row
    offset of the slab inside the vertical-pass scratch (>= max(r0, r1))."""
    SLAB0 = TM + 2 * HR

    def kernel(pu_ref, pc_ref, pd_ref, gu_ref, gc_ref, gd_ref,
               out_ref, pslab, gslab, vs):
        i = pl.program_id(0)

        # ---- assemble the raw row slab: [upper halo | tile rows | lower halo]
        pslab[0:HR, :] = pu_ref[...]
        pslab[HR:HR + TM, :] = pc_ref[...]
        pslab[HR + TM:SLAB0, :] = pd_ref[...]
        gslab[0:HR, :] = gu_ref[...].astype(jnp.float32)
        gslab[HR:HR + TM, :] = gc_ref[...].astype(jnp.float32)
        gslab[HR + TM:SLAB0, :] = gd_ref[...].astype(jnp.float32)
        x_p = pslab[...]
        g = gslab[...]                      # binary labels as f32 (garbage in
                                            # halo/pad regions is masked below)

        # ---- validity masks w.r.t. the true image extent --------------------
        grow = i * TM - HR + lax.broadcasted_iota(jnp.int32, (SLAB0, Wk), 0)
        gcol = lax.broadcasted_iota(jnp.int32, (SLAB0, Wk), 1)
        row_ok = (grow >= 0) & (grow < H)
        valid = row_ok & (gcol < W)

        # softmax([1 - p, p]) channel 1 == sigmoid(2 p - 1); channel 0 = 1 - c1
        c1 = _sigmoid(2.0 * _sigmoid(x_p) - 1.0)

        # ---- horizontal (lane) pooling: shared rolls feed max AND min chains.
        # Out-of-image / wrapped-in sources are replaced by 0 (max) / 1 (min),
        # which is exact because every pooled value lies in [0, 1].
        def hpool_pair(val, r):
            x0 = jnp.where(valid, val, 0.0)
            hmax = x0
            hmin = jnp.where(valid, val, 1.0)
            for d in range(1, r + 1):
                rr = pltpu.roll(x0, d, axis=1)         # dest j <- src j-d
                ll = pltpu.roll(x0, Wk - d, axis=1)    # dest j <- src j+d
                vr = row_ok & (gcol >= d) & (gcol < W + d)
                vl = row_ok & (gcol < W - d)
                hmax = jnp.maximum(hmax, jnp.where(vr, rr, 0.0))
                hmax = jnp.maximum(hmax, jnp.where(vl, ll, 0.0))
                hmin = jnp.minimum(hmin, jnp.where(vr, rr, 1.0))
                hmin = jnp.minimum(hmin, jnp.where(vl, ll, 1.0))
            return hmax, hmin

        def hpool_max(bmap, r):
            # bmap is >= 0 and already zero outside the valid image region,
            # so only the circular wrap of the roll has to be masked.
            h = bmap
            for d in range(1, r + 1):
                rr = pltpu.roll(bmap, d, axis=1)
                ll = pltpu.roll(bmap, Wk - d, axis=1)
                h = jnp.maximum(h, jnp.where(gcol >= d, rr, 0.0))
                h = jnp.maximum(h, jnp.where(gcol < Wk - d, ll, 0.0))
            return h

        # ---- vertical (sublane) pooling as shifted loads from a halo'd VMEM
        # scratch (vld + VPU max/min instead of XLU axis-0 rolls).
        def vpool(h, r, fill, op, start, nrows):
            if r == 0:
                return h[start:start + nrows, :]
            vs[VOFF - r:VOFF, :] = jnp.full((r, Wk), fill, jnp.float32)
            vs[VOFF:VOFF + SLAB0, :] = h
            vs[VOFF + SLAB0:VOFF + SLAB0 + r, :] = jnp.full(
                (r, Wk), fill, jnp.float32)
            base = VOFF - r + start
            acc = vs[base:base + nrows, :]
            for dd in range(1, 2 * r + 1):
                acc = op(acc, vs[base + dd:base + dd + nrows, :])
            return acc

        # ---- level-0 pools (theta0); min-pool covers the complementary channel
        hx_c1, hn_c1 = hpool_pair(c1, r0)
        hx_g, hn_g = hpool_pair(g, r0)
        mp_c1 = vpool(hx_c1, r0, 0.0, jnp.maximum, 0, SLAB0)
        mn_c1 = vpool(hn_c1, r0, 1.0, jnp.minimum, 0, SLAB0)
        mp_g = vpool(hx_g, r0, 0.0, jnp.maximum, 0, SLAB0)
        mn_g = vpool(hn_g, r0, 1.0, jnp.minimum, 0, SLAB0)

        # boundary maps (channel 0 pools c1 / gt; channel 1 pools 1-c1 / 1-gt
        # via maxpool(1-x) = 1 - minpool(x)), zeroed outside the valid image.
        pred_b0 = jnp.where(valid, mp_c1 - c1, 0.0)
        gt_b0 = jnp.where(valid, mp_g - g, 0.0)
        pred_b1 = jnp.where(valid, c1 - mn_c1, 0.0)
        gt_b1 = jnp.where(valid, g - mn_g, 0.0)

        # ---- level-1 pools (theta); only this tile's TM owned rows produced
        gt_e0 = vpool(hpool_max(gt_b0, r1), r1, 0.0, jnp.maximum, HR, TM)
        pr_e0 = vpool(hpool_max(pred_b0, r1), r1, 0.0, jnp.maximum, HR, TM)
        gt_e1 = vpool(hpool_max(gt_b1, r1), r1, 0.0, jnp.maximum, HR, TM)
        pr_e1 = vpool(hpool_max(pred_b1, r1), r1, 0.0, jnp.maximum, HR, TM)

        # owned-row views of the level-0 maps (already zero where invalid)
        pb0 = pred_b0[HR:HR + TM, :]
        gb0 = gt_b0[HR:HR + TM, :]
        pb1 = pred_b1[HR:HR + TM, :]
        gb1 = gt_b1[HR:HR + TM, :]

        # ---- partial sums: bulk reduction on the (otherwise idle) MXU -------
        ones8 = jnp.ones((8, TM), jnp.float32)

        def msum(x):
            t = jnp.dot(ones8, x, preferred_element_type=jnp.float32,
                        precision=lax.Precision.HIGHEST)        # (8, Wk)
            return jnp.sum(jnp.sum(t, axis=1, keepdims=True),
                           axis=0, keepdims=True) * 0.125        # (1, 1)

        sums = [msum(pb0), msum(gb0), msum(pb0 * gt_e0), msum(pr_e0 * gb0),
                msum(pb1), msum(gb1), msum(pb1 * gt_e1), msum(pr_e1 * gb1)]

        lane = lax.broadcasted_iota(jnp.int32, (1, 8), 1)
        row = jnp.zeros((1, 8), jnp.float32)
        for k, s in enumerate(sums):
            row = row + jnp.where(lane == k, s, 0.0)
        out_ref[...] = row.reshape(1, 1, 8)

    return kernel


def boundary_loss(pred, gt, theta0=3, theta=5, tile_rows=None):
    assert theta0 % 2 == 1 and theta % 2 == 1, "odd pool sizes required"
    H, W = pred.shape
    assert gt.shape == (H, W)
    r0 = (theta0 - 1) // 2
    r1 = (theta - 1) // 2
    halo = r0 + r1
    HR = max(8, ((halo + 7) // 8) * 8)          # row halo block, multiple of 8
    VOFF = max(8, ((max(r0, r1) + 7) // 8) * 8)

    pred_k = pred.astype(jnp.float32)
    gt_k = gt.astype(jnp.int32)

    # Lane padding only when W is not already a multiple of 128.
    Wk = ((W + 127) // 128) * 128
    if Wk != W:
        pred_k = jnp.pad(pred_k, ((0, 0), (0, Wk - W)))
        gt_k = jnp.pad(gt_k, ((0, 0), (0, Wk - W)))
    # Row padding only for images shorter than one halo block.
    Hk = H
    if Hk < HR:
        pred_k = jnp.pad(pred_k, ((0, HR - Hk), (0, 0)))
        gt_k = jnp.pad(gt_k, ((0, HR - Hk), (0, 0)))
        Hk = HR

    # ---- row-tile size: largest tile whose working set fits the budget ------
    if tile_rows is None:
        budget_rows = max(3 * HR, _TILE_VMEM_BUDGET // (36 * 4 * Wk))
        tm = max(HR, ((budget_rows - 2 * HR) // HR) * HR)
        tm = min(tm, max(HR, (256 // HR) * HR))
    else:
        tm = max(HR, (int(tile_rows) // HR) * HR)

    if tm >= Hk:
        TM = Hk
        num_tiles = 1
    else:
        TM = tm
        num_tiles = -(-Hk // TM)

    SLAB0 = TM + 2 * HR
    tpb = max(TM // HR, 1)
    n_hr_blocks = -(-Hk // HR)

    def center_map(i):
        return (i, 0)

    def up_map(i):      # HR rows immediately above this tile (content masked
        return (jnp.maximum(i * tpb - 1, 0), 0)          # when out of image)

    def down_map(i):    # HR rows immediately below this tile
        return (jnp.minimum((i + 1) * tpb, n_hr_blocks - 1), 0)

    grid_spec = pltpu.PrefetchScalarGridSpec(
        num_scalar_prefetch=0,
        grid=(num_tiles,),
        in_specs=[
            pl.BlockSpec((HR, Wk), up_map),        # pred upper halo
            pl.BlockSpec((TM, Wk), center_map),    # pred tile rows
            pl.BlockSpec((HR, Wk), down_map),      # pred lower halo
            pl.BlockSpec((HR, Wk), up_map),        # gt upper halo
            pl.BlockSpec((TM, Wk), center_map),    # gt tile rows
            pl.BlockSpec((HR, Wk), down_map),      # gt lower halo
        ],
        out_specs=pl.BlockSpec((1, 1, 8), lambda i: (i, 0, 0)),
        scratch_shapes=[
            pltpu.VMEM((SLAB0, Wk), jnp.float32),            # pred slab
            pltpu.VMEM((SLAB0, Wk), jnp.float32),            # gt slab
            pltpu.VMEM((SLAB0 + 2 * VOFF, Wk), jnp.float32),  # vertical pass
        ],
    )

    # Generation-aware VMEM cap: never more than 75% of physical VMEM
    # (48 MiB on v7x, up to 96 MiB on v5e/v6e), sized from the tile estimate.
    est = (40 * SLAB0 + 8 * TM + 8 * HR) * Wk * 4 + (4 << 20)
    cap = _vmem_capacity_bytes()
    vmem_limit = int(min(int(0.75 * cap), max(48 * 1024 * 1024, 2 * est)))

    tile_sums = pl.pallas_call(
        _make_kernel(H, W, Wk, TM, HR, r0, r1, VOFF),
        out_shape=jax.ShapeDtypeStruct((num_tiles, 1, 8), jnp.float32),
        grid_spec=grid_spec,
        compiler_params=pltpu.CompilerParams(
            dimension_semantics=("parallel",),
            vmem_limit_bytes=vmem_limit),
    )(pred_k, pred_k, pred_k, gt_k, gt_k, gt_k)

    # ---- tiny epilogue: combine per-tile partial sums into P / R / BF1 ------
    s = jnp.sum(tile_sums.reshape(num_tiles, 8), axis=0)
    eps = 1e-7
    P0 = s[2] / (s[0] + eps)
    R0 = s[3] / (s[1] + eps)
    P1 = s[6] / (s[4] + eps)
    R1 = s[7] / (s[5] + eps)
    bf1_0 = 2.0 * P0 * R0 / (P0 + R0 + eps)
    bf1_1 = 2.0 * P1 * R1 / (P1 + R1 + eps)
    return 0.5 * ((1.0 - bf1_0) + (1.0 - bf1_1))   # mean over (n=1, c=2)


def reference_boundary_loss(pred, gt, theta0=3, theta=5):
    """Pure-JAX reference mirroring the PyTorch forward."""
    p = (1.0 / (1.0 + jnp.exp(-pred)))[None, None]            # (1,1,H,W)
    stack = jnp.concatenate([1.0 - p, p], axis=1)             # (1,2,H,W)
    sm = jax.nn.softmax(stack, axis=1)
    oh = jax.nn.one_hot(gt, 2)[None]                          # (1,H,W,2)
    oh = jnp.transpose(oh, (0, 3, 1, 2))                      # (1,2,H,W)

    def mp(x, k):
        r = (k - 1) // 2
        return lax.reduce_window(
            x, -jnp.inf, lax.max,
            (1, 1, k, k), (1, 1, 1, 1),
            ((0, 0), (0, 0), (r, r), (r, r)))

    gt_b = mp(1.0 - oh, theta0) - (1.0 - oh)
    pred_b = mp(1.0 - sm, theta0) - (1.0 - sm)
    gt_b_ext = mp(gt_b, theta)
    pred_b_ext = mp(pred_b, theta)
    s = lambda x: jnp.sum(x, axis=(2, 3))
    P = s(pred_b * gt_b_ext) / (s(pred_b) + 1e-7)
    R = s(pred_b_ext * gt_b) / (s(gt_b) + 1e-7)
    BF1 = 2 * P * R / (P + R + 1e-7)
    return jnp.mean(1.0 - BF1)


if __name__ == "__main__":
    key = jax.random.PRNGKey(0)
    kp, kg = jax.random.split(key)

    # 1) small single-tile image
    H, W = 16, 16
    pred = jax.random.normal(kp, (H, W), dtype=jnp.float32)
    gt = (jax.random.uniform(kg, (H, W)) > 0.5).astype(jnp.int32)
    loss = boundary_loss(pred, gt)
    jax.block_until_ready(loss)
    ref = reference_boundary_loss(pred, gt)
    np.testing.assert_allclose(np.asarray(loss), np.asarray(ref),
                               rtol=1e-3, atol=1e-5)

    # 2) multi-tile (row-streamed) path: halo blocks, partial last tile,
    #    non-multiple-of-128 width.
    kp2, kg2 = jax.random.split(kg)
    H2, W2 = 52, 40
    pred2 = jax.random.normal(kp2, (H2, W2), dtype=jnp.float32)
    gt2 = (jax.random.uniform(kg2, (H2, W2)) > 0.5).astype(jnp.int32)
    loss2 = boundary_loss(pred2, gt2, tile_rows=16)
    jax.block_until_ready(loss2)
    ref2 = reference_boundary_loss(pred2, gt2)
    np.testing.assert_allclose(np.asarray(loss2), np.asarray(ref2),
                               rtol=1e-3, atol=1e-5)

    print("KERNEL_OK")
</pallas_src>

<mosaic_0001>
module attributes {stable_mosaic.version = 11 : i64} {
  func.func @kernel(%arg0: i32, %arg1: memref<8x128xf32, #tpu.memory_space<vmem>>, %arg2: memref<16x128xf32, #tpu.memory_space<vmem>>, %arg3: memref<8x128xf32, #tpu.memory_space<vmem>>, %arg4: memref<8x128xi32, #tpu.memory_space<vmem>>, %arg5: memref<16x128xi32, #tpu.memory_space<vmem>>, %arg6: memref<8x128xi32, #tpu.memory_space<vmem>>, %arg7: memref<1x1x8xf32, #tpu.memory_space<vmem>>, %arg8: memref<32x128xf32, #tpu.memory_space<vmem>>, %arg9: memref<32x128xf32, #tpu.memory_space<vmem>>, %arg10: memref<48x128xf32, #tpu.memory_space<vmem>>) attributes {dimension_semantics = [#tpu.dimension_semantics<parallel>], iteration_bounds = array<i64: 1>, scalar_prefetch = 0 : i64, scratch_operands = 3 : i64, tpu.core_type = #tpu.core_type<tc>, window_params = [{transform_indices = @transform_0, window_bounds = array<i64: 8, 128>}, {transform_indices = @transform_1, window_bounds = array<i64: 16, 128>}, {transform_indices = @transform_2, window_bounds = array<i64: 8, 128>}, {transform_indices = @transform_3, window_bounds = array<i64: 8, 128>}, {transform_indices = @transform_4, window_bounds = array<i64: 16, 128>}, {transform_indices = @transform_5, window_bounds = array<i64: 8, 128>}, {transform_indices = @transform_6, window_bounds = array<i64: 1, 1, 8>}]} {
    %c0 = arith.constant 0 : index
    %c0_0 = arith.constant 0 : index
    %0 = vector.load %arg1[%c0, %c0_0] : memref<8x128xf32, #tpu.memory_space<vmem>>, vector<8x128xf32>
    %c0_1 = arith.constant 0 : index
    %c0_2 = arith.constant 0 : index
    %1 = vector.load %arg8[%c0_1, %c0_2] : memref<32x128xf32, #tpu.memory_space<vmem>>, vector<8x128xf32>
    tpu.vector_store %arg8[%c0_1, %c0_2], %0 {strides = array<i32>} : memref<32x128xf32, #tpu.memory_space<vmem>>, vector<8x128xf32>,
    %c0_3 = arith.constant 0 : index
    %c0_4 = arith.constant 0 : index
    %2 = vector.load %arg2[%c0_3, %c0_4] : memref<16x128xf32, #tpu.memory_space<vmem>>, vector<16x128xf32>
    %c8 = arith.constant 8 : index
    %c0_5 = arith.constant 0 : index
    %3 = vector.load %arg8[%c8, %c0_5] : memref<32x128xf32, #tpu.memory_space<vmem>>, vector<16x128xf32>
    tpu.vector_store %arg8[%c8, %c0_5], %2 {strides = array<i32>} : memref<32x128xf32, #tpu.memory_space<vmem>>, vector<16x128xf32>,
    %c0_6 = arith.constant 0 : index
    %c0_7 = arith.constant 0 : index
    %4 = vector.load %arg3[%c0_6, %c0_7] : memref<8x128xf32, #tpu.memory_space<vmem>>, vector<8x128xf32>
    %c24 = arith.constant 24 : index
    %c0_8 = arith.constant 0 : index
    %5 = vector.load %arg8[%c24, %c0_8] : memref<32x128xf32, #tpu.memory_space<vmem>>, vector<8x128xf32>
    tpu.vector_store %arg8[%c24, %c0_8], %4 {strides = array<i32>} : memref<32x128xf32, #tpu.memory_space<vmem>>, vector<8x128xf32>,
    %c0_9 = arith.constant 0 : index
    %c0_10 = arith.constant 0 : index
    %6 = vector.load %arg4[%c0_9, %c0_10] : memref<8x128xi32, #tpu.memory_space<vmem>>, vector<8x128xi32>
    %7 = arith.sitofp %6 : vector<8x128xi32> to vector<8x128xf32>
    %c0_11 = arith.constant 0 : index
    %c0_12 = arith.constant 0 : index
    %8 = vector.load %arg9[%c0_11, %c0_12] : memref<32x128xf32, #tpu.memory_space<vmem>>, vector<8x128xf32>
    tpu.vector_store %arg9[%c0_11, %c0_12], %7 {strides = array<i32>} : memref<32x128xf32, #tpu.memory_space<vmem>>, vector<8x128xf32>,
    %c0_13 = arith.constant 0 : index
    %c0_14 = arith.constant 0 : index
    %9 = vector.load %arg5[%c0_13, %c0_14] : memref<16x128xi32, #tpu.memory_space<vmem>>, vector<16x128xi32>
    %10 = arith.sitofp %9 : vector<16x128xi32> to vector<16x128xf32>
    %c8_15 = arith.constant 8 : index
    %c0_16 = arith.constant 0 : index
    %11 = vector.load %arg9[%c8_15, %c0_16] : memref<32x128xf32, #tpu.memory_space<vmem>>, vector<16x128xf32>
    tpu.vector_store %arg9[%c8_15, %c0_16], %10 {strides = array<i32>} : memref<32x128xf32, #tpu.memory_space<vmem>>, vector<16x128xf32>,
    %c0_17 = arith.constant 0 : index
    %c0_18 = arith.constant 0 : index
    %12 = vector.load %arg6[%c0_17, %c0_18] : memref<8x128xi32, #tpu.memory_space<vmem>>, vector<8x128xi32>
    %13 = arith.sitofp %12 : vector<8x128xi32> to vector<8x128xf32>
    %c24_19 = arith.constant 24 : index
    %c0_20 = arith.constant 0 : index
    %14 = vector.load %arg9[%c24_19, %c0_20] : memref<32x128xf32, #tpu.memory_space<vmem>>, vector<8x128xf32>
    tpu.vector_store %arg9[%c24_19, %c0_20], %13 {strides = array<i32>} : memref<32x128xf32, #tpu.memory_space<vmem>>, vector<8x128xf32>,
    %c0_21 = arith.constant 0 : index
    %c0_22 = arith.constant 0 : index
    %15 = vector.load %arg8[%c0_21, %c0_22] : memref<32x128xf32, #tpu.memory_space<vmem>>, vector<32x128xf32>
    %c0_23 = arith.constant 0 : index
    %c0_24 = arith.constant 0 : index
    %16 = vector.load %arg9[%c0_23, %c0_24] : memref<32x128xf32, #tpu.memory_space<vmem>>, vector<32x128xf32>
    %c16_i32 = arith.constant 16 : i32
    %17 = arith.muli %arg0, %c16_i32 : i32
    %c8_i32 = arith.constant 8 : i32
    %18 = arith.subi %17, %c8_i32 : i32
    %19 = tpu.iota {dimensions = array<i32: 0>} : vector<32x128xi32>
    %20 = vector.broadcast %18 : i32 to vector<32x128xi32>
    %21 = arith.addi %20, %19 : vector<32x128xi32>
    %22 = tpu.iota {dimensions = array<i32: 1>} : vector<32x128xi32>
    %c0_i32 = arith.constant 0 : i32
    %23 = vector.broadcast %c0_i32 : i32 to vector<32x128xi32>
    %24 = arith.cmpi sge, %21, %23 : vector<32x128xi32>
    %c16_i32_25 = arith.constant 16 : i32
    %25 = vector.broadcast %c16_i32_25 : i32 to vector<32x128xi32>
    %26 = arith.cmpi slt, %21, %25 : vector<32x128xi32>
    %27 = arith.andi %24, %26 : vector<32x128xi1>
    %c16_i32_26 = arith.constant 16 : i32
    %28 = vector.broadcast %c16_i32_26 : i32 to vector<32x128xi32>
    %29 = arith.cmpi slt, %22, %28 : vector<32x128xi32>
    %30 = arith.andi %27, %29 : vector<32x128xi1>
    %cst = arith.constant 5.000000e-01 : f32
    %31 = vector.broadcast %cst : f32 to vector<32x128xf32>
    %32 = arith.mulf %31, %15 : vector<32x128xf32>
    %33 = math.tanh %32 : vector<32x128xf32>
    %cst_27 = arith.constant 1.000000e+00 : f32
    %34 = vector.broadcast %cst_27 : f32 to vector<32x128xf32>
    %35 = arith.addf %33, %34 : vector<32x128xf32>
    %cst_28 = arith.constant 5.000000e-01 : f32
    %36 = vector.broadcast %cst_28 : f32 to vector<32x128xf32>
    %37 = arith.mulf %36, %35 : vector<32x128xf32>
    %cst_29 = arith.constant 2.000000e+00 : f32
    %38 = vector.broadcast %cst_29 : f32 to vector<32x128xf32>
    %39 = arith.mulf %38, %37 : vector<32x128xf32>
    %cst_30 = arith.constant 1.000000e+00 : f32
    %40 = vector.broadcast %cst_30 : f32 to vector<32x128xf32>
    %41 = arith.subf %39, %40 : vector<32x128xf32>
    %cst_31 = arith.constant 5.000000e-01 : f32
    %42 = vector.broadcast %cst_31 : f32 to vector<32x128xf32>
    %43 = arith.mulf %42, %41 : vector<32x128xf32>
    %44 = math.tanh %43 : vector<32x128xf32>
    %cst_32 = arith.constant 1.000000e+00 : f32
    %45 = vector.broadcast %cst_32 : f32 to vector<32x128xf32>
    %46 = arith.addf %44, %45 : vector<32x128xf32>
    %cst_33 = arith.constant 5.000000e-01 : f32
    %47 = vector.broadcast %cst_33 : f32 to vector<32x128xf32>
    %48 = arith.mulf %47, %46 : vector<32x128xf32>
    %cst_34 = arith.constant 0.000000e+00 : f32
    %49 = vector.broadcast %cst_34 : f32 to vector<32x128xf32>
    %50 = arith.select %30, %48, %49 : vector<32x128xi1>, vector<32x128xf32>
    %cst_35 = arith.constant 1.000000e+00 : f32
    %51 = vector.broadcast %cst_35 : f32 to vector<32x128xf32>
    %52 = arith.select %30, %48, %51 : vector<32x128xi1>, vector<32x128xf32>
    %c1_i32 = arith.constant 1 : i32
    %53 = tpu.dynamic_rotate %50 by %c1_i32 dim 1 : vector<32x128xf32>, i32 -> vector<32x128xf32>
    %c127_i32 = arith.constant 127 : i32
    %54 = tpu.dynamic_rotate %50 by %c127_i32 dim 1 : vector<32x128xf32>, i32 -> vector<32x128xf32>
    %c1_i32_36 = arith.constant 1 : i32
    %55 = vector.broadcast %c1_i32_36 : i32 to vector<32x128xi32>
    %56 = arith.cmpi sge, %22, %55 : vector<32x128xi32>
    %57 = arith.andi %27, %56 : vector<32x128xi1>
    %c17_i32 = arith.constant 17 : i32
    %58 = vector.broadcast %c17_i32 : i32 to vector<32x128xi32>
    %59 = arith.cmpi slt, %22, %58 : vector<32x128xi32>
    %60 = arith.andi %57, %59 : vector<32x128xi1>
    %c15_i32 = arith.constant 15 : i32
    %61 = vector.broadcast %c15_i32 : i32 to vector<32x128xi32>
    %62 = arith.cmpi slt, %22, %61 : vector<32x128xi32>
    %63 = arith.andi %27, %62 : vector<32x128xi1>
    %cst_37 = arith.constant 0.000000e+00 : f32
    %64 = vector.broadcast %cst_37 : f32 to vector<32x128xf32>
    %65 = arith.select %60, %53, %64 : vector<32x128xi1>, vector<32x128xf32>
    %66 = arith.maximumf %50, %65 : vector<32x128xf32>
    %cst_38 = arith.constant 0.000000e+00 : f32
    %67 = vector.broadcast %cst_38 : f32 to vector<32x128xf32>
    %68 = arith.select %63, %54, %67 : vector<32x128xi1>, vector<32x128xf32>
    %69 = arith.maximumf %66, %68 : vector<32x128xf32>
    %cst_39 = arith.constant 1.000000e+00 : f32
    %70 = vector.broadcast %cst_39 : f32 to vector<32x128xf32>
    %71 = arith.select %60, %53, %70 : vector<32x128xi1>, vector<32x128xf32>
    %72 = arith.minimumf %52, %71 : vector<32x128xf32>
    %cst_40 = arith.constant 1.000000e+00 : f32
    %73 = vector.broadcast %cst_40 : f32 to vector<32x128xf32>
    %74 = arith.select %63, %54, %73 : vector<32x128xi1>, vector<32x128xf32>
    %75 = arith.minimumf %72, %74 : vector<32x128xf32>
    %cst_41 = arith.constant 0.000000e+00 : f32
    %76 = vector.broadcast %cst_41 : f32 to vector<32x128xf32>
    %77 = arith.select %30, %16, %76 : vector<32x128xi1>, vector<32x128xf32>
    %cst_42 = arith.constant 1.000000e+00 : f32
    %78 = vector.broadcast %cst_42 : f32 to vector<32x128xf32>
    %79 = arith.select %30, %16, %78 : vector<32x128xi1>, vector<32x128xf32>
    %c1_i32_43 = arith.constant 1 : i32
    %80 = tpu.dynamic_rotate %77 by %c1_i32_43 dim 1 : vector<32x128xf32>, i32 -> vector<32x128xf32>
    %c127_i32_44 = arith.constant 127 : i32
    %81 = tpu.dynamic_rotate %77 by %c127_i32_44 dim 1 : vector<32x128xf32>, i32 -> vector<32x128xf32>
    %c1_i32_45 = arith.constant 1 : i32
    %82 = vector.broadcast %c1_i32_45 : i32 to vector<32x128xi32>
    %83 = arith.cmpi sge, %22, %82 : vector<32x128xi32>
    %84 = arith.andi %27, %83 : vector<32x128xi1>
    %c17_i32_46 = arith.constant 17 : i32
    %85 = vector.broadcast %c17_i32_46 : i32 to vector<32x128xi32>
    %86 = arith.cmpi slt, %22, %85 : vector<32x128xi32>
    %87 = arith.andi %84, %86 : vector<32x128xi1>
    %c15_i32_47 = arith.constant 15 : i32
    %88 = vector.broadcast %c15_i32_47 : i32 to vector<32x128xi32>
    %89 = arith.cmpi slt, %22, %88 : vector<32x128xi32>
    %90 = arith.andi %27, %89 : vector<32x128xi1>
    %cst_48 = arith.constant 0.000000e+00 : f32
    %91 = vector.broadcast %cst_48 : f32 to vector<32x128xf32>
    %92 = arith.select %87, %80, %91 : vector<32x128xi1>, vector<32x128xf32>
    %93 = arith.maximumf %77, %92 : vector<32x128xf32>
    %cst_49 = arith.constant 0.000000e+00 : f32
    %94 = vector.broadcast %cst_49 : f32 to vector<32x128xf32>
    %95 = arith.select %90, %81, %94 : vector<32x128xi1>, vector<32x128xf32>
    %96 = arith.maximumf %93, %95 : vector<32x128xf32>
    %cst_50 = arith.constant 1.000000e+00 : f32
    %97 = vector.broadcast %cst_50 : f32 to vector<32x128xf32>
    %98 = arith.select %87, %80, %97 : vector<32x128xi1>, vector<32x128xf32>
    %99 = arith.minimumf %79, %98 : vector<32x128xf32>
    %cst_51 = arith.constant 1.000000e+00 : f32
    %100 = vector.broadcast %cst_51 : f32 to vector<32x128xf32>
    %101 = arith.select %90, %81, %100 : vector<32x128xi1>, vector<32x128xf32>
    %102 = arith.minimumf %99, %101 : vector<32x128xf32>
    %cst_52 = arith.constant 0.000000e+00 : f32
    %103 = vector.broadcast %cst_52 : f32 to vector<1x128xf32>
    %c7 = arith.constant 7 : index
    %c0_53 = arith.constant 0 : index
    %104 = vector.load %arg10[%c7, %c0_53] : memref<48x128xf32, #tpu.memory_space<vmem>>, vector<1x128xf32>
    tpu.vector_store %arg10[%c7, %c0_53], %103 {strides = array<i32>} : memref<48x128xf32, #tpu.memory_space<vmem>>, vector<1x128xf32>,
    %c8_54 = arith.constant 8 : index
    %c0_55 = arith.constant 0 : index
    %105 = vector.load %arg10[%c8_54, %c0_55] : memref<48x128xf32, #tpu.memory_space<vmem>>, vector<32x128xf32>
    tpu.vector_store %arg10[%c8_54, %c0_55], %69 {strides = array<i32>} : memref<48x128xf32, #tpu.memory_space<vmem>>, vector<32x128xf32>,
    %cst_56 = arith.constant 0.000000e+00 : f32
    %106 = vector.broadcast %cst_56 : f32 to vector<1x128xf32>
    %c40 = arith.constant 40 : index
    %c0_57 = arith.constant 0 : index
    %107 = vector.load %arg10[%c40, %c0_57] : memref<48x128xf32, #tpu.memory_space<vmem>>, vector<1x128xf32>
    tpu.vector_store %arg10[%c40, %c0_57], %106 {strides = array<i32>} : memref<48x128xf32, #tpu.memory_space<vmem>>, vector<1x128xf32>,
    %c7_58 = arith.constant 7 : index
    %c0_59 = arith.constant 0 : index
    %108 = vector.load %arg10[%c7_58, %c0_59] : memref<48x128xf32, #tpu.memory_space<vmem>>, vector<32x128xf32>
    %c8_60 = arith.constant 8 : index
    %c0_61 = arith.constant 0 : index
    %109 = vector.load %arg10[%c8_60, %c0_61] : memref<48x128xf32, #tpu.memory_space<vmem>>, vector<32x128xf32>
    %110 = arith.maximumf %108, %109 : vector<32x128xf32>
    %c9 = arith.constant 9 : index
    %c0_62 = arith.constant 0 : index
    %111 = vector.load %arg10[%c9, %c0_62] : memref<48x128xf32, #tpu.memory_space<vmem>>, vector<32x128xf32>
    %112 = arith.maximumf %110, %111 : vector<32x128xf32>
    %cst_63 = arith.constant 1.000000e+00 : f32
    %113 = vector.broadcast %cst_63 : f32 to vector<1x128xf32>
    %c7_64 = arith.constant 7 : index
    %c0_65 = arith.constant 0 : index
    %114 = vector.load %arg10[%c7_64, %c0_65] : memref<48x128xf32, #tpu.memory_space<vmem>>, vector<1x128xf32>
    tpu.vector_store %arg10[%c7_64, %c0_65], %113 {strides = array<i32>} : memref<48x128xf32, #tpu.memory_space<vmem>>, vector<1x128xf32>,
    %c8_66 = arith.constant 8 : index
    %c0_67 = arith.constant 0 : index
    %115 = vector.load %arg10[%c8_66, %c0_67] : memref<48x128xf32, #tpu.memory_space<vmem>>, vector<32x128xf32>
    tpu.vector_store %arg10[%c8_66, %c0_67], %75 {strides = array<i32>} : memref<48x128xf32, #tpu.memory_space<vmem>>, vector<32x128xf32>,
    %cst_68 = arith.constant 1.000000e+00 : f32
    %116 = vector.broadcast %cst_68 : f32 to vector<1x128xf32>
    %c40_69 = arith.constant 40 : index
    %c0_70 = arith.constant 0 : index
    %117 = vector.load %arg10[%c40_69, %c0_70] : memref<48x128xf32, #tpu.memory_space<vmem>>, vector<1x128xf32>
    tpu.vector_store %arg10[%c40_69, %c0_70], %116 {strides = array<i32>} : memref<48x128xf32, #tpu.memory_space<vmem>>, vector<1x128xf32>,
    %c7_71 = arith.constant 7 : index
    %c0_72 = arith.constant 0 : index
    %118 = vector.load %arg10[%c7_71, %c0_72] : memref<48x128xf32, #tpu.memory_space<vmem>>, vector<32x128xf32>
    %c8_73 = arith.constant 8 : index
    %c0_74 = arith.constant 0 : index
    %119 = vector.load %arg10[%c8_73, %c0_74] : memref<48x128xf32, #tpu.memory_space<vmem>>, vector<32x128xf32>
    %120 = arith.minimumf %118, %119 : vector<32x128xf32>
    %c9_75 = arith.constant 9 : index
    %c0_76 = arith.constant 0 : index
    %121 = vector.load %arg10[%c9_75, %c0_76] : memref<48x128xf32, #tpu.memory_space<vmem>>, vector<32x128xf32>
    %122 = arith.minimumf %120, %121 : vector<32x128xf32>
    %cst_77 = arith.constant 0.000000e+00 : f32
    %123 = vector.broadcast %cst_77 : f32 to vector<1x128xf32>
    %c7_78 = arith.constant 7 : index
    %c0_79 = arith.constant 0 : index
    %124 = vector.load %arg10[%c7_78, %c0_79] : memref<48x128xf32, #tpu.memory_space<vmem>>, vector<1x128xf32>
    tpu.vector_store %arg10[%c7_78, %c0_79], %123 {strides = array<i32>} : memref<48x128xf32, #tpu.memory_space<vmem>>, vector<1x128xf32>,
    %c8_80 = arith.constant 8 : index
    %c0_81 = arith.constant 0 : index
    %125 = vector.load %arg10[%c8_80, %c0_81] : memref<48x128xf32, #tpu.memory_space<vmem>>, vector<32x128xf32>
    tpu.vector_store %arg10[%c8_80, %c0_81], %96 {strides = array<i32>} : memref<48x128xf32, #tpu.memory_space<vmem>>, vector<32x128xf32>,
    %cst_82 = arith.constant 0.000000e+00 : f32
    %126 = vector.broadcast %cst_82 : f32 to vector<1x128xf32>
    %c40_83 = arith.constant 40 : index
    %c0_84 = arith.constant 0 : index
    %127 = vector.load %arg10[%c40_83, %c0_84] : memref<48x128xf32, #tpu.memory_space<vmem>>, vector<1x128xf32>
    tpu.vector_store %arg10[%c40_83, %c0_84], %126 {strides = array<i32>} : memref<48x128xf32, #tpu.memory_space<vmem>>, vector<1x128xf32>,
    %c7_85 = arith.constant 7 : index
    %c0_86 = arith.constant 0 : index
    %128 = vector.load %arg10[%c7_85, %c0_86] : memref<48x128xf32, #tpu.memory_space<vmem>>, vector<32x128xf32>
    %c8_87 = arith.constant 8 : index
    %c0_88 = arith.constant 0 : index
    %129 = vector.load %arg10[%c8_87, %c0_88] : memref<48x128xf32, #tpu.memory_space<vmem>>, vector<32x128xf32>
    %130 = arith.maximumf %128, %129 : vector<32x128xf32>
    %c9_89 = arith.constant 9 : index
    %c0_90 = arith.constant 0 : index
    %131 = vector.load %arg10[%c9_89, %c0_90] : memref<48x128xf32, #tpu.memory_space<vmem>>, vector<32x128xf32>
    %132 = arith.maximumf %130, %131 : vector<32x128xf32>
    %cst_91 = arith.constant 1.000000e+00 : f32
    %133 = vector.broadcast %cst_91 : f32 to vector<1x128xf32>
    %c7_92 = arith.constant 7 : index
    %c0_93 = arith.constant 0 : index
    %134 = vector.load %arg10[%c7_92, %c0_93] : memref<48x128xf32, #tpu.memory_space<vmem>>, vector<1x128xf32>
    tpu.vector_store %arg10[%c7_92, %c0_93], %133 {strides = array<i32>} : memref<48x128xf32, #tpu.memory_space<vmem>>, vector<1x128xf32>,
    %c8_94 = arith.constant 8 : index
    %c0_95 = arith.constant 0 : index
    %135 = vector.load %arg10[%c8_94, %c0_95] : memref<48x128xf32, #tpu.memory_space<vmem>>, vector<32x128xf32>
    tpu.vector_store %arg10[%c8_94, %c0_95], %102 {strides = array<i32>} : memref<48x128xf32, #tpu.memory_space<vmem>>, vector<32x128xf32>,
    %cst_96 = arith.constant 1.000000e+00 : f32
    %136 = vector.broadcast %cst_96 : f32 to vector<1x128xf32>
    %c40_97 = arith.constant 40 : index
    %c0_98 = arith.constant 0 : index
    %137 = vector.load %arg10[%c40_97, %c0_98] : memref<48x128xf32, #tpu.memory_space<vmem>>, vector<1x128xf32>
    tpu.vector_store %arg10[%c40_97, %c0_98], %136 {strides = array<i32>} : memref<48x128xf32, #tpu.memory_space<vmem>>, vector<1x128xf32>,
    %c7_99 = arith.constant 7 : index
    %c0_100 = arith.constant 0 : index
    %138 = vector.load %arg10[%c7_99, %c0_100] : memref<48x128xf32, #tpu.memory_space<vmem>>, vector<32x128xf32>
    %c8_101 = arith.constant 8 : index
    %c0_102 = arith.constant 0 : index
    %139 = vector.load %arg10[%c8_101, %c0_102] : memref<48x128xf32, #tpu.memory_space<vmem>>, vector<32x128xf32>
    %140 = arith.minimumf %138, %139 : vector<32x128xf32>
    %c9_103 = arith.constant 9 : index
    %c0_104 = arith.constant 0 : index
    %141 = vector.load %arg10[%c9_103, %c0_104] : memref<48x128xf32, #tpu.memory_space<vmem>>, vector<32x128xf32>
    %142 = arith.minimumf %140, %141 : vector<32x128xf32>
    %143 = arith.subf %112, %48 : vector<32x128xf32>
    %cst_105 = arith.constant 0.000000e+00 : f32
    %144 = vector.broadcast %cst_105 : f32 to vector<32x128xf32>
    %145 = arith.select %30, %143, %144 : vector<32x128xi1>, vector<32x128xf32>
    %146 = arith.subf %132, %16 : vector<32x128xf32>
    %cst_106 = arith.constant 0.000000e+00 : f32
    %147 = vector.broadcast %cst_106 : f32 to vector<32x128xf32>
    %148 = arith.select %30, %146, %147 : vector<32x128xi1>, vector<32x128xf32>
    %149 = arith.subf %48, %122 : vector<32x128xf32>
    %cst_107 = arith.constant 0.000000e+00 : f32
    %150 = vector.broadcast %cst_107 : f32 to vector<32x128xf32>
    %151 = arith.select %30, %149, %150 : vector<32x128xi1>, vector<32x128xf32>
    %152 = arith.subf %16, %142 : vector<32x128xf32>
    %cst_108 = arith.constant 0.000000e+00 : f32
    %153 = vector.broadcast %cst_108 : f32 to vector<32x128xf32>
    %154 = arith.select %30, %152, %153 : vector<32x128xi1>, vector<32x128xf32>
    %c1_i32_109 = arith.constant 1 : i32
    %155 = tpu.dynamic_rotate %148 by %c1_i32_109 dim 1 : vector<32x128xf32>, i32 -> vector<32x128xf32>
    %c127_i32_110 = arith.constant 127 : i32
    %156 = tpu.dynamic_rotate %148 by %c127_i32_110 dim 1 : vector<32x128xf32>, i32 -> vector<32x128xf32>
    %c1_i32_111 = arith.constant 1 : i32
    %157 = vector.broadcast %c1_i32_111 : i32 to vector<32x128xi32>
    %158 = arith.cmpi sge, %22, %157 : vector<32x128xi32>
    %cst_112 = arith.constant 0.000000e+00 : f32
    %159 = vector.broadcast %cst_112 : f32 to vector<32x128xf32>
    %160 = arith.select %158, %155, %159 : vector<32x128xi1>, vector<32x128xf32>
    %161 = arith.maximumf %148, %160 : vector<32x128xf32>
    %c127_i32_113 = arith.constant 127 : i32
    %162 = vector.broadcast %c127_i32_113 : i32 to vector<32x128xi32>
    %163 = arith.cmpi slt, %22, %162 : vector<32x128xi32>
    %cst_114 = arith.constant 0.000000e+00 : f32
    %164 = vector.broadcast %cst_114 : f32 to vector<32x128xf32>
    %165 = arith.select %163, %156, %164 : vector<32x128xi1>, vector<32x128xf32>
    %166 = arith.maximumf %161, %165 : vector<32x128xf32>
    %c2_i32 = arith.constant 2 : i32
    %167 = tpu.dynamic_rotate %148 by %c2_i32 dim 1 : vector<32x128xf32>, i32 -> vector<32x128xf32>
    %c126_i32 = arith.constant 126 : i32
    %168 = tpu.dynamic_rotate %148 by %c126_i32 dim 1 : vector<32x128xf32>, i32 -> vector<32x128xf32>
    %c2_i32_115 = arith.constant 2 : i32
    %169 = vector.broadcast %c2_i32_115 : i32 to vector<32x128xi32>
    %170 = arith.cmpi sge, %22, %169 : vector<32x128xi32>
    %cst_116 = arith.constant 0.000000e+00 : f32
    %171 = vector.broadcast %cst_116 : f32 to vector<32x128xf32>
    %172 = arith.select %170, %167, %171 : vector<32x128xi1>, vector<32x128xf32>
    %173 = arith.maximumf %166, %172 : vector<32x128xf32>
    %c126_i32_117 = arith.constant 126 : i32
    %174 = vector.broadcast %c126_i32_117 : i32 to vector<32x128xi32>
    %175 = arith.cmpi slt, %22, %174 : vector<32x128xi32>
    %cst_118 = arith.constant 0.000000e+00 : f32
    %176 = vector.broadcast %cst_118 : f32 to vector<32x128xf32>
    %177 = arith.select %175, %168, %176 : vector<32x128xi1>, vector<32x128xf32>
    %178 = arith.maximumf %173, %177 : vector<32x128xf32>
    %cst_119 = arith.constant 0.000000e+00 : f32
    %179 = vector.broadcast %cst_119 : f32 to vector<2x128xf32>
    %c6 = arith.constant 6 : index
    %c0_120 = arith.constant 0 : index
    %180 = vector.load %arg10[%c6, %c0_120] : memref<48x128xf32, #tpu.memory_space<vmem>>, vector<2x128xf32>
    tpu.vector_store %arg10[%c6, %c0_120], %179 {strides = array<i32>} : memref<48x128xf32, #tpu.memory_space<vmem>>, vector<2x128xf32>,
    %c8_121 = arith.constant 8 : index
    %c0_122 = arith.constant 0 : index
    %181 = vector.load %arg10[%c8_121, %c0_122] : memref<48x128xf32, #tpu.memory_space<vmem>>, vector<32x128xf32>
    tpu.vector_store %arg10[%c8_121, %c0_122], %178 {strides = array<i32>} : memref<48x128xf32, #tpu.memory_space<vmem>>, vector<32x128xf32>,
    %cst_123 = arith.constant 0.000000e+00 : f32
    %182 = vector.broadcast %cst_123 : f32 to vector<2x128xf32>
    %c40_124 = arith.constant 40 : index
    %c0_125 = arith.constant 0 : index
    %183 = vector.load %arg10[%c40_124, %c0_125] : memref<48x128xf32, #tpu.memory_space<vmem>>, vector<2x128xf32>
    tpu.vector_store %arg10[%c40_124, %c0_125], %182 {strides = array<i32>} : memref<48x128xf32, #tpu.memory_space<vmem>>, vector<2x128xf32>,
    %c14 = arith.constant 14 : index
    %c0_126 = arith.constant 0 : index
    %184 = vector.load %arg10[%c14, %c0_126] : memref<48x128xf32, #tpu.memory_space<vmem>>, vector<16x128xf32>
    %c15 = arith.constant 15 : index
    %c0_127 = arith.constant 0 : index
    %185 = vector.load %arg10[%c15, %c0_127] : memref<48x128xf32, #tpu.memory_space<vmem>>, vector<16x128xf32>
    %186 = arith.maximumf %184, %185 : vector<16x128xf32>
    %c16 = arith.constant 16 : index
    %c0_128 = arith.constant 0 : index
    %187 = vector.load %arg10[%c16, %c0_128] : memref<48x128xf32, #tpu.memory_space<vmem>>, vector<16x128xf32>
    %188 = arith.maximumf %186, %187 : vector<16x128xf32>
    %c17 = arith.constant 17 : index
    %c0_129 = arith.constant 0 : index
    %189 = vector.load %arg10[%c17, %c0_129] : memref<48x128xf32, #tpu.memory_space<vmem>>, vector<16x128xf32>
    %190 = arith.maximumf %188, %189 : vector<16x128xf32>
    %c18 = arith.constant 18 : index
    %c0_130 = arith.constant 0 : index
    %191 = vector.load %arg10[%c18, %c0_130] : memref<48x128xf32, #tpu.memory_space<vmem>>, vector<16x128xf32>
    %192 = arith.maximumf %190, %191 : vector<16x128xf32>
    %c1_i32_131 = arith.constant 1 : i32
    %193 = tpu.dynamic_rotate %145 by %c1_i32_131 dim 1 : vector<32x128xf32>, i32 -> vector<32x128xf32>
    %c127_i32_132 = arith.constant 127 : i32
    %194 = tpu.dynamic_rotate %145 by %c127_i32_132 dim 1 : vector<32x128xf32>, i32 -> vector<32x128xf32>
    %c1_i32_133 = arith.constant 1 : i32
    %195 = vector.broadcast %c1_i32_133 : i32 to vector<32x128xi32>
    %196 = arith.cmpi sge, %22, %195 : vector<32x128xi32>
    %cst_134 = arith.constant 0.000000e+00 : f32
    %197 = vector.broadcast %cst_134 : f32 to vector<32x128xf32>
    %198 = arith.select %196, %193, %197 : vector<32x128xi1>, vector<32x128xf32>
    %199 = arith.maximumf %145, %198 : vector<32x128xf32>
    %c127_i32_135 = arith.constant 127 : i32
    %200 = vector.broadcast %c127_i32_135 : i32 to vector<32x128xi32>
    %201 = arith.cmpi slt, %22, %200 : vector<32x128xi32>
    %cst_136 = arith.constant 0.000000e+00 : f32
    %202 = vector.broadcast %cst_136 : f32 to vector<32x128xf32>
    %203 = arith.select %201, %194, %202 : vector<32x128xi1>, vector<32x128xf32>
    %204 = arith.maximumf %199, %203 : vector<32x128xf32>
    %c2_i32_137 = arith.constant 2 : i32
    %205 = tpu.dynamic_rotate %145 by %c2_i32_137 dim 1 : vector<32x128xf32>, i32 -> vector<32x128xf32>
    %c126_i32_138 = arith.constant 126 : i32
    %206 = tpu.dynamic_rotate %145 by %c126_i32_138 dim 1 : vector<32x128xf32>, i32 -> vector<32x128xf32>
    %c2_i32_139 = arith.constant 2 : i32
    %207 = vector.broadcast %c2_i32_139 : i32 to vector<32x128xi32>
    %208 = arith.cmpi sge, %22, %207 : vector<32x128xi32>
    %cst_140 = arith.constant 0.000000e+00 : f32
    %209 = vector.broadcast %cst_140 : f32 to vector<32x128xf32>
    %210 = arith.select %208, %205, %209 : vector<32x128xi1>, vector<32x128xf32>
    %211 = arith.maximumf %204, %210 : vector<32x128xf32>
    %c126_i32_141 = arith.constant 126 : i32
    %212 = vector.broadcast %c126_i32_141 : i32 to vector<32x128xi32>
    %213 = arith.cmpi slt, %22, %212 : vector<32x128xi32>
    %cst_142 = arith.constant 0.000000e+00 : f32
    %214 = vector.broadcast %cst_142 : f32 to vector<32x128xf32>
    %215 = arith.select %213, %206, %214 : vector<32x128xi1>, vector<32x128xf32>
    %216 = arith.maximumf %211, %215 : vector<32x128xf32>
    %cst_143 = arith.constant 0.000000e+00 : f32
    %217 = vector.broadcast %cst_143 : f32 to vector<2x128xf32>
    %c6_144 = arith.constant 6 : index
    %c0_145 = arith.constant 0 : index
    %218 = vector.load %arg10[%c6_144, %c0_145] : memref<48x128xf32, #tpu.memory_space<vmem>>, vector<2x128xf32>
    tpu.vector_store %arg10[%c6_144, %c0_145], %217 {strides = array<i32>} : memref<48x128xf32, #tpu.memory_space<vmem>>, vector<2x128xf32>,
    %c8_146 = arith.constant 8 : index
    %c0_147 = arith.constant 0 : index
    %219 = vector.load %arg10[%c8_146, %c0_147] : memref<48x128xf32, #tpu.memory_space<vmem>>, vector<32x128xf32>
    tpu.vector_store %arg10[%c8_146, %c0_147], %216 {strides = array<i32>} : memref<48x128xf32, #tpu.memory_space<vmem>>, vector<32x128xf32>,
    %cst_148 = arith.constant 0.000000e+00 : f32
    %220 = vector.broadcast %cst_148 : f32 to vector<2x128xf32>
    %c40_149 = arith.constant 40 : index
    %c0_150 = arith.constant 0 : index
    %221 = vector.load %arg10[%c40_149, %c0_150] : memref<48x128xf32, #tpu.memory_space<vmem>>, vector<2x128xf32>
    tpu.vector_store %arg10[%c40_149, %c0_150], %220 {strides = array<i32>} : memref<48x128xf32, #tpu.memory_space<vmem>>, vector<2x128xf32>,
    %c14_151 = arith.constant 14 : index
    %c0_152 = arith.constant 0 : index
    %222 = vector.load %arg10[%c14_151, %c0_152] : memref<48x128xf32, #tpu.memory_space<vmem>>, vector<16x128xf32>
    %c15_153 = arith.constant 15 : index
    %c0_154 = arith.constant 0 : index
    %223 = vector.load %arg10[%c15_153, %c0_154] : memref<48x128xf32, #tpu.memory_space<vmem>>, vector<16x128xf32>
    %224 = arith.maximumf %222, %223 : vector<16x128xf32>
    %c16_155 = arith.constant 16 : index
    %c0_156 = arith.constant 0 : index
    %225 = vector.load %arg10[%c16_155, %c0_156] : memref<48x128xf32, #tpu.memory_space<vmem>>, vector<16x128xf32>
    %226 = arith.maximumf %224, %225 : vector<16x128xf32>
    %c17_157 = arith.constant 17 : index
    %c0_158 = arith.constant 0 : index
    %227 = vector.load %arg10[%c17_157, %c0_158] : memref<48x128xf32, #tpu.memory_space<vmem>>, vector<16x128xf32>
    %228 = arith.maximumf %226, %227 : vector<16x128xf32>
    %c18_159 = arith.constant 18 : index
    %c0_160 = arith.constant 0 : index
    %229 = vector.load %arg10[%c18_159, %c0_160] : memref<48x128xf32, #tpu.memory_space<vmem>>, vector<16x128xf32>
    %230 = arith.maximumf %228, %229 : vector<16x128xf32>
    %c1_i32_161 = arith.constant 1 : i32
    %231 = tpu.dynamic_rotate %154 by %c1_i32_161 dim 1 : vector<32x128xf32>, i32 -> vector<32x128xf32>
    %c127_i32_162 = arith.constant 127 : i32
    %232 = tpu.dynamic_rotate %154 by %c127_i32_162 dim 1 : vector<32x128xf32>, i32 -> vector<32x128xf32>
    %c1_i32_163 = arith.constant 1 : i32
    %233 = vector.broadcast %c1_i32_163 : i32 to vector<32x128xi32>
    %234 = arith.cmpi sge, %22, %233 : vector<32x128xi32>
    %cst_164 = arith.constant 0.000000e+00 : f32
    %235 = vector.broadcast %cst_164 : f32 to vector<32x128xf32>
    %236 = arith.select %234, %231, %235 : vector<32x128xi1>, vector<32x128xf32>
    %237 = arith.maximumf %154, %236 : vector<32x128xf32>
    %c127_i32_165 = arith.constant 127 : i32
    %238 = vector.broadcast %c127_i32_165 : i32 to vector<32x128xi32>
    %239 = arith.cmpi slt, %22, %238 : vector<32x128xi32>
    %cst_166 = arith.constant 0.000000e+00 : f32
    %240 = vector.broadcast %cst_166 : f32 to vector<32x128xf32>
    %241 = arith.select %239, %232, %240 : vector<32x128xi1>, vector<32x128xf32>
    %242 = arith.maximumf %237, %241 : vector<32x128xf32>
    %c2_i32_167 = arith.constant 2 : i32
    %243 = tpu.dynamic_rotate %154 by %c2_i32_167 dim 1 : vector<32x128xf32>, i32 -> vector<32x128xf32>
    %c126_i32_168 = arith.constant 126 : i32
    %244 = tpu.dynamic_rotate %154 by %c126_i32_168 dim 1 : vector<32x128xf32>, i32 -> vector<32x128xf32>
    %c2_i32_169 = arith.constant 2 : i32
    %245 = vector.broadcast %c2_i32_169 : i32 to vector<32x128xi32>
    %246 = arith.cmpi sge, %22, %245 : vector<32x128xi32>
    %cst_170 = arith.constant 0.000000e+00 : f32
    %247 = vector.broadcast %cst_170 : f32 to vector<32x128xf32>
    %248 = arith.select %246, %243, %247 : vector<32x128xi1>, vector<32x128xf32>
    %249 = arith.maximumf %242, %248 : vector<32x128xf32>
    %c126_i32_171 = arith.constant 126 : i32
    %250 = vector.broadcast %c126_i32_171 : i32 to vector<32x128xi32>
    %251 = arith.cmpi slt, %22, %250 : vector<32x128xi32>
    %cst_172 = arith.constant 0.000000e+00 : f32
    %252 = vector.broadcast %cst_172 : f32 to vector<32x128xf32>
    %253 = arith.select %251, %244, %252 : vector<32x128xi1>, vector<32x128xf32>
    %254 = arith.maximumf %249, %253 : vector<32x128xf32>
    %cst_173 = arith.constant 0.000000e+00 : f32
    %255 = vector.broadcast %cst_173 : f32 to vector<2x128xf32>
    %c6_174 = arith.constant 6 : index
    %c0_175 = arith.constant 0 : index
    %256 = vector.load %arg10[%c6_174, %c0_175] : memref<48x128xf32, #tpu.memory_space<vmem>>, vector<2x128xf32>
    tpu.vector_store %arg10[%c6_174, %c0_175], %255 {strides = array<i32>} : memref<48x128xf32, #tpu.memory_space<vmem>>, vector<2x128xf32>,
    %c8_176 = arith.constant 8 : index
    %c0_177 = arith.constant 0 : index
    %257 = vector.load %arg10[%c8_176, %c0_177] : memref<48x128xf32, #tpu.memory_space<vmem>>, vector<32x128xf32>
    tpu.vector_store %arg10[%c8_176, %c0_177], %254 {strides = array<i32>} : memref<48x128xf32, #tpu.memory_space<vmem>>, vector<32x128xf32>,
    %cst_178 = arith.constant 0.000000e+00 : f32
    %258 = vector.broadcast %cst_178 : f32 to vector<2x128xf32>
    %c40_179 = arith.constant 40 : index
    %c0_180 = arith.constant 0 : index
    %259 = vector.load %arg10[%c40_179, %c0_180] : memref<48x128xf32, #tpu.memory_space<vmem>>, vector<2x128xf32>
    tpu.vector_store %arg10[%c40_179, %c0_180], %258 {strides = array<i32>} : memref<48x128xf32, #tpu.memory_space<vmem>>, vector<2x128xf32>,
    %c14_181 = arith.constant 14 : index
    %c0_182 = arith.constant 0 : index
    %260 = vector.load %arg10[%c14_181, %c0_182] : memref<48x128xf32, #tpu.memory_space<vmem>>, vector<16x128xf32>
    %c15_183 = arith.constant 15 : index
    %c0_184 = arith.constant 0 : index
    %261 = vector.load %arg10[%c15_183, %c0_184] : memref<48x128xf32, #tpu.memory_space<vmem>>, vector<16x128xf32>
    %262 = arith.maximumf %260, %261 : vector<16x128xf32>
    %c16_185 = arith.constant 16 : index
    %c0_186 = arith.constant 0 : index
    %263 = vector.load %arg10[%c16_185, %c0_186] : memref<48x128xf32, #tpu.memory_space<vmem>>, vector<16x128xf32>
    %264 = arith.maximumf %262, %263 : vector<16x128xf32>
    %c17_187 = arith.constant 17 : index
    %c0_188 = arith.constant 0 : index
    %265 = vector.load %arg10[%c17_187, %c0_188] : memref<48x128xf32, #tpu.memory_space<vmem>>, vector<16x128xf32>
    %266 = arith.maximumf %264, %265 : vector<16x128xf32>
    %c18_189 = arith.constant 18 : index
    %c0_190 = arith.constant 0 : index
    %267 = vector.load %arg10[%c18_189, %c0_190] : memref<48x128xf32, #tpu.memory_space<vmem>>, vector<16x128xf32>
    %268 = arith.maximumf %266, %267 : vector<16x128xf32>
    %c1_i32_191 = arith.constant 1 : i32
    %269 = tpu.dynamic_rotate %151 by %c1_i32_191 dim 1 : vector<32x128xf32>, i32 -> vector<32x128xf32>
    %c127_i32_192 = arith.constant 127 : i32
    %270 = tpu.dynamic_rotate %151 by %c127_i32_192 dim 1 : vector<32x128xf32>, i32 -> vector<32x128xf32>
    %c1_i32_193 = arith.constant 1 : i32
    %271 = vector.broadcast %c1_i32_193 : i32 to vector<32x128xi32>
    %272 = arith.cmpi sge, %22, %271 : vector<32x128xi32>
    %cst_194 = arith.constant 0.000000e+00 : f32
    %273 = vector.broadcast %cst_194 : f32 to vector<32x128xf32>
    %274 = arith.select %272, %269, %273 : vector<32x128xi1>, vector<32x128xf32>
    %275 = arith.maximumf %151, %274 : vector<32x128xf32>
    %c127_i32_195 = arith.constant 127 : i32
    %276 = vector.broadcast %c127_i32_195 : i32 to vector<32x128xi32>
    %277 = arith.cmpi slt, %22, %276 : vector<32x128xi32>
    %cst_196 = arith.constant 0.000000e+00 : f32
    %278 = vector.broadcast %cst_196 : f32 to vector<32x128xf32>
    %279 = arith.select %277, %270, %278 : vector<32x128xi1>, vector<32x128xf32>
    %280 = arith.maximumf %275, %279 : vector<32x128xf32>
    %c2_i32_197 = arith.constant 2 : i32
    %281 = tpu.dynamic_rotate %151 by %c2_i32_197 dim 1 : vector<32x128xf32>, i32 -> vector<32x128xf32>
    %c126_i32_198 = arith.constant 126 : i32
    %282 = tpu.dynamic_rotate %151 by %c126_i32_198 dim 1 : vector<32x128xf32>, i32 -> vector<32x128xf32>
    %c2_i32_199 = arith.constant 2 : i32
    %283 = vector.broadcast %c2_i32_199 : i32 to vector<32x128xi32>
    %284 = arith.cmpi sge, %22, %283 : vector<32x128xi32>
    %cst_200 = arith.constant 0.000000e+00 : f32
    %285 = vector.broadcast %cst_200 : f32 to vector<32x128xf32>
    %286 = arith.select %284, %281, %285 : vector<32x128xi1>, vector<32x128xf32>
    %287 = arith.maximumf %280, %286 : vector<32x128xf32>
    %c126_i32_201 = arith.constant 126 : i32
    %288 = vector.broadcast %c126_i32_201 : i32 to vector<32x128xi32>
    %289 = arith.cmpi slt, %22, %288 : vector<32x128xi32>
    %cst_202 = arith.constant 0.000000e+00 : f32
    %290 = vector.broadcast %cst_202 : f32 to vector<32x128xf32>
    %291 = arith.select %289, %282, %290 : vector<32x128xi1>, vector<32x128xf32>
    %292 = arith.maximumf %287, %291 : vector<32x128xf32>
    %cst_203 = arith.constant 0.000000e+00 : f32
    %293 = vector.broadcast %cst_203 : f32 to vector<2x128xf32>
    %c6_204 = arith.constant 6 : index
    %c0_205 = arith.constant 0 : index
    %294 = vector.load %arg10[%c6_204, %c0_205] : memref<48x128xf32, #tpu.memory_space<vmem>>, vector<2x128xf32>
    tpu.vector_store %arg10[%c6_204, %c0_205], %293 {strides = array<i32>} : memref<48x128xf32, #tpu.memory_space<vmem>>, vector<2x128xf32>,
    %c8_206 = arith.constant 8 : index
    %c0_207 = arith.constant 0 : index
    %295 = vector.load %arg10[%c8_206, %c0_207] : memref<48x128xf32, #tpu.memory_space<vmem>>, vector<32x128xf32>
    tpu.vector_store %arg10[%c8_206, %c0_207], %292 {strides = array<i32>} : memref<48x128xf32, #tpu.memory_space<vmem>>, vector<32x128xf32>,
    %cst_208 = arith.constant 0.000000e+00 : f32
    %296 = vector.broadcast %cst_208 : f32 to vector<2x128xf32>
    %c40_209 = arith.constant 40 : index
    %c0_210 = arith.constant 0 : index
    %297 = vector.load %arg10[%c40_209, %c0_210] : memref<48x128xf32, #tpu.memory_space<vmem>>, vector<2x128xf32>
    tpu.vector_store %arg10[%c40_209, %c0_210], %296 {strides = array<i32>} : memref<48x128xf32, #tpu.memory_space<vmem>>, vector<2x128xf32>,
    %c14_211 = arith.constant 14 : index
    %c0_212 = arith.constant 0 : index
    %298 = vector.load %arg10[%c14_211, %c0_212] : memref<48x128xf32, #tpu.memory_space<vmem>>, vector<16x128xf32>
    %c15_213 = arith.constant 15 : index
    %c0_214 = arith.constant 0 : index
    %299 = vector.load %arg10[%c15_213, %c0_214] : memref<48x128xf32, #tpu.memory_space<vmem>>, vector<16x128xf32>
    %300 = arith.maximumf %298, %299 : vector<16x128xf32>
    %c16_215 = arith.constant 16 : index
    %c0_216 = arith.constant 0 : index
    %301 = vector.load %arg10[%c16_215, %c0_216] : memref<48x128xf32, #tpu.memory_space<vmem>>, vector<16x128xf32>
    %302 = arith.maximumf %300, %301 : vector<16x128xf32>
    %c17_217 = arith.constant 17 : index
    %c0_218 = arith.constant 0 : index
    %303 = vector.load %arg10[%c17_217, %c0_218] : memref<48x128xf32, #tpu.memory_space<vmem>>, vector<16x128xf32>
    %304 = arith.maximumf %302, %303 : vector<16x128xf32>
    %c18_219 = arith.constant 18 : index
    %c0_220 = arith.constant 0 : index
    %305 = vector.load %arg10[%c18_219, %c0_220] : memref<48x128xf32, #tpu.memory_space<vmem>>, vector<16x128xf32>
    %306 = arith.maximumf %304, %305 : vector<16x128xf32>
    %307 = vector.extract_strided_slice %145 {offsets = [8, 0], sizes = [16, 128], strides = [1, 1]} : vector<32x128xf32> to vector<16x128xf32>
    %308 = vector.extract_strided_slice %148 {offsets = [8, 0], sizes = [16, 128], strides = [1, 1]} : vector<32x128xf32> to vector<16x128xf32>
    %309 = vector.extract_strided_slice %151 {offsets = [8, 0], sizes = [16, 128], strides = [1, 1]} : vector<32x128xf32> to vector<16x128xf32>
    %310 = vector.extract_strided_slice %154 {offsets = [8, 0], sizes = [16, 128], strides = [1, 1]} : vector<32x128xf32> to vector<16x128xf32>
    %cst_221 = arith.constant 1.000000e+00 : f32
    %311 = vector.broadcast %cst_221 : f32 to vector<8x16xf32>
    %cst_222 = arith.constant dense<0.000000e+00> : vector<8x128xf32>
    %312 = tpu.matmul %311, %307, %cst_222 {dimension_numbers = #tpu.dot_dimension_numbers<[1], [0], [0], [1], [0, 0, 1, 1], [], []>, precision = #tpu.contract_precision<fp32>} : vector<8x16xf32>, vector<16x128xf32>, vector<8x128xf32> -> vector<8x128xf32>
    %cst_223 = arith.constant dense<0.000000e+00> : vector<8xf32>
    %313 = vector.multi_reduction <add>, %312, %cst_223 [1] : vector<8x128xf32> to vector<8xf32>
    %314 = vector.shape_cast %313 : vector<8xf32> to vector<8x1xf32>
    %cst_224 = arith.constant dense<0.000000e+00> : vector<1xf32>
    %315 = vector.multi_reduction <add>, %314, %cst_224 [0] : vector<8x1xf32> to vector<1xf32>
    %316 = vector.shape_cast %315 : vector<1xf32> to vector<1x1xf32>
    %cst_225 = arith.constant 1.250000e-01 : f32
    %317 = vector.broadcast %cst_225 : f32 to vector<1x1xf32>
    %318 = arith.mulf %316, %317 : vector<1x1xf32>
    %cst_226 = arith.constant dense<0.000000e+00> : vector<8x128xf32>
    %319 = tpu.matmul %311, %308, %cst_226 {dimension_numbers = #tpu.dot_dimension_numbers<[1], [0], [0], [1], [0, 0, 1, 1], [], []>, precision = #tpu.contract_precision<fp32>} : vector<8x16xf32>, vector<16x128xf32>, vector<8x128xf32> -> vector<8x128xf32>
    %cst_227 = arith.constant dense<0.000000e+00> : vector<8xf32>
    %320 = vector.multi_reduction <add>, %319, %cst_227 [1] : vector<8x128xf32> to vector<8xf32>
    %321 = vector.shape_cast %320 : vector<8xf32> to vector<8x1xf32>
    %cst_228 = arith.constant dense<0.000000e+00> : vector<1xf32>
    %322 = vector.multi_reduction <add>, %321, %cst_228 [0] : vector<8x1xf32> to vector<1xf32>
    %323 = vector.shape_cast %322 : vector<1xf32> to vector<1x1xf32>
    %cst_229 = arith.constant 1.250000e-01 : f32
    %324 = vector.broadcast %cst_229 : f32 to vector<1x1xf32>
    %325 = arith.mulf %323, %324 : vector<1x1xf32>
    %326 = arith.mulf %307, %192 : vector<16x128xf32>
    %cst_230 = arith.constant dense<0.000000e+00> : vector<8x128xf32>
    %327 = tpu.matmul %311, %326, %cst_230 {dimension_numbers = #tpu.dot_dimension_numbers<[1], [0], [0], [1], [0, 0, 1, 1], [], []>, precision = #tpu.contract_precision<fp32>} : vector<8x16xf32>, vector<16x128xf32>, vector<8x128xf32> -> vector<8x128xf32>
    %cst_231 = arith.constant dense<0.000000e+00> : vector<8xf32>
    %328 = vector.multi_reduction <add>, %327, %cst_231 [1] : vector<8x128xf32> to vector<8xf32>
    %329 = vector.shape_cast %328 : vector<8xf32> to vector<8x1xf32>
    %cst_232 = arith.constant dense<0.000000e+00> : vector<1xf32>
    %330 = vector.multi_reduction <add>, %329, %cst_232 [0] : vector<8x1xf32> to vector<1xf32>
    %331 = vector.shape_cast %330 : vector<1xf32> to vector<1x1xf32>
    %cst_233 = arith.constant 1.250000e-01 : f32
    %332 = vector.broadcast %cst_233 : f32 to vector<1x1xf32>
    %333 = arith.mulf %331, %332 : vector<1x1xf32>
    %334 = arith.mulf %230, %308 : vector<16x128xf32>
    %cst_234 = arith.constant dense<0.000000e+00> : vector<8x128xf32>
    %335 = tpu.matmul %311, %334, %cst_234 {dimension_numbers = #tpu.dot_dimension_numbers<[1], [0], [0], [1], [0, 0, 1, 1], [], []>, precision = #tpu.contract_precision<fp32>} : vector<8x16xf32>, vector<16x128xf32>, vector<8x128xf32> -> vector<8x128xf32>
    %cst_235 = arith.constant dense<0.000000e+00> : vector<8xf32>
    %336 = vector.multi_reduction <add>, %335, %cst_235 [1] : vector<8x128xf32> to vector<8xf32>
    %337 = vector.shape_cast %336 : vector<8xf32> to vector<8x1xf32>
    %cst_236 = arith.constant dense<0.000000e+00> : vector<1xf32>
    %338 = vector.multi_reduction <add>, %337, %cst_236 [0] : vector<8x1xf32> to vector<1xf32>
    %339 = vector.shape_cast %338 : vector<1xf32> to vector<1x1xf32>
    %cst_237 = arith.constant 1.250000e-01 : f32
    %340 = vector.broadcast %cst_237 : f32 to vector<1x1xf32>
    %341 = arith.mulf %339, %340 : vector<1x1xf32>
    %cst_238 = arith.constant dense<0.000000e+00> : vector<8x128xf32>
    %342 = tpu.matmul %311, %309, %cst_238 {dimension_numbers = #tpu.dot_dimension_numbers<[1], [0], [0], [1], [0, 0, 1, 1], [], []>, precision = #tpu.contract_precision<fp32>} : vector<8x16xf32>, vector<16x128xf32>, vector<8x128xf32> -> vector<8x128xf32>
    %cst_239 = arith.constant dense<0.000000e+00> : vector<8xf32>
    %343 = vector.multi_reduction <add>, %342, %cst_239 [1] : vector<8x128xf32> to vector<8xf32>
    %344 = vector.shape_cast %343 : vector<8xf32> to vector<8x1xf32>
    %cst_240 = arith.constant dense<0.000000e+00> : vector<1xf32>
    %345 = vector.multi_reduction <add>, %344, %cst_240 [0] : vector<8x1xf32> to vector<1xf32>
    %346 = vector.shape_cast %345 : vector<1xf32> to vector<1x1xf32>
    %cst_241 = arith.constant 1.250000e-01 : f32
    %347 = vector.broadcast %cst_241 : f32 to vector<1x1xf32>
    %348 = arith.mulf %346, %347 : vector<1x1xf32>
    %cst_242 = arith.constant dense<0.000000e+00> : vector<8x128xf32>
    %349 = tpu.matmul %311, %310, %cst_242 {dimension_numbers = #tpu.dot_dimension_numbers<[1], [0], [0], [1], [0, 0, 1, 1], [], []>, precision = #tpu.contract_precision<fp32>} : vector<8x16xf32>, vector<16x128xf32>, vector<8x128xf32> -> vector<8x128xf32>
    %cst_243 = arith.constant dense<0.000000e+00> : vector<8xf32>
    %350 = vector.multi_reduction <add>, %349, %cst_243 [1] : vector<8x128xf32> to vector<8xf32>
    %351 = vector.shape_cast %350 : vector<8xf32> to vector<8x1xf32>
    %cst_244 = arith.constant dense<0.000000e+00> : vector<1xf32>
    %352 = vector.multi_reduction <add>, %351, %cst_244 [0] : vector<8x1xf32> to vector<1xf32>
    %353 = vector.shape_cast %352 : vector<1xf32> to vector<1x1xf32>
    %cst_245 = arith.constant 1.250000e-01 : f32
    %354 = vector.broadcast %cst_245 : f32 to vector<1x1xf32>
    %355 = arith.mulf %353, %354 : vector<1x1xf32>
    %356 = arith.mulf %309, %268 : vector<16x128xf32>
    %cst_246 = arith.constant dense<0.000000e+00> : vector<8x128xf32>
    %357 = tpu.matmul %311, %356, %cst_246 {dimension_numbers = #tpu.dot_dimension_numbers<[1], [0], [0], [1], [0, 0, 1, 1], [], []>, precision = #tpu.contract_precision<fp32>} : vector<8x16xf32>, vector<16x128xf32>, vector<8x128xf32> -> vector<8x128xf32>
    %cst_247 = arith.constant dense<0.000000e+00> : vector<8xf32>
    %358 = vector.multi_reduction <add>, %357, %cst_247 [1] : vector<8x128xf32> to vector<8xf32>
    %359 = vector.shape_cast %358 : vector<8xf32> to vector<8x1xf32>
    %cst_248 = arith.constant dense<0.000000e+00> : vector<1xf32>
    %360 = vector.multi_reduction <add>, %359, %cst_248 [0] : vector<8x1xf32> to vector<1xf32>
    %361 = vector.shape_cast %360 : vector<1xf32> to vector<1x1xf32>
    %cst_249 = arith.constant 1.250000e-01 : f32
    %362 = vector.broadcast %cst_249 : f32 to vector<1x1xf32>
    %363 = arith.mulf %361, %362 : vector<1x1xf32>
    %364 = arith.mulf %306, %310 : vector<16x128xf32>
    %cst_250 = arith.constant dense<0.000000e+00> : vector<8x128xf32>
    %365 = tpu.matmul %311, %364, %cst_250 {dimension_numbers = #tpu.dot_dimension_numbers<[1], [0], [0], [1], [0, 0, 1, 1], [], []>, precision = #tpu.contract_precision<fp32>} : vector<8x16xf32>, vector<16x128xf32>, vector<8x128xf32> -> vector<8x128xf32>
    %cst_251 = arith.constant dense<0.000000e+00> : vector<8xf32>
    %366 = vector.multi_reduction <add>, %365, %cst_251 [1] : vector<8x128xf32> to vector<8xf32>
    %367 = vector.shape_cast %366 : vector<8xf32> to vector<8x1xf32>
    %cst_252 = arith.constant dense<0.000000e+00> : vector<1xf32>
    %368 = vector.multi_reduction <add>, %367, %cst_252 [0] : vector<8x1xf32> to vector<1xf32>
    %369 = vector.shape_cast %368 : vector<1xf32> to vector<1x1xf32>
    %cst_253 = arith.constant 1.250000e-01 : f32
    %370 = vector.broadcast %cst_253 : f32 to vector<1x1xf32>
    %371 = arith.mulf %369, %370 : vector<1x1xf32>
    %372 = tpu.iota {dimensions = array<i32: 1>} : vector<1x8xi32>
    %cst_254 = arith.constant 0.000000e+00 : f32
    %373 = vector.broadcast %cst_254 : f32 to vector<1x8xf32>
    %c0_i32_255 = arith.constant 0 : i32
    %374 = vector.broadcast %c0_i32_255 : i32 to vector<1x8xi32>
    %375 = arith.cmpi eq, %372, %374 : vector<1x8xi32>
    %cst_256 = arith.constant 0.000000e+00 : f32
    %376 = vector.shape_cast %318 : vector<1x1xf32> to vector<1x1xf32>
    %377 = vector.broadcast %376 : vector<1x1xf32> to vector<1x8xf32>
    %378 = vector.broadcast %cst_256 : f32 to vector<1x8xf32>
    %379 = arith.select %375, %377, %378 : vector<1x8xi1>, vector<1x8xf32>
    %380 = arith.addf %373, %379 : vector<1x8xf32>
    %c1_i32_257 = arith.constant 1 : i32
    %381 = vector.broadcast %c1_i32_257 : i32 to vector<1x8xi32>
    %382 = arith.cmpi eq, %372, %381 : vector<1x8xi32>
    %cst_258 = arith.constant 0.000000e+00 : f32
    %383 = vector.shape_cast %325 : vector<1x1xf32> to vector<1x1xf32>
    %384 = vector.broadcast %383 : vector<1x1xf32> to vector<1x8xf32>
    %385 = vector.broadcast %cst_258 : f32 to vector<1x8xf32>
    %386 = arith.select %382, %384, %385 : vector<1x8xi1>, vector<1x8xf32>
    %387 = arith.addf %380, %386 : vector<1x8xf32>
    %c2_i32_259 = arith.constant 2 : i32
    %388 = vector.broadcast %c2_i32_259 : i32 to vector<1x8xi32>
    %389 = arith.cmpi eq, %372, %388 : vector<1x8xi32>
    %cst_260 = arith.constant 0.000000e+00 : f32
    %390 = vector.shape_cast %333 : vector<1x1xf32> to vector<1x1xf32>
    %391 = vector.broadcast %390 : vector<1x1xf32> to vector<1x8xf32>
    %392 = vector.broadcast %cst_260 : f32 to vector<1x8xf32>
    %393 = arith.select %389, %391, %392 : vector<1x8xi1>, vector<1x8xf32>
    %394 = arith.addf %387, %393 : vector<1x8xf32>
    %c3_i32 = arith.constant 3 : i32
    %395 = vector.broadcast %c3_i32 : i32 to vector<1x8xi32>
    %396 = arith.cmpi eq, %372, %395 : vector<1x8xi32>
    %cst_261 = arith.constant 0.000000e+00 : f32
    %397 = vector.shape_cast %341 : vector<1x1xf32> to vector<1x1xf32>
    %398 = vector.broadcast %397 : vector<1x1xf32> to vector<1x8xf32>
    %399 = vector.broadcast %cst_261 : f32 to vector<1x8xf32>
    %400 = arith.select %396, %398, %399 : vector<1x8xi1>, vector<1x8xf32>
    %401 = arith.addf %394, %400 : vector<1x8xf32>
    %c4_i32 = arith.constant 4 : i32
    %402 = vector.broadcast %c4_i32 : i32 to vector<1x8xi32>
    %403 = arith.cmpi eq, %372, %402 : vector<1x8xi32>
    %cst_262 = arith.constant 0.000000e+00 : f32
    %404 = vector.shape_cast %348 : vector<1x1xf32> to vector<1x1xf32>
    %405 = vector.broadcast %404 : vector<1x1xf32> to vector<1x8xf32>
    %406 = vector.broadcast %cst_262 : f32 to vector<1x8xf32>
    %407 = arith.select %403, %405, %406 : vector<1x8xi1>, vector<1x8xf32>
    %408 = arith.addf %401, %407 : vector<1x8xf32>
    %c5_i32 = arith.constant 5 : i32
    %409 = vector.broadcast %c5_i32 : i32 to vector<1x8xi32>
    %410 = arith.cmpi eq, %372, %409 : vector<1x8xi32>
    %cst_263 = arith.constant 0.000000e+00 : f32
    %411 = vector.shape_cast %355 : vector<1x1xf32> to vector<1x1xf32>
    %412 = vector.broadcast %411 : vector<1x1xf32> to vector<1x8xf32>
    %413 = vector.broadcast %cst_263 : f32 to vector<1x8xf32>
    %414 = arith.select %410, %412, %413 : vector<1x8xi1>, vector<1x8xf32>
    %415 = arith.addf %408, %414 : vector<1x8xf32>
    %c6_i32 = arith.constant 6 : i32
    %416 = vector.broadcast %c6_i32 : i32 to vector<1x8xi32>
    %417 = arith.cmpi eq, %372, %416 : vector<1x8xi32>
    %cst_264 = arith.constant 0.000000e+00 : f32
    %418 = vector.shape_cast %363 : vector<1x1xf32> to vector<1x1xf32>
    %419 = vector.broadcast %418 : vector<1x1xf32> to vector<1x8xf32>
    %420 = vector.broadcast %cst_264 : f32 to vector<1x8xf32>
    %421 = arith.select %417, %419, %420 : vector<1x8xi1>, vector<1x8xf32>
    %422 = arith.addf %415, %421 : vector<1x8xf32>
    %c7_i32 = arith.constant 7 : i32
    %423 = vector.broadcast %c7_i32 : i32 to vector<1x8xi32>
    %424 = arith.cmpi eq, %372, %423 : vector<1x8xi32>
    %cst_265 = arith.constant 0.000000e+00 : f32
    %425 = vector.shape_cast %371 : vector<1x1xf32> to vector<1x1xf32>
    %426 = vector.broadcast %425 : vector<1x1xf32> to vector<1x8xf32>
    %427 = vector.broadcast %cst_265 : f32 to vector<1x8xf32>
    %428 = arith.select %424, %426, %427 : vector<1x8xi1>, vector<1x8xf32>
    %429 = arith.addf %422, %428 : vector<1x8xf32>
    %430 = vector.shape_cast %429 : vector<1x8xf32> to vector<1x1x8xf32>
    %c0_266 = arith.constant 0 : index
    %c0_267 = arith.constant 0 : index
    %c0_268 = arith.constant 0 : index
    %431 = vector.load %arg7[%c0_266, %c0_267, %c0_268] : memref<1x1x8xf32, #tpu.memory_space<vmem>>, vector<1x1x8xf32>
    tpu.vector_store %arg7[%c0_266, %c0_267, %c0_268], %430 {strides = array<i32>} : memref<1x1x8xf32, #tpu.memory_space<vmem>>, vector<1x1x8xf32>,
    return
  }
  func.func @transform_0(%arg0: i32) -> (i32, i32) {
    %c2_i32 = arith.constant 2 : i32
    %0 = arith.muli %arg0, %c2_i32 : i32
    %c1_i32 = arith.constant 1 : i32
    %1 = arith.subi %0, %c1_i32 : i32
    %c0_i32 = arith.constant 0 : i32
    %2 = arith.maxsi %1, %c0_i32 : i32
    %c0_i32_0 = arith.constant 0 : i32
    %c0_i32_1 = arith.constant 0 : i32
    return %2, %c0_i32_0 : i32, i32
  }
  func.func @transform_1(%arg0: i32) -> (i32, i32) {
    %c0_i32 = arith.constant 0 : i32
    %c0_i32_0 = arith.constant 0 : i32
    return %arg0, %c0_i32 : i32, i32
  }
  func.func @transform_2(%arg0: i32) -> (i32, i32) {
    %c1_i32 = arith.constant 1 : i32
    %0 = arith.addi %arg0, %c1_i32 : i32
    %c2_i32 = arith.constant 2 : i32
    %1 = arith.muli %0, %c2_i32 : i32
    %c1_i32_0 = arith.constant 1 : i32
    %2 = arith.minsi %1, %c1_i32_0 : i32
    %c0_i32 = arith.constant 0 : i32
    %c0_i32_1 = arith.constant 0 : i32
    return %2, %c0_i32 : i32, i32
  }
  func.func @transform_3(%arg0: i32) -> (i32, i32) {
    %c2_i32 = arith.constant 2 : i32
    %0 = arith.muli %arg0, %c2_i32 : i32
    %c1_i32 = arith.constant 1 : i32
    %1 = arith.subi %0, %c1_i32 : i32
    %c0_i32 = arith.constant 0 : i32
    %2 = arith.maxsi %1, %c0_i32 : i32
    %c0_i32_0 = arith.constant 0 : i32
    %c0_i32_1 = arith.constant 0 : i32
    return %2, %c0_i32_0 : i32, i32
  }
  func.func @transform_4(%arg0: i32) -> (i32, i32) {
    %c0_i32 = arith.constant 0 : i32
    %c0_i32_0 = arith.constant 0 : i32
    return %arg0, %c0_i32 : i32, i32
  }
  func.func @transform_5(%arg0: i32) -> (i32, i32) {
    %c1_i32 = arith.constant 1 : i32
    %0 = arith.addi %arg0, %c1_i32 : i32
    %c2_i32 = arith.constant 2 : i32
    %1 = arith.muli %0, %c2_i32 : i32
    %c1_i32_0 = arith.constant 1 : i32
    %2 = arith.minsi %1, %c1_i32_0 : i32
    %c0_i32 = arith.constant 0 : i32
    %c0_i32_1 = arith.constant 0 : i32
    return %2, %c0_i32 : i32, i32
  }
  func.func @transform_6(%arg0: i32) -> (i32, i32, i32) {
    %c0_i32 = arith.constant 0 : i32
    %c0_i32_0 = arith.constant 0 : i32
    %c0_i32_1 = arith.constant 0 : i32
    return %arg0, %c0_i32, %c0_i32_0 : i32, i32, i32
  }
}

</mosaic_0001>

<llo_original>
// kernel: tpu_custom_call.1
$region0: #{tpu_custom_call.1}
  #allocation0 [shape = 'u32[]', space=smem, size = 0x4, offset = 0x4, fixed_abs, tag = 'smem constant byte address 0x4 - core index']
  #allocation1 [shape = 'u32[144,128]{1,0:T(1,128)}', space=vmem, size = 0x12000, scoped, tag = 'internal scratch']
  #allocation2 [shape = 'f32[32,128]{1,0:T(8,128)}', space=vmem, size = 0x4000, scoped, tag = 'scratch operand']
  #allocation3 [shape = 'f32[32,128]{1,0:T(8,128)}', space=vmem, size = 0x4000, scoped, tag = 'scratch operand']
  #allocation4 [shape = 'f32[48,128]{1,0:T(8,128)}', space=vmem, size = 0x6000, scoped, tag = 'scratch operand']
  %s0 = inlined_call_operand.hbm [shape: f32[16,128], index: 0, kind: input, shape index: {}]
  %s1 = inlined_call_operand.hbm [shape: f32[16,128], index: 1, kind: input, shape index: {}]
  %s2 = inlined_call_operand.hbm [shape: f32[16,128], index: 2, kind: input, shape index: {}]
  %s3 = inlined_call_operand.hbm [shape: s32[16,128], index: 3, kind: input, shape index: {}]
  %s4 = inlined_call_operand.hbm [shape: s32[16,128], index: 4, kind: input, shape index: {}]
  %s5 = inlined_call_operand.vmem [shape: s32[16,128], index: 5, kind: input, shape index: {}]
  %s6 = inlined_call_operand.hbm [shape: f32[1,1,8], index: 6, kind: output, shape index: {}]
  %s7 = sld [smem:[#allocation0]]
  $region54: #{tpu_custom_call.1} parent=0
    _
  %s9 = ssub.s32 1, %s7
  %s10 = scalar_select 0, %s9, %s7
  $region1: #{tpu_custom_call.1} parent=0
    #allocation5 [shape = 'u8[4096]{0}', space=vmem, size = 0x1000, scoped, tag = 'input window, operand 0, single buffered']
    #allocation6 [shape = 's32[1]{0}', space=sflag, size = 0x4, scoped, tag = 'scoped memory for tpu_custom_call.1']
    #allocation7 [shape = 's32[1]{0}', space=sflag, size = 0x4, scoped, tag = 'scoped memory for tpu_custom_call.1']
    #allocation8 [shape = 'u8[8192]{0}', space=vmem, size = 0x2000, scoped, tag = 'input window, operand 1, single buffered']
    #allocation9 [shape = 's32[1]{0}', space=sflag, size = 0x4, scoped, tag = 'scoped memory for tpu_custom_call.1']
    #allocation10 [shape = 'u8[4096]{0}', space=vmem, size = 0x1000, scoped, tag = 'input window, operand 2, single buffered']
    #allocation11 [shape = 'u8[4096]{0}', space=vmem, size = 0x1000, scoped, tag = 'input window, operand 3, single buffered']
    #allocation12 [shape = 's32[1]{0}', space=sflag, size = 0x4, scoped, tag = 'scoped memory for tpu_custom_call.1']
    #allocation13 [shape = 'u8[8192]{0}', space=vmem, size = 0x2000, scoped, tag = 'input window, operand 4, single buffered']
    #allocation14 [shape = 'u8[512]{0}', space=vmem, size = 0x400, scoped, tag = 'output window, operand 0, single buffered']
    %11 = vsyncpa [#allocation6], 0
    %12 = vsyncpa [#allocation9], 0
    %13 = vsyncpa [#allocation12], 0
    %14 = vsyncpa [#allocation7], 0
    // Predicated region
    $region2: #{tpu_custom_call.1} parent=1 // pred_check
      _
    $region3: #{tpu_custom_call.1} parent=1 // pred_check_branch
      %16 = sbr.rel (0) target = $region5
    $region4: #{tpu_custom_call.1} parent=1 // pred_region
      %s17 = smul.u32 0, 2
      %s18 = ssub.s32 %s17, 1
      %p19 = scmp.gt.s32.totalorder %s18, 0
      %s20 = scalar_select %p19, %s18, 0
      %s22 = ssub.s32 128, 128
      %23 = vsyncadd [#allocation6], %s22
      %s24 = smul.addr %s20, 128
      %s25 = scalar_lea.hbm %s0, %s24
      %s27 = sshll.u32 [#allocation5], 4
      %s28 = int_to_ptr.vmem [resolvable:$true] %s27
      %30 = dma.hbm_to_vmem [thread:$0]  %s25, 128, %s28, [#allocation6]
    $region5: #{tpu_custom_call.1} parent=1 // pred_fallthru
      _
    // Predicated region
    $region6: #{tpu_custom_call.1} parent=1 // pred_check
      _
    $region7: #{tpu_custom_call.1} parent=1 // pred_check_branch
      %32 = sbr.rel (0) target = $region9
    $region8: #{tpu_custom_call.1} parent=1 // pred_region
      %s34 = ssub.s32 256, 256
      %35 = vsyncadd [#allocation9], %s34
      %s36 = sshll.u32 [#allocation8], 4
      %s37 = int_to_ptr.vmem [resolvable:$true] %s36
      %42 = dma.hbm_to_vmem [thread:$0]  %s1, 256, %s37, [#allocation9], 128, 128, 8
    $region9: #{tpu_custom_call.1} parent=1 // pred_fallthru
      _
    // Predicated region
    $region10: #{tpu_custom_call.1} parent=1 // pred_check
      _
    $region11: #{tpu_custom_call.1} parent=1 // pred_check_branch
      %44 = sbr.rel (0) target = $region13
    $region12: #{tpu_custom_call.1} parent=1 // pred_region
      %s45 = sadd.s32 0, 1
      %s46 = smul.u32 %s45, 2
      %p47 = scmp.lt.s32.totalorder %s46, 1
      %s48 = scalar_select %p47, %s46, 1
      %s50 = ssub.s32 128, 128
      %51 = vsyncadd [#allocation9], %s50
      %s52 = smul.addr %s48, 128
      %s53 = scalar_lea.hbm %s2, %s52
      %s55 = sshll.u32 [#allocation10], 4
      %s56 = int_to_ptr.vmem [resolvable:$true] %s55
      %58 = dma.hbm_to_vmem [thread:$0]  %s53, 128, %s56, [#allocation9]
    $region13: #{tpu_custom_call.1} parent=1 // pred_fallthru
      _
    // Predicated region
    $region14: #{tpu_custom_call.1} parent=1 // pred_check
      _
    $region15: #{tpu_custom_call.1} parent=1 // pred_check_branch
      %60 = sbr.rel (0) target = $region17
    $region16: #{tpu_custom_call.1} parent=1 // pred_region
      %s61 = smul.u32 0, 2
      %s62 = ssub.s32 %s61, 1
      %p63 = scmp.gt.s32.totalorder %s62, 0
      %s64 = scalar_select %p63, %s62, 0
      %s66 = ssub.s32 128, 128
      %67 = vsyncadd [#allocation12], %s66
      %s68 = smul.addr %s64, 128
      %s69 = scalar_lea.hbm %s3, %s68
      %s71 = sshll.u32 [#allocation11], 4
      %s72 = int_to_ptr.vmem [resolvable:$true] %s71
      %74 = dma.hbm_to_vmem [thread:$0]  %s69, 128, %s72, [#allocation12]
    $region17: #{tpu_custom_call.1} parent=1 // pred_fallthru
      _
    // Predicated region
    $region18: #{tpu_custom_call.1} parent=1 // pred_check
      _
    $region19: #{tpu_custom_call.1} parent=1 // pred_check_branch
      %76 = sbr.rel (0) target = $region21
    $region20: #{tpu_custom_call.1} parent=1 // pred_region
      %s78 = ssub.s32 256, 256
      %79 = vsyncadd [#allocation12], %s78
      %s80 = sshll.u32 [#allocation13], 4
      %s81 = int_to_ptr.vmem [resolvable:$true] %s80
      %86 = dma.hbm_to_vmem [thread:$0]  %s4, 256, %s81, [#allocation12], 128, 128, 8
    $region21: #{tpu_custom_call.1} parent=1 // pred_fallthru
      _
    // Predicated region
    $region22: #{tpu_custom_call.1} parent=1 // pred_check
      _
    $region23: #{tpu_custom_call.1} parent=1 // pred_check_branch
      %88 = sbr.rel (0) target = $region25
    $region24: #{tpu_custom_call.1} parent=1 // pred_region
      %s89 = sadd.s32 0, 1
      %s90 = smul.u32 %s89, 2
      %p91 = scmp.lt.s32.totalorder %s90, 1
      %s92 = scalar_select %p91, %s90, 1
      %p93 = scmp.lt.s32.totalorder %s92, 1
      %s94 = scalar_select %p93, %s92, 1
      %s95 = smul.addr %s94, 8
      %s96 = scalar_lea.vmem %s5, %s95
      %s97 = sadd.s32 0, 1
      %s98 = smul.u32 %s97, 2
      %p99 = scmp.lt.s32.totalorder %s98, 1
      %s100 = scalar_select %p99, %s98, 1
    $region25: #{tpu_custom_call.1} parent=1 // pred_fallthru
      _
    // Predicated region
    $region26: #{tpu_custom_call.1} parent=1 // pred_check
      _
    $region27: #{tpu_custom_call.1} parent=1 // pred_check_branch
      %102 = sbr.rel (0) target = $region29
    $region28: #{tpu_custom_call.1} parent=1 // pred_region
      %103 = dma.done [#allocation6], 128
    $region29: #{tpu_custom_call.1} parent=1 // pred_fallthru
      _
    // Predicated region
    $region30: #{tpu_custom_call.1} parent=1 // pred_check
      _
    $region31: #{tpu_custom_call.1} parent=1 // pred_check_branch
      %105 = sbr.rel (0) target = $region33
    $region32: #{tpu_custom_call.1} parent=1 // pred_region
      %106 = dma.done [#allocation9], 256
    $region33: #{tpu_custom_call.1} parent=1 // pred_fallthru
      _
    // Predicated region
    $region34: #{tpu_custom_call.1} parent=1 // pred_check
      _
    $region35: #{tpu_custom_call.1} parent=1 // pred_check_branch
      %108 = sbr.rel (0) target = $region37
    $region36: #{tpu_custom_call.1} parent=1 // pred_region
      %109 = dma.done [#allocation9], 128
    $region37: #{tpu_custom_call.1} parent=1 // pred_fallthru
      _
    // Predicated region
    $region38: #{tpu_custom_call.1} parent=1 // pred_check
      _
    $region39: #{tpu_custom_call.1} parent=1 // pred_check_branch
      %111 = sbr.rel (0) target = $region41
    $region40: #{tpu_custom_call.1} parent=1 // pred_region
      %112 = dma.done [#allocation12], 128
    $region41: #{tpu_custom_call.1} parent=1 // pred_fallthru
      _
    // Predicated region
    $region42: #{tpu_custom_call.1} parent=1 // pred_check
      _
    $region43: #{tpu_custom_call.1} parent=1 // pred_check_branch
      %114 = sbr.rel (0) target = $region45
    $region44: #{tpu_custom_call.1} parent=1 // pred_region
      %115 = dma.done [#allocation12], 256
    $region45: #{tpu_custom_call.1} parent=1 // pred_fallthru
      _
    %s116 = sadd.s32 0, 1
    %s117 = smul.u32 %s116, 2
    %p118 = scmp.lt.s32.totalorder %s117, 1
    %s119 = scalar_select %p118, %s117, 1
    %p120 = scmp.lt.s32.totalorder %s119, 1
    %s121 = scalar_select %p120, %s119, 1
    %s122 = smul.addr %s121, 8
    %s123 = scalar_lea.vmem %s5, %s122
    %s124 = smul.u32 0, 2
    %s125 = ssub.s32 %s124, 1
    %p126 = scmp.gt.s32.totalorder %s125, 0
    %s127 = scalar_select %p126, %s125, 0
    %s128 = sadd.s32 0, 1
    %s129 = smul.u32 %s128, 2
    %p130 = scmp.lt.s32.totalorder %s129, 1
    %s131 = scalar_select %p130, %s129, 1
    %s132 = smul.u32 0, 2
    %s133 = ssub.s32 %s132, 1
    %p134 = scmp.gt.s32.totalorder %s133, 0
    %s135 = scalar_select %p134, %s133, 0
    %s136 = sadd.s32 0, 1
    %s137 = smul.u32 %s136, 2
    %p138 = scmp.lt.s32.totalorder %s137, 1
    %s139 = scalar_select %p138, %s137, 1
    %p140 = scmp.lt.s32.totalorder %s139, 1
    %s141 = scalar_select %p140, %s139, 1
    %s142 = smul.addr %s141, 8
    %s143 = scalar_lea.vmem %s5, %s142
    %s144 = sadd.s32 0, 1
    %s145 = smul.u32 %s144, 2
    %p146 = scmp.lt.s32.totalorder %s145, 1
    %s147 = scalar_select %p146, %s145, 1
    %v148 = vld [vmem:[#allocation5] sm:$0xff]
    %149 = vst [vmem:[#allocation2] sm:$0xff] %v148
    %v150 = vld [vmem:[#allocation8] sm:$0xff]
    %v151 = vld [vmem:[#allocation8 + $0x8] sm:$0xff]
    %152 = vst [vmem:[#allocation2 + $0x8] sm:$0xff] %v150
    %153 = vst [vmem:[#allocation2 + $0x10] sm:$0xff] %v151
    %v154 = vld [vmem:[#allocation10] sm:$0xff]
    %155 = vst [vmem:[#allocation2 + $0x18] sm:$0xff] %v154
    %v156 = vld [vmem:[#allocation11] sm:$0xff]
    %v157 = vcvt.s32.f32 %v156
    %158 = vst [vmem:[#allocation3] sm:$0xff] %v157
    %v159 = vld [vmem:[#allocation13] sm:$0xff]
    %v160 = vld [vmem:[#allocation13 + $0x8] sm:$0xff]
    %v161 = vcvt.s32.f32 %v159
    %v162 = vcvt.s32.f32 %v160
    %163 = vst [vmem:[#allocation3 + $0x8] sm:$0xff] %v161
    %164 = vst [vmem:[#allocation3 + $0x10] sm:$0xff] %v162
    %v165 = vld [vmem:[%s143] sm:$0xff]
    %v166 = vcvt.s32.f32 %v165
    %167 = vst [vmem:[#allocation3 + $0x18] sm:$0xff] %v166
    %v168 = vld [vmem:[#allocation2] sm:$0xff]
    %v169 = vld [vmem:[#allocation2 + $0x8] sm:$0xff]
    %v170 = vld [vmem:[#allocation2 + $0x10] sm:$0xff]
    %v171 = vld [vmem:[#allocation2 + $0x18] sm:$0xff]
    %v172 = vld [vmem:[#allocation3] sm:$0xff]
    %v173 = vld [vmem:[#allocation3 + $0x8] sm:$0xff]
    %v174 = vld [vmem:[#allocation3 + $0x10] sm:$0xff]
    %v175 = vld [vmem:[#allocation3 + $0x18] sm:$0xff]
    %s176 = smul.u32 0, 16
    %s177 = ssub.s32 %s176, 8
    %v178 = vlaneseq
    %v179 = vshrl.u32 %v178, 7
    %v180 = vadd.s32 %v179, 8
    %v181 = vadd.s32 %v179, 16
    %v182 = vadd.s32 %v179, 24
    %v183 = vstv %s177
    %v184 = vadd.s32 %v183, %v179
    %v185 = vadd.s32 %v183, %v180
    %v186 = vadd.s32 %v183, %v181
    %v187 = vadd.s32 %v183, %v182
    %v188 = vlaneseq
    %v189 = vand.u32 %v188, 127
    %vm190 = vcmp.ge.s32.totalorder %v184, 0
    %vm191 = vcmp.ge.s32.totalorder %v185, 0
    %vm192 = vcmp.ge.s32.totalorder %v186, 0
    %vm193 = vcmp.ge.s32.totalorder %v187, 0
    %vm194 = vcmp.lt.s32.totalorder %v184, 16
    %vm195 = vcmp.lt.s32.totalorder %v185, 16
    %vm196 = vcmp.lt.s32.totalorder %v186, 16
    %vm197 = vcmp.lt.s32.totalorder %v187, 16
    %vm198 = vmand %vm190, %vm194
    %vm199 = vmand %vm191, %vm195
    %vm200 = vmand %vm192, %vm196
    %vm201 = vmand %vm193, %vm197
    %vm202 = vcmp.lt.s32.totalorder %v189, 16
    %vm203 = vmand %vm198, %vm202
    %vm204 = vmand %vm199, %vm202
    %vm205 = vmand %vm200, %vm202
    %vm206 = vmand %vm201, %vm202
    %v207 = vmul.f32 %v168, 0.5
    %v208 = vmul.f32 %v169, 0.5
    %v209 = vmul.f32 %v170, 0.5
    %v210 = vmul.f32 %v171, 0.5
    %v211 = vtanh.pop %v207
    %v212 = vtanh.pop %v208
    %v213 = vtanh.pop %v209
    %v214 = vtanh.pop %v210
    %v215 = vadd.f32 %v211, 1.0
    %v216 = vadd.f32 %v212, 1.0
    %v217 = vadd.f32 %v213, 1.0
    %v218 = vadd.f32 %v214, 1.0
    %v219 = vmul.f32 %v215, 0.5
    %v220 = vmul.f32 %v216, 0.5
    %v221 = vmul.f32 %v217, 0.5
    %v222 = vmul.f32 %v218, 0.5
    %v223 = vmul.f32 %v219, 2.0
    %v224 = vmul.f32 %v220, 2.0
    %v225 = vmul.f32 %v221, 2.0
    %v226 = vmul.f32 %v222, 2.0
    %v227 = vsub.f32 %v223, 1.0
    %v228 = vsub.f32 %v224, 1.0
    %v229 = vsub.f32 %v225, 1.0
    %v230 = vsub.f32 %v226, 1.0
    %v231 = vmul.f32 %v227, 0.5
    %v232 = vmul.f32 %v228, 0.5
    %v233 = vmul.f32 %v229, 0.5
    %v234 = vmul.f32 %v230, 0.5
    %v235 = vtanh.pop %v231
    %v236 = vtanh.pop %v232
    %v237 = vtanh.pop %v233
    %v238 = vtanh.pop %v234
    %v239 = vadd.f32 %v235, 1.0
    %v240 = vadd.f32 %v236, 1.0
    %v241 = vadd.f32 %v237, 1.0
    %v242 = vadd.f32 %v238, 1.0
    %v243 = vmul.f32 %v239, 0.5
    %v244 = vmul.f32 %v240, 0.5
    %v245 = vmul.f32 %v241, 0.5
    %v246 = vmul.f32 %v242, 0.5
    %v247 = vsel %vm203, %v243, 0.0
    %v248 = vsel %vm204, %v244, 0.0
    %v249 = vsel %vm205, %v245, 0.0
    %v250 = vsel %vm206, %v246, 0.0
    %v251 = vsel %vm203, %v243, 1.0
    %v252 = vsel %vm204, %v244, 1.0
    %v253 = vsel %vm205, %v245, 1.0
    %v254 = vsel %vm206, %v246, 1.0
    %255 = vrot.lane.b32.xlu0 %v247, 1
    %v256 = vpop.permute.xlu0 %255
    %257 = vrot.lane.b32.xlu0 %v248, 1
    %v258 = vpop.permute.xlu0 %257
    %259 = vrot.lane.b32.xlu0 %v249, 1
    %v260 = vpop.permute.xlu0 %259
    %261 = vrot.lane.b32.xlu0 %v250, 1
    %v262 = vpop.permute.xlu0 %261
    %263 = vrot.lane.b32.xlu0 %v247, 127
    %v264 = vpop.permute.xlu0 %263
    %265 = vrot.lane.b32.xlu0 %v248, 127
    %v266 = vpop.permute.xlu0 %265
    %267 = vrot.lane.b32.xlu0 %v249, 127
    %v268 = vpop.permute.xlu0 %267
    %269 = vrot.lane.b32.xlu0 %v250, 127
    %v270 = vpop.permute.xlu0 %269
    %vm271 = vcmp.ge.s32.totalorder %v189, 1
    %vm272 = vmand %vm198, %vm271
    %vm273 = vmand %vm199, %vm271
    %vm274 = vmand %vm200, %vm271
    %vm275 = vmand %vm201, %vm271
    %vm276 = vcmp.lt.s32.totalorder %v189, 17
    %vm277 = vmand %vm272, %vm276
    %vm278 = vmand %vm273, %vm276
    %vm279 = vmand %vm274, %vm276
    %vm280 = vmand %vm275, %vm276
    %vm281 = vcmp.lt.s32.totalorder %v189, 15
    %vm282 = vmand %vm198, %vm281
    %vm283 = vmand %vm199, %vm281
    %vm284 = vmand %vm200, %vm281
    %vm285 = vmand %vm201, %vm281
    %v286 = vsel %vm277, %v256, 0.0
    %v287 = vsel %vm278, %v258, 0.0
    %v288 = vsel %vm279, %v260, 0.0
    %v289 = vsel %vm280, %v262, 0.0
    %v290 = vmax.f32 %v247, %v286
    %v291 = vmax.f32 %v248, %v287
    %v292 = vmax.f32 %v249, %v288
    %v293 = vmax.f32 %v250, %v289
    %v294 = vsel %vm282, %v264, 0.0
    %v295 = vsel %vm283, %v266, 0.0
    %v296 = vsel %vm284, %v268, 0.0
    %v297 = vsel %vm285, %v270, 0.0
    %v298 = vmax.f32 %v290, %v294
    %v299 = vmax.f32 %v291, %v295
    %v300 = vmax.f32 %v292, %v296
    %v301 = vmax.f32 %v293, %v297
    %v302 = vsel %vm277, %v256, 1.0
    %v303 = vsel %vm278, %v258, 1.0
    %v304 = vsel %vm279, %v260, 1.0
    %v305 = vsel %vm280, %v262, 1.0
    %v306 = vmin.f32 %v251, %v302
    %v307 = vmin.f32 %v252, %v303
    %v308 = vmin.f32 %v253, %v304
    %v309 = vmin.f32 %v254, %v305
    %v310 = vsel %vm282, %v264, 1.0
    %v311 = vsel %vm283, %v266, 1.0
    %v312 = vsel %vm284, %v268, 1.0
    %v313 = vsel %vm285, %v270, 1.0
    %v314 = vmin.f32 %v306, %v310
    %v315 = vmin.f32 %v307, %v311
    %v316 = vmin.f32 %v308, %v312
    %v317 = vmin.f32 %v309, %v313
    %v318 = vsel %vm203, %v172, 0.0
    %v319 = vsel %vm204, %v173, 0.0
    %v320 = vsel %vm205, %v174, 0.0
    %v321 = vsel %vm206, %v175, 0.0
    %v322 = vsel %vm203, %v172, 1.0
    %v323 = vsel %vm204, %v173, 1.0
    %v324 = vsel %vm205, %v174, 1.0
    %v325 = vsel %vm206, %v175, 1.0
    %326 = vrot.lane.b32.xlu0 %v318, 1
    %v327 = vpop.permute.xlu0 %326
    %328 = vrot.lane.b32.xlu0 %v319, 1
    %v329 = vpop.permute.xlu0 %328
    %330 = vrot.lane.b32.xlu0 %v320, 1
    %v331 = vpop.permute.xlu0 %330
    %332 = vrot.lane.b32.xlu0 %v321, 1
    %v333 = vpop.permute.xlu0 %332
    %334 = vrot.lane.b32.xlu0 %v318, 127
    %v335 = vpop.permute.xlu0 %334
    %336 = vrot.lane.b32.xlu0 %v319, 127
    %v337 = vpop.permute.xlu0 %336
    %338 = vrot.lane.b32.xlu0 %v320, 127
    %v339 = vpop.permute.xlu0 %338
    %340 = vrot.lane.b32.xlu0 %v321, 127
    %v341 = vpop.permute.xlu0 %340
    %v342 = vsel %vm277, %v327, 0.0
    %v343 = vsel %vm278, %v329, 0.0
    %v344 = vsel %vm279, %v331, 0.0
    %v345 = vsel %vm280, %v333, 0.0
    %v346 = vmax.f32 %v318, %v342
    %v347 = vmax.f32 %v319, %v343
    %v348 = vmax.f32 %v320, %v344
    %v349 = vmax.f32 %v321, %v345
    %v350 = vsel %vm282, %v335, 0.0
    %v351 = vsel %vm283, %v337, 0.0
    %v352 = vsel %vm284, %v339, 0.0
    %v353 = vsel %vm285, %v341, 0.0
    %v354 = vmax.f32 %v346, %v350
    %v355 = vmax.f32 %v347, %v351
    %v356 = vmax.f32 %v348, %v352
    %v357 = vmax.f32 %v349, %v353
    %v358 = vsel %vm277, %v327, 1.0
    %v359 = vsel %vm278, %v329, 1.0
    %v360 = vsel %vm279, %v331, 1.0
    %v361 = vsel %vm280, %v333, 1.0
    %v362 = vmin.f32 %v322, %v358
    %v363 = vmin.f32 %v323, %v359
    %v364 = vmin.f32 %v324, %v360
    %v365 = vmin.f32 %v325, %v361
    %v366 = vsel %vm282, %v335, 1.0
    %v367 = vsel %vm283, %v337, 1.0
    %v368 = vsel %vm284, %v339, 1.0
    %v369 = vsel %vm285, %v341, 1.0
    %v370 = vmin.f32 %v362, %v366
    %v371 = vmin.f32 %v363, %v367
    %v372 = vmin.f32 %v364, %v368
    %v373 = vmin.f32 %v365, %v369
    %374 = vst [vmem:[#allocation4 + $0x7] sm:$0x1] 0.0
    %375 = vst [vmem:[#allocation4 + $0x8] sm:$0xff] %v298
    %376 = vst [vmem:[#allocation4 + $0x10] sm:$0xff] %v299
    %377 = vst [vmem:[#allocation4 + $0x18] sm:$0xff] %v300
    %378 = vst [vmem:[#allocation4 + $0x20] sm:$0xff] %v301
    %379 = vst [vmem:[#allocation4 + $0x28] sm:$0x1] 0.0
    %v380 = vld [vmem:[#allocation4 + $0x7] sm:$0xff]
    %v381 = vld [vmem:[#allocation4 + $0xf] sm:$0xff]
    %v382 = vld [vmem:[#allocation4 + $0x17] sm:$0xff]
    %v383 = vld [vmem:[#allocation4 + $0x1f] sm:$0xff]
    %v384 = vld [vmem:[#allocation4 + $0x8] sm:$0xff]
    %v385 = vld [vmem:[#allocation4 + $0x10] sm:$0xff]
    %v386 = vld [vmem:[#allocation4 + $0x18] sm:$0xff]
    %v387 = vld [vmem:[#allocation4 + $0x20] sm:$0xff]
    %v388 = vmax.f32 %v380, %v384
    %v389 = vmax.f32 %v381, %v385
    %v390 = vmax.f32 %v382, %v386
    %v391 = vmax.f32 %v383, %v387
    %v392 = vld [vmem:[#allocation4 + $0x9] sm:$0xff]
    %v393 = vld [vmem:[#allocation4 + $0x11] sm:$0xff]
    %v394 = vld [vmem:[#allocation4 + $0x19] sm:$0xff]
    %v395 = vld [vmem:[#allocation4 + $0x21] sm:$0xff]
    %v396 = vmax.f32 %v388, %v392
    %v397 = vmax.f32 %v389, %v393
    %v398 = vmax.f32 %v390, %v394
    %v399 = vmax.f32 %v391, %v395
    %400 = vst [vmem:[#allocation4 + $0x7] sm:$0x1] 1.0
    %401 = vst [vmem:[#allocation4 + $0x8] sm:$0xff] %v314
    %402 = vst [vmem:[#allocation4 + $0x10] sm:$0xff] %v315
    %403 = vst [vmem:[#allocation4 + $0x18] sm:$0xff] %v316
    %404 = vst [vmem:[#allocation4 + $0x20] sm:$0xff] %v317
    %405 = vst [vmem:[#allocation4 + $0x28] sm:$0x1] 1.0
    %v406 = vld [vmem:[#allocation4 + $0x7] sm:$0xff]
    %v407 = vld [vmem:[#allocation4 + $0xf] sm:$0xff]
    %v408 = vld [vmem:[#allocation4 + $0x17] sm:$0xff]
    %v409 = vld [vmem:[#allocation4 + $0x1f] sm:$0xff]
    %v410 = vld [vmem:[#allocation4 + $0x8] sm:$0xff]
    %v411 = vld [vmem:[#allocation4 + $0x10] sm:$0xff]
    %v412 = vld [vmem:[#allocation4 + $0x18] sm:$0xff]
    %v413 = vld [vmem:[#allocation4 + $0x20] sm:$0xff]
    %v414 = vmin.f32 %v406, %v410
    %v415 = vmin.f32 %v407, %v411
    %v416 = vmin.f32 %v408, %v412
    %v417 = vmin.f32 %v409, %v413
    %v418 = vld [vmem:[#allocation4 + $0x9] sm:$0xff]
    %v419 = vld [vmem:[#allocation4 + $0x11] sm:$0xff]
    %v420 = vld [vmem:[#allocation4 + $0x19] sm:$0xff]
    %v421 = vld [vmem:[#allocation4 + $0x21] sm:$0xff]
    %v422 = vmin.f32 %v414, %v418
    %v423 = vmin.f32 %v415, %v419
    %v424 = vmin.f32 %v416, %v420
    %v425 = vmin.f32 %v417, %v421
    %426 = vst [vmem:[#allocation4 + $0x7] sm:$0x1] 0.0
    %427 = vst [vmem:[#allocation4 + $0x8] sm:$0xff] %v354
    %428 = vst [vmem:[#allocation4 + $0x10] sm:$0xff] %v355
    %429 = vst [vmem:[#allocation4 + $0x18] sm:$0xff] %v356
    %430 = vst [vmem:[#allocation4 + $0x20] sm:$0xff] %v357
    %431 = vst [vmem:[#allocation4 + $0x28] sm:$0x1] 0.0
    %v432 = vld [vmem:[#allocation4 + $0x7] sm:$0xff]
    %v433 = vld [vmem:[#allocation4 + $0xf] sm:$0xff]
    %v434 = vld [vmem:[#allocation4 + $0x17] sm:$0xff]
    %v435 = vld [vmem:[#allocation4 + $0x1f] sm:$0xff]
    %v436 = vld [vmem:[#allocation4 + $0x8] sm:$0xff]
    %v437 = vld [vmem:[#allocation4 + $0x10] sm:$0xff]
    %v438 = vld [vmem:[#allocation4 + $0x18] sm:$0xff]
    %v439 = vld [vmem:[#allocation4 + $0x20] sm:$0xff]
    %v440 = vmax.f32 %v432, %v436
    %v441 = vmax.f32 %v433, %v437
    %v442 = vmax.f32 %v434, %v438
    %v443 = vmax.f32 %v435, %v439
    %v444 = vld [vmem:[#allocation4 + $0x9] sm:$0xff]
    %v445 = vld [vmem:[#allocation4 + $0x11] sm:$0xff]
    %v446 = vld [vmem:[#allocation4 + $0x19] sm:$0xff]
    %v447 = vld [vmem:[#allocation4 + $0x21] sm:$0xff]
    %v448 = vmax.f32 %v440, %v444
    %v449 = vmax.f32 %v441, %v445
    %v450 = vmax.f32 %v442, %v446
    %v451 = vmax.f32 %v443, %v447
    %452 = vst [vmem:[#allocation4 + $0x7] sm:$0x1] 1.0
    %453 = vst [vmem:[#allocation4 + $0x8] sm:$0xff] %v370
    %454 = vst [vmem:[#allocation4 + $0x10] sm:$0xff] %v371
    %455 = vst [vmem:[#allocation4 + $0x18] sm:$0xff] %v372
    %456 = vst [vmem:[#allocation4 + $0x20] sm:$0xff] %v373
    %457 = vst [vmem:[#allocation4 + $0x28] sm:$0x1] 1.0
    %v458 = vld [vmem:[#allocation4 + $0x7] sm:$0xff]
    %v459 = vld [vmem:[#allocation4 + $0xf] sm:$0xff]
    %v460 = vld [vmem:[#allocation4 + $0x17] sm:$0xff]
    %v461 = vld [vmem:[#allocation4 + $0x1f] sm:$0xff]
    %v462 = vld [vmem:[#allocation4 + $0x8] sm:$0xff]
    %v463 = vld [vmem:[#allocation4 + $0x10] sm:$0xff]
    %v464 = vld [vmem:[#allocation4 + $0x18] sm:$0xff]
    %v465 = vld [vmem:[#allocation4 + $0x20] sm:$0xff]
    %v466 = vmin.f32 %v458, %v462
    %v467 = vmin.f32 %v459, %v463
    %v468 = vmin.f32 %v460, %v464
    %v469 = vmin.f32 %v461, %v465
    %v470 = vld [vmem:[#allocation4 + $0x9] sm:$0xff]
    %v471 = vld [vmem:[#allocation4 + $0x11] sm:$0xff]
    %v472 = vld [vmem:[#allocation4 + $0x19] sm:$0xff]
    %v473 = vld [vmem:[#allocation4 + $0x21] sm:$0xff]
    %v474 = vmin.f32 %v466, %v470
    %v475 = vmin.f32 %v467, %v471
    %v476 = vmin.f32 %v468, %v472
    %v477 = vmin.f32 %v469, %v473
    %v478 = vsub.f32 %v396, %v243
    %v479 = vsub.f32 %v397, %v244
    %v480 = vsub.f32 %v398, %v245
    %v481 = vsub.f32 %v399, %v246
    %v482 = vsel %vm203, %v478, 0.0
    %v483 = vsel %vm204, %v479, 0.0
    %v484 = vsel %vm205, %v480, 0.0
    %v485 = vsel %vm206, %v481, 0.0
    %v486 = vsub.f32 %v448, %v172
    %v487 = vsub.f32 %v449, %v173
    %v488 = vsub.f32 %v450, %v174
    %v489 = vsub.f32 %v451, %v175
    %v490 = vsel %vm203, %v486, 0.0
    %v491 = vsel %vm204, %v487, 0.0
    %v492 = vsel %vm205, %v488, 0.0
    %v493 = vsel %vm206, %v489, 0.0
    %v494 = vsub.f32 %v243, %v422
    %v495 = vsub.f32 %v244, %v423
    %v496 = vsub.f32 %v245, %v424
    %v497 = vsub.f32 %v246, %v425
    %v498 = vsel %vm203, %v494, 0.0
    %v499 = vsel %vm204, %v495, 0.0
    %v500 = vsel %vm205, %v496, 0.0
    %v501 = vsel %vm206, %v497, 0.0
    %v502 = vsub.f32 %v172, %v474
    %v503 = vsub.f32 %v173, %v475
    %v504 = vsub.f32 %v174, %v476
    %v505 = vsub.f32 %v175, %v477
    %v506 = vsel %vm203, %v502, 0.0
    %v507 = vsel %vm204, %v503, 0.0
    %v508 = vsel %vm205, %v504, 0.0
    %v509 = vsel %vm206, %v505, 0.0
    %510 = vrot.lane.b32.xlu0 %v490, 1
    %v511 = vpop.permute.xlu0 %510
    %512 = vrot.lane.b32.xlu0 %v491, 1
    %v513 = vpop.permute.xlu0 %512
    %514 = vrot.lane.b32.xlu0 %v492, 1
    %v515 = vpop.permute.xlu0 %514
    %516 = vrot.lane.b32.xlu0 %v493, 1
    %v517 = vpop.permute.xlu0 %516
    %518 = vrot.lane.b32.xlu0 %v490, 127
    %v519 = vpop.permute.xlu0 %518
    %520 = vrot.lane.b32.xlu0 %v491, 127
    %v521 = vpop.permute.xlu0 %520
    %522 = vrot.lane.b32.xlu0 %v492, 127
    %v523 = vpop.permute.xlu0 %522
    %524 = vrot.lane.b32.xlu0 %v493, 127
    %v525 = vpop.permute.xlu0 %524
    %v526 = vsel %vm271, %v511, 0.0
    %v527 = vsel %vm271, %v513, 0.0
    %v528 = vsel %vm271, %v515, 0.0
    %v529 = vsel %vm271, %v517, 0.0
    %v530 = vmax.f32 %v490, %v526
    %v531 = vmax.f32 %v491, %v527
    %v532 = vmax.f32 %v492, %v528
    %v533 = vmax.f32 %v493, %v529
    %vm534 = vcmp.lt.s32.totalorder %v189, 127
    %v535 = vsel %vm534, %v519, 0.0
    %v536 = vsel %vm534, %v521, 0.0
    %v537 = vsel %vm534, %v523, 0.0
    %v538 = vsel %vm534, %v525, 0.0
    %v539 = vmax.f32 %v530, %v535
    %v540 = vmax.f32 %v531, %v536
    %v541 = vmax.f32 %v532, %v537
    %v542 = vmax.f32 %v533, %v538
    %543 = vrot.lane.b32.xlu0 %v490, 2
    %v544 = vpop.permute.xlu0 %543
    %545 = vrot.lane.b32.xlu0 %v491, 2
    %v546 = vpop.permute.xlu0 %545
    %547 = vrot.lane.b32.xlu0 %v492, 2
    %v548 = vpop.permute.xlu0 %547
    %549 = vrot.lane.b32.xlu0 %v493, 2
    %v550 = vpop.permute.xlu0 %549
    %551 = vrot.lane.b32.xlu0 %v490, 126
    %v552 = vpop.permute.xlu0 %551
    %553 = vrot.lane.b32.xlu0 %v491, 126
    %v554 = vpop.permute.xlu0 %553
    %555 = vrot.lane.b32.xlu0 %v492, 126
    %v556 = vpop.permute.xlu0 %555
    %557 = vrot.lane.b32.xlu0 %v493, 126
    %v558 = vpop.permute.xlu0 %557
    %vm559 = vcmp.ge.s32.totalorder %v189, 2
    %v560 = vsel %vm559, %v544, 0.0
    %v561 = vsel %vm559, %v546, 0.0
    %v562 = vsel %vm559, %v548, 0.0
    %v563 = vsel %vm559, %v550, 0.0
    %v564 = vmax.f32 %v539, %v560
    %v565 = vmax.f32 %v540, %v561
    %v566 = vmax.f32 %v541, %v562
    %v567 = vmax.f32 %v542, %v563
    %vm568 = vcmp.lt.s32.totalorder %v189, 126
    %v569 = vsel %vm568, %v552, 0.0
    %v570 = vsel %vm568, %v554, 0.0
    %v571 = vsel %vm568, %v556, 0.0
    %v572 = vsel %vm568, %v558, 0.0
    %v573 = vmax.f32 %v564, %v569
    %v574 = vmax.f32 %v565, %v570
    %v575 = vmax.f32 %v566, %v571
    %v576 = vmax.f32 %v567, %v572
    %577 = vst [vmem:[#allocation4 + $0x6] sm:$0x3] 0.0
    %578 = vst [vmem:[#allocation4 + $0x8] sm:$0xff] %v573
    %579 = vst [vmem:[#allocation4 + $0x10] sm:$0xff] %v574
    %580 = vst [vmem:[#allocation4 + $0x18] sm:$0xff] %v575
    %581 = vst [vmem:[#allocation4 + $0x20] sm:$0xff] %v576
    %582 = vst [vmem:[#allocation4 + $0x28] sm:$0x3] 0.0
    %v583 = vld [vmem:[#allocation4 + $0xe] sm:$0xff]
    %v584 = vld [vmem:[#allocation4 + $0x16] sm:$0xff]
    %v585 = vld [vmem:[#allocation4 + $0xf] sm:$0xff]
    %v586 = vld [vmem:[#allocation4 + $0x17] sm:$0xff]
    %v587 = vmax.f32 %v583, %v585
    %v588 = vmax.f32 %v584, %v586
    %v589 = vld [vmem:[#allocation4 + $0x10] sm:$0xff]
    %v590 = vld [vmem:[#allocation4 + $0x18] sm:$0xff]
    %v591 = vmax.f32 %v587, %v589
    %v592 = vmax.f32 %v588, %v590
    %v593 = vld [vmem:[#allocation4 + $0x11] sm:$0xff]
    %v594 = vld [vmem:[#allocation4 + $0x19] sm:$0xff]
    %v595 = vmax.f32 %v591, %v593
    %v596 = vmax.f32 %v592, %v594
    %v597 = vld [vmem:[#allocation4 + $0x12] sm:$0xff]
    %v598 = vld [vmem:[#allocation4 + $0x1a] sm:$0xff]
    %v599 = vmax.f32 %v595, %v597
    %v600 = vmax.f32 %v596, %v598
    %601 = vrot.lane.b32.xlu0 %v482, 1
    %v602 = vpop.permute.xlu0 %601
    %603 = vrot.lane.b32.xlu0 %v483, 1
    %v604 = vpop.permute.xlu0 %603
    %605 = vrot.lane.b32.xlu0 %v484, 1
    %v606 = vpop.permute.xlu0 %605
    %607 = vrot.lane.b32.xlu0 %v485, 1
    %v608 = vpop.permute.xlu0 %607
    %609 = vrot.lane.b32.xlu0 %v482, 127
    %v610 = vpop.permute.xlu0 %609
    %611 = vrot.lane.b32.xlu0 %v483, 127
    %v612 = vpop.permute.xlu0 %611
    %613 = vrot.lane.b32.xlu0 %v484, 127
    %v614 = vpop.permute.xlu0 %613
    %615 = vrot.lane.b32.xlu0 %v485, 127
    %v616 = vpop.permute.xlu0 %615
    %v617 = vsel %vm271, %v602, 0.0
    %v618 = vsel %vm271, %v604, 0.0
    %v619 = vsel %vm271, %v606, 0.0
    %v620 = vsel %vm271, %v608, 0.0
    %v621 = vmax.f32 %v482, %v617
    %v622 = vmax.f32 %v483, %v618
    %v623 = vmax.f32 %v484, %v619
    %v624 = vmax.f32 %v485, %v620
    %v625 = vsel %vm534, %v610, 0.0
    %v626 = vsel %vm534, %v612, 0.0
    %v627 = vsel %vm534, %v614, 0.0
    %v628 = vsel %vm534, %v616, 0.0
    %v629 = vmax.f32 %v621, %v625
    %v630 = vmax.f32 %v622, %v626
    %v631 = vmax.f32 %v623, %v627
    %v632 = vmax.f32 %v624, %v628
    %633 = vrot.lane.b32.xlu0 %v482, 2
    %v634 = vpop.permute.xlu0 %633
    %635 = vrot.lane.b32.xlu0 %v483, 2
    %v636 = vpop.permute.xlu0 %635
    %637 = vrot.lane.b32.xlu0 %v484, 2
    %v638 = vpop.permute.xlu0 %637
    %639 = vrot.lane.b32.xlu0 %v485, 2
    %v640 = vpop.permute.xlu0 %639
    %641 = vrot.lane.b32.xlu0 %v482, 126
    %v642 = vpop.permute.xlu0 %641
    %643 = vrot.lane.b32.xlu0 %v483, 126
    %v644 = vpop.permute.xlu0 %643
    %645 = vrot.lane.b32.xlu0 %v484, 126
    %v646 = vpop.permute.xlu0 %645
    %647 = vrot.lane.b32.xlu0 %v485, 126
    %v648 = vpop.permute.xlu0 %647
    %v649 = vsel %vm559, %v634, 0.0
    %v650 = vsel %vm559, %v636, 0.0
    %v651 = vsel %vm559, %v638, 0.0
    %v652 = vsel %vm559, %v640, 0.0
    %v653 = vmax.f32 %v629, %v649
    %v654 = vmax.f32 %v630, %v650
    %v655 = vmax.f32 %v631, %v651
    %v656 = vmax.f32 %v632, %v652
    %v657 = vsel %vm568, %v642, 0.0
    %v658 = vsel %vm568, %v644, 0.0
    %v659 = vsel %vm568, %v646, 0.0
    %v660 = vsel %vm568, %v648, 0.0
    %v661 = vmax.f32 %v653, %v657
    %v662 = vmax.f32 %v654, %v658
    %v663 = vmax.f32 %v655, %v659
    %v664 = vmax.f32 %v656, %v660
    %665 = vst [vmem:[#allocation4 + $0x6] sm:$0x3] 0.0
    %666 = vst [vmem:[#allocation4 + $0x8] sm:$0xff] %v661
    %667 = vst [vmem:[#allocation4 + $0x10] sm:$0xff] %v662
    %668 = vst [vmem:[#allocation4 + $0x18] sm:$0xff] %v663
    %669 = vst [vmem:[#allocation4 + $0x20] sm:$0xff] %v664
    %670 = vst [vmem:[#allocation4 + $0x28] sm:$0x3] 0.0
    %v671 = vld [vmem:[#allocation4 + $0xe] sm:$0xff]
    %v672 = vld [vmem:[#allocation4 + $0x16] sm:$0xff]
    %v673 = vld [vmem:[#allocation4 + $0xf] sm:$0xff]
    %v674 = vld [vmem:[#allocation4 + $0x17] sm:$0xff]
    %v675 = vmax.f32 %v671, %v673
    %v676 = vmax.f32 %v672, %v674
    %v677 = vld [vmem:[#allocation4 + $0x10] sm:$0xff]
    %v678 = vld [vmem:[#allocation4 + $0x18] sm:$0xff]
    %v679 = vmax.f32 %v675, %v677
    %v680 = vmax.f32 %v676, %v678
    %v681 = vld [vmem:[#allocation4 + $0x11] sm:$0xff]
    %v682 = vld [vmem:[#allocation4 + $0x19] sm:$0xff]
    %v683 = vmax.f32 %v679, %v681
    %v684 = vmax.f32 %v680, %v682
    %v685 = vld [vmem:[#allocation4 + $0x12] sm:$0xff]
    %v686 = vld [vmem:[#allocation4 + $0x1a] sm:$0xff]
    %v687 = vmax.f32 %v683, %v685
    %v688 = vmax.f32 %v684, %v686
    %689 = vrot.lane.b32.xlu0 %v506, 1
    %v690 = vpop.permute.xlu0 %689
    %691 = vrot.lane.b32.xlu0 %v507, 1
    %v692 = vpop.permute.xlu0 %691
    %693 = vrot.lane.b32.xlu0 %v508, 1
    %v694 = vpop.permute.xlu0 %693
    %695 = vrot.lane.b32.xlu0 %v509, 1
    %v696 = vpop.permute.xlu0 %695
    %697 = vrot.lane.b32.xlu0 %v506, 127
    %v698 = vpop.permute.xlu0 %697
    %699 = vrot.lane.b32.xlu0 %v507, 127
    %v700 = vpop.permute.xlu0 %699
    %701 = vrot.lane.b32.xlu0 %v508, 127
    %v702 = vpop.permute.xlu0 %701
    %703 = vrot.lane.b32.xlu0 %v509, 127
    %v704 = vpop.permute.xlu0 %703
    %v705 = vsel %vm271, %v690, 0.0
    %v706 = vsel %vm271, %v692, 0.0
    %v707 = vsel %vm271, %v694, 0.0
    %v708 = vsel %vm271, %v696, 0.0
    %v709 = vmax.f32 %v506, %v705
    %v710 = vmax.f32 %v507, %v706
    %v711 = vmax.f32 %v508, %v707
    %v712 = vmax.f32 %v509, %v708
    %v713 = vsel %vm534, %v698, 0.0
    %v714 = vsel %vm534, %v700, 0.0
    %v715 = vsel %vm534, %v702, 0.0
    %v716 = vsel %vm534, %v704, 0.0
    %v717 = vmax.f32 %v709, %v713
    %v718 = vmax.f32 %v710, %v714
    %v719 = vmax.f32 %v711, %v715
    %v720 = vmax.f32 %v712, %v716
    %721 = vrot.lane.b32.xlu0 %v506, 2
    %v722 = vpop.permute.xlu0 %721
    %723 = vrot.lane.b32.xlu0 %v507, 2
    %v724 = vpop.permute.xlu0 %723
    %725 = vrot.lane.b32.xlu0 %v508, 2
    %v726 = vpop.permute.xlu0 %725
    %727 = vrot.lane.b32.xlu0 %v509, 2
    %v728 = vpop.permute.xlu0 %727
    %729 = vrot.lane.b32.xlu0 %v506, 126
    %v730 = vpop.permute.xlu0 %729
    %731 = vrot.lane.b32.xlu0 %v507, 126
    %v732 = vpop.permute.xlu0 %731
    %733 = vrot.lane.b32.xlu0 %v508, 126
    %v734 = vpop.permute.xlu0 %733
    %735 = vrot.lane.b32.xlu0 %v509, 126
    %v736 = vpop.permute.xlu0 %735
    %v737 = vsel %vm559, %v722, 0.0
    %v738 = vsel %vm559, %v724, 0.0
    %v739 = vsel %vm559, %v726, 0.0
    %v740 = vsel %vm559, %v728, 0.0
    %v741 = vmax.f32 %v717, %v737
    %v742 = vmax.f32 %v718, %v738
    %v743 = vmax.f32 %v719, %v739
    %v744 = vmax.f32 %v720, %v740
    %v745 = vsel %vm568, %v730, 0.0
    %v746 = vsel %vm568, %v732, 0.0
    %v747 = vsel %vm568, %v734, 0.0
    %v748 = vsel %vm568, %v736, 0.0
    %v749 = vmax.f32 %v741, %v745
    %v750 = vmax.f32 %v742, %v746
    %v751 = vmax.f32 %v743, %v747
    %v752 = vmax.f32 %v744, %v748
    %753 = vst [vmem:[#allocation4 + $0x6] sm:$0x3] 0.0
    %754 = vst [vmem:[#allocation4 + $0x8] sm:$0xff] %v749
    %755 = vst [vmem:[#allocation4 + $0x10] sm:$0xff] %v750
    %756 = vst [vmem:[#allocation4 + $0x18] sm:$0xff] %v751
    %757 = vst [vmem:[#allocation4 + $0x20] sm:$0xff] %v752
    %758 = vst [vmem:[#allocation4 + $0x28] sm:$0x3] 0.0
    %v759 = vld [vmem:[#allocation4 + $0xe] sm:$0xff]
    %v760 = vld [vmem:[#allocation4 + $0x16] sm:$0xff]
    %v761 = vld [vmem:[#allocation4 + $0xf] sm:$0xff]
    %v762 = vld [vmem:[#allocation4 + $0x17] sm:$0xff]
    %v763 = vmax.f32 %v759, %v761
    %v764 = vmax.f32 %v760, %v762
    %v765 = vld [vmem:[#allocation4 + $0x10] sm:$0xff]
    %v766 = vld [vmem:[#allocation4 + $0x18] sm:$0xff]
    %v767 = vmax.f32 %v763, %v765
    %v768 = vmax.f32 %v764, %v766
    %v769 = vld [vmem:[#allocation4 + $0x11] sm:$0xff]
    %v770 = vld [vmem:[#allocation4 + $0x19] sm:$0xff]
    %v771 = vmax.f32 %v767, %v769
    %v772 = vmax.f32 %v768, %v770
    %v773 = vld [vmem:[#allocation4 + $0x12] sm:$0xff]
    %v774 = vld [vmem:[#allocation4 + $0x1a] sm:$0xff]
    %v775 = vmax.f32 %v771, %v773
    %v776 = vmax.f32 %v772, %v774
    %777 = vrot.lane.b32.xlu0 %v498, 1
    %v778 = vpop.permute.xlu0 %777
    %779 = vrot.lane.b32.xlu0 %v499, 1
    %v780 = vpop.permute.xlu0 %779
    %781 = vrot.lane.b32.xlu0 %v500, 1
    %v782 = vpop.permute.xlu0 %781
    %783 = vrot.lane.b32.xlu0 %v501, 1
    %v784 = vpop.permute.xlu0 %783
    %785 = vrot.lane.b32.xlu0 %v498, 127
    %v786 = vpop.permute.xlu0 %785
    %787 = vrot.lane.b32.xlu0 %v499, 127
    %v788 = vpop.permute.xlu0 %787
    %789 = vrot.lane.b32.xlu0 %v500, 127
    %v790 = vpop.permute.xlu0 %789
    %791 = vrot.lane.b32.xlu0 %v501, 127
    %v792 = vpop.permute.xlu0 %791
    %v793 = vsel %vm271, %v778, 0.0
    %v794 = vsel %vm271, %v780, 0.0
    %v795 = vsel %vm271, %v782, 0.0
    %v796 = vsel %vm271, %v784, 0.0
    %v797 = vmax.f32 %v498, %v793
    %v798 = vmax.f32 %v499, %v794
    %v799 = vmax.f32 %v500, %v795
    %v800 = vmax.f32 %v501, %v796
    %v801 = vsel %vm534, %v786, 0.0
    %v802 = vsel %vm534, %v788, 0.0
    %v803 = vsel %vm534, %v790, 0.0
    %v804 = vsel %vm534, %v792, 0.0
    %v805 = vmax.f32 %v797, %v801
    %v806 = vmax.f32 %v798, %v802
    %v807 = vmax.f32 %v799, %v803
    %v808 = vmax.f32 %v800, %v804
    %809 = vrot.lane.b32.xlu0 %v498, 2
    %v810 = vpop.permute.xlu0 %809
    %811 = vrot.lane.b32.xlu0 %v499, 2
    %v812 = vpop.permute.xlu0 %811
    %813 = vrot.lane.b32.xlu0 %v500, 2
    %v814 = vpop.permute.xlu0 %813
    %815 = vrot.lane.b32.xlu0 %v501, 2
    %v816 = vpop.permute.xlu0 %815
    %817 = vrot.lane.b32.xlu0 %v498, 126
    %v818 = vpop.permute.xlu0 %817
    %819 = vrot.lane.b32.xlu0 %v499, 126
    %v820 = vpop.permute.xlu0 %819
    %821 = vrot.lane.b32.xlu0 %v500, 126
    %v822 = vpop.permute.xlu0 %821
    %823 = vrot.lane.b32.xlu0 %v501, 126
    %v824 = vpop.permute.xlu0 %823
    %v825 = vsel %vm559, %v810, 0.0
    %v826 = vsel %vm559, %v812, 0.0
    %v827 = vsel %vm559, %v814, 0.0
    %v828 = vsel %vm559, %v816, 0.0
    %v829 = vmax.f32 %v805, %v825
    %v830 = vmax.f32 %v806, %v826
    %v831 = vmax.f32 %v807, %v827
    %v832 = vmax.f32 %v808, %v828
    %v833 = vsel %vm568, %v818, 0.0
    %v834 = vsel %vm568, %v820, 0.0
    %v835 = vsel %vm568, %v822, 0.0
    %v836 = vsel %vm568, %v824, 0.0
    %v837 = vmax.f32 %v829, %v833
    %v838 = vmax.f32 %v830, %v834
    %v839 = vmax.f32 %v831, %v835
    %v840 = vmax.f32 %v832, %v836
    %841 = vst [vmem:[#allocation4 + $0x6] sm:$0x3] 0.0
    %842 = vst [vmem:[#allocation4 + $0x8] sm:$0xff] %v837
    %843 = vst [vmem:[#allocation4 + $0x10] sm:$0xff] %v838
    %844 = vst [vmem:[#allocation4 + $0x18] sm:$0xff] %v839
    %845 = vst [vmem:[#allocation4 + $0x20] sm:$0xff] %v840
    %846 = vst [vmem:[#allocation4 + $0x28] sm:$0x3] 0.0
    %v847 = vld [vmem:[#allocation4 + $0xe] sm:$0xff]
    %v848 = vld [vmem:[#allocation4 + $0x16] sm:$0xff]
    %v849 = vld [vmem:[#allocation4 + $0xf] sm:$0xff]
    %v850 = vld [vmem:[#allocation4 + $0x17] sm:$0xff]
    %v851 = vmax.f32 %v847, %v849
    %v852 = vmax.f32 %v848, %v850
    %v853 = vld [vmem:[#allocation4 + $0x10] sm:$0xff]
    %v854 = vld [vmem:[#allocation4 + $0x18] sm:$0xff]
    %v855 = vmax.f32 %v851, %v853
    %v856 = vmax.f32 %v852, %v854
    %v857 = vld [vmem:[#allocation4 + $0x11] sm:$0xff]
    %v858 = vld [vmem:[#allocation4 + $0x19] sm:$0xff]
    %v859 = vmax.f32 %v855, %v857
    %v860 = vmax.f32 %v856, %v858
    %v861 = vld [vmem:[#allocation4 + $0x12] sm:$0xff]
    %v862 = vld [vmem:[#allocation4 + $0x1a] sm:$0xff]
    %v863 = vmax.f32 %v859, %v861
    %v864 = vmax.f32 %v860, %v862
    %vm865 = vcmask 130048
    %v867 = vsel %vm865, 1.0, 0
    %869 = vmatprep.subr.mxu0 0.0
    %v870 = vand.u32 %v483, 4294901760
    %871 = vmatpush1.msra.mxu0 %v870
    %872 = vmatprep.subr.mxu0 0.0
    %v873 = vand.u32 %v484, 4294901760
    %874 = vmatpush1.msra.mxu0 %v873
    %875 = vmatprep.subr.mxu0 0.0
    %876 = vmatpush1.msra.mxu0 0.0
    %877 = vmatprep.subr.mxu0 0.0
    %878 = vmatpush1.msra.mxu0 0.0
    %879 = vmatprep.subr.mxu0 0.0
    %880 = vmatpush1.msra.mxu0 0.0
    %881 = vmatprep.subr.mxu0 0.0
    %882 = vmatpush1.msra.mxu0 0.0
    %883 = vmatprep.subr.mxu0 0.0
    %884 = vmatpush1.msra.mxu0 0.0
    %885 = vmatprep.subr.mxu0 0.0
    %886 = vmatpush1.msra.mxu0 0.0
    %887 = vmatprep.subr.mxu0 0.0
    %888 = vmatpush1.msra.mxu0 0.0
    %889 = vmatprep.subr.mxu0 0.0
    %890 = vmatpush1.msra.mxu0 0.0
    %891 = vmatprep.subr.mxu0 0.0
    %892 = vmatpush1.msra.mxu0 0.0
    %893 = vmatprep.subr.mxu0 0.0
    %894 = vmatpush1.msra.mxu0 0.0
    %895 = vmatprep.subr.mxu0 0.0
    %896 = vmatpush1.msra.mxu0 0.0
    %897 = vmatprep.subr.mxu0 0.0
    %898 = vmatpush1.msra.mxu0 0.0
    %899 = vmatprep.subr.mxu0 0.0
    %900 = vmatpush1.msra.mxu0 0.0
    %901 = vmatprep.subr.mxu0 0.0
    %902 = vmatpush1.msra.mxu0 0.0
    %903 = vmatprep.subr.mxu0 0.0
    %904 = vmatpush1.msra.mxu0 0.0
    %905 = vmatprep.subr.mxu0 0.0
    %906 = vmatpush1.msra.mxu0 0.0
    %907 = vmatprep.subr.mxu0 0.0
    %908 = vmatpush1.msra.mxu0 0.0
    %909 = vmatprep.subr.mxu0 0.0
    %910 = vmatpush1.msra.mxu0 0.0
    %911 = vmatprep.subr.mxu0 0.0
    %912 = vmatpush1.msra.mxu0 0.0
    %913 = vmatprep.subr.mxu0 0.0
    %914 = vmatpush1.msra.mxu0 0.0
    %915 = vmatprep.subr.mxu0 0.0
    %916 = vmatpush1.msra.mxu0 0.0
    %917 = vmatprep.subr.mxu0 0.0
    %918 = vmatpush1.msra.mxu0 0.0
    %919 = vmatprep.subr.mxu0 0.0
    %920 = vmatpush1.msra.mxu0 0.0
    %921 = vmatprep.subr.mxu0 0.0
    %922 = vmatpush1.msra.mxu0 0.0
    %923 = vmatprep.subr.mxu0 0.0
    %924 = vmatpush1.msra.mxu0 0.0
    %925 = vmatprep.subr.mxu0 0.0
    %926 = vmatpush1.msra.mxu0 0.0
    %927 = vmatprep.subr.mxu0 0.0
    %928 = vmatpush1.msra.mxu0 0.0
    %929 = vmatprep.subr.mxu0 0.0
    %930 = vmatpush1.msra.mxu0 0.0
    %931 = vmatprep.subr.mxu0 0.0
    %932 = vmatpush1.msra.mxu0 0.0
    %933 = vmatprep.subr.mxu0 0.0
    %934 = vmatpush1.msra.mxu0 0.0
    %935 = vmatprep.mubr.f32.mxu0 0.0
    %v936 = vand.u32 %v867, 4294901760
    %v937 = vsub.f32 %v867, %v936
    %v938 = vand.u32 %v937, 4294901760
    %v939 = vsub.f32 %v937, %v938
    %v940 = vand.u32 %v939, 4294901760
    %941 = vmatmul.mubr.f32.gmra.mrb[0].mxu0 %v940
    %v942 = vpop.f32.mrb[0].mxu0
    %v943 = vadd.f32 0.0, %v942
    %v944 = vpop.f32.mrb[0].mxu0
    %945 = vdwg.mxu0
    %946 = vmatprep.subr.mxu0 0.0
    %v947 = vand.u32 %v483, 4294901760
    %v948 = vsub.f32 %v483, %v947
    %v949 = vand.u32 %v948, 4294901760
    %v950 = vsub.f32 %v948, %v949
    %v951 = vand.u32 %v950, 4294901760
    %952 = vmatpush1.msra.mxu0 %v951
    %953 = vmatprep.subr.mxu0 0.0
    %v954 = vand.u32 %v484, 4294901760
    %v955 = vsub.f32 %v484, %v954
    %v956 = vand.u32 %v955, 4294901760
    %v957 = vsub.f32 %v955, %v956
    %v958 = vand.u32 %v957, 4294901760
    %959 = vmatpush1.msra.mxu0 %v958
    %960 = vmatprep.subr.mxu0 0.0
    %961 = vmatpush1.msra.mxu0 0.0
    %962 = vmatprep.subr.mxu0 0.0
    %963 = vmatpush1.msra.mxu0 0.0
    %964 = vmatprep.subr.mxu0 0.0
    %965 = vmatpush1.msra.mxu0 0.0
    %966 = vmatprep.subr.mxu0 0.0
    %967 = vmatpush1.msra.mxu0 0.0
    %968 = vmatprep.subr.mxu0 0.0
    %969 = vmatpush1.msra.mxu0 0.0
    %970 = vmatprep.subr.mxu0 0.0
    %971 = vmatpush1.msra.mxu0 0.0
    %972 = vmatprep.subr.mxu0 0.0
    %973 = vmatpush1.msra.mxu0 0.0
    %974 = vmatprep.subr.mxu0 0.0
    %975 = vmatpush1.msra.mxu0 0.0
    %976 = vmatprep.subr.mxu0 0.0
    %977 = vmatpush1.msra.mxu0 0.0
    %978 = vmatprep.subr.mxu0 0.0
    %979 = vmatpush1.msra.mxu0 0.0
    %980 = vmatprep.subr.mxu0 0.0
    %981 = vmatpush1.msra.mxu0 0.0
    %982 = vmatprep.subr.mxu0 0.0
    %983 = vmatpush1.msra.mxu0 0.0
    %984 = vmatprep.subr.mxu0 0.0
    %985 = vmatpush1.msra.mxu0 0.0
    %986 = vmatprep.subr.mxu0 0.0
    %987 = vmatpush1.msra.mxu0 0.0
    %988 = vmatprep.subr.mxu0 0.0
    %989 = vmatpush1.msra.mxu0 0.0
    %990 = vmatprep.subr.mxu0 0.0
    %991 = vmatpush1.msra.mxu0 0.0
    %992 = vmatprep.subr.mxu0 0.0
    %993 = vmatpush1.msra.mxu0 0.0
    %994 = vmatprep.subr.mxu0 0.0
    %995 = vmatpush1.msra.mxu0 0.0
    %996 = vmatprep.subr.mxu0 0.0
    %997 = vmatpush1.msra.mxu0 0.0
    %998 = vmatprep.subr.mxu0 0.0
    %999 = vmatpush1.msra.mxu0 0.0
    %1000 = vmatprep.subr.mxu0 0.0
    %1001 = vmatpush1.msra.mxu0 0.0
    %1002 = vmatprep.subr.mxu0 0.0
    %1003 = vmatpush1.msra.mxu0 0.0
    %1004 = vmatprep.subr.mxu0 0.0
    %1005 = vmatpush1.msra.mxu0 0.0
    %1006 = vmatprep.subr.mxu0 0.0
    %1007 = vmatpush1.msra.mxu0 0.0
    %1008 = vmatprep.subr.mxu0 0.0
    %1009 = vmatpush1.msra.mxu0 0.0
    %1010 = vmatprep.subr.mxu0 0.0
    %1011 = vmatpush1.msra.mxu0 0.0
    %1012 = vmatprep.subr.mxu0 0.0
    %1013 = vmatpush1.msra.mxu0 0.0
    %1014 = vmatprep.subr.mxu0 0.0
    %1015 = vmatpush1.msra.mxu0 0.0
    %1016 = vmatprep.subr.mxu0 0.0
    %1017 = vmatpush1.msra.mxu0 0.0
    %1018 = vmatprep.subr.mxu0 0.0
    %1019 = vmatpush1.msra.mxu0 0.0
    %1020 = vmatprep.mubr.f32.mxu0 0.0
    %v1021 = vand.u32 %v867, 4294901760
    %1022 = vmatmul.mubr.f32.gmra.mrb[0].mxu0 %v1021
    %v1023 = vpop.f32.mrb[0].mxu0
    %v1024 = vadd.f32 %v943, %v1023
    %v1025 = vpop.f32.mrb[0].mxu0
    %1026 = vdwg.mxu0
    %1027 = vmatprep.subr.mxu0 0.0
    %v1028 = vand.u32 %v483, 4294901760
    %v1029 = vsub.f32 %v483, %v1028
    %1030 = vmatpush1.msra.mxu0 %v1029
    %1031 = vmatprep.subr.mxu0 0.0
    %v1032 = vand.u32 %v484, 4294901760
    %v1033 = vsub.f32 %v484, %v1032
    %1034 = vmatpush1.msra.mxu0 %v1033
    %1035 = vmatprep.subr.mxu0 0.0
    %1036 = vmatpush1.msra.mxu0 0.0
    %1037 = vmatprep.subr.mxu0 0.0
    %1038 = vmatpush1.msra.mxu0 0.0
    %1039 = vmatprep.subr.mxu0 0.0
    %1040 = vmatpush1.msra.mxu0 0.0
    %1041 = vmatprep.subr.mxu0 0.0
    %1042 = vmatpush1.msra.mxu0 0.0
    %1043 = vmatprep.subr.mxu0 0.0
    %1044 = vmatpush1.msra.mxu0 0.0
    %1045 = vmatprep.subr.mxu0 0.0
    %1046 = vmatpush1.msra.mxu0 0.0
    %1047 = vmatprep.subr.mxu0 0.0
    %1048 = vmatpush1.msra.mxu0 0.0
    %1049 = vmatprep.subr.mxu0 0.0
    %1050 = vmatpush1.msra.mxu0 0.0
    %1051 = vmatprep.subr.mxu0 0.0
    %1052 = vmatpush1.msra.mxu0 0.0
    %1053 = vmatprep.subr.mxu0 0.0
    %1054 = vmatpush1.msra.mxu0 0.0
    %1055 = vmatprep.subr.mxu0 0.0
    %1056 = vmatpush1.msra.mxu0 0.0
    %1057 = vmatprep.subr.mxu0 0.0
    %1058 = vmatpush1.msra.mxu0 0.0
    %1059 = vmatprep.subr.mxu0 0.0
    %1060 = vmatpush1.msra.mxu0 0.0
    %1061 = vmatprep.subr.mxu0 0.0
    %1062 = vmatpush1.msra.mxu0 0.0
    %1063 = vmatprep.subr.mxu0 0.0
    %1064 = vmatpush1.msra.mxu0 0.0
    %1065 = vmatprep.subr.mxu0 0.0
    %1066 = vmatpush1.msra.mxu0 0.0
    %1067 = vmatprep.subr.mxu0 0.0
    %1068 = vmatpush1.msra.mxu0 0.0
    %1069 = vmatprep.subr.mxu0 0.0
    %1070 = vmatpush1.msra.mxu0 0.0
    %1071 = vmatprep.subr.mxu0 0.0
    %1072 = vmatpush1.msra.mxu0 0.0
    %1073 = vmatprep.subr.mxu0 0.0
    %1074 = vmatpush1.msra.mxu0 0.0
    %1075 = vmatprep.subr.mxu0 0.0
    %1076 = vmatpush1.msra.mxu0 0.0
    %1077 = vmatprep.subr.mxu0 0.0
    %1078 = vmatpush1.msra.mxu0 0.0
    %1079 = vmatprep.subr.mxu0 0.0
    %1080 = vmatpush1.msra.mxu0 0.0
    %1081 = vmatprep.subr.mxu0 0.0
    %1082 = vmatpush1.msra.mxu0 0.0
    %1083 = vmatprep.subr.mxu0 0.0
    %1084 = vmatpush1.msra.mxu0 0.0
    %1085 = vmatprep.subr.mxu0 0.0
    %1086 = vmatpush1.msra.mxu0 0.0
    %1087 = vmatprep.subr.mxu0 0.0
    %1088 = vmatpush1.msra.mxu0 0.0
    %1089 = vmatprep.subr.mxu0 0.0
    %1090 = vmatpush1.msra.mxu0 0.0
    %1091 = vmatprep.subr.mxu0 0.0
    %1092 = vmatpush1.msra.mxu0 0.0
    %1093 = vmatprep.subr.mxu0 0.0
    %1094 = vmatpush1.msra.mxu0 0.0
    %1095 = vmatprep.mubr.f32.mxu0 0.0
    %v1096 = vand.u32 %v867, 4294901760
    %v1097 = vsub.f32 %v867, %v1096
    %1098 = vmatmul.mubr.f32.gmra.mrb[0].mxu0 %v1097
    %v1099 = vpop.f32.mrb[0].mxu0
    %v1100 = vadd.f32 %v1024, %v1099
    %v1101 = vpop.f32.mrb[0].mxu0
    %1102 = vdwg.mxu0
    %1103 = vmatprep.subr.mxu0 0.0
    %v1104 = vand.u32 %v483, 4294901760
    %1105 = vmatpush1.msra.mxu0 %v1104
    %1106 = vmatprep.subr.mxu0 0.0
    %v1107 = vand.u32 %v484, 4294901760
    %1108 = vmatpush1.msra.mxu0 %v1107
    %1109 = vmatprep.subr.mxu0 0.0
    %1110 = vmatpush1.msra.mxu0 0.0
    %1111 = vmatprep.subr.mxu0 0.0
    %1112 = vmatpush1.msra.mxu0 0.0
    %1113 = vmatprep.subr.mxu0 0.0
    %1114 = vmatpush1.msra.mxu0 0.0
    %1115 = vmatprep.subr.mxu0 0.0
    %1116 = vmatpush1.msra.mxu0 0.0
    %1117 = vmatprep.subr.mxu0 0.0
    %1118 = vmatpush1.msra.mxu0 0.0
    %1119 = vmatprep.subr.mxu0 0.0
    %1120 = vmatpush1.msra.mxu0 0.0
    %1121 = vmatprep.subr.mxu0 0.0
    %1122 = vmatpush1.msra.mxu0 0.0
    %1123 = vmatprep.subr.mxu0 0.0
    %1124 = vmatpush1.msra.mxu0 0.0
    %1125 = vmatprep.subr.mxu0 0.0
    %1126 = vmatpush1.msra.mxu0 0.0
    %1127 = vmatprep.subr.mxu0 0.0
    %1128 = vmatpush1.msra.mxu0 0.0
    %1129 = vmatprep.subr.mxu0 0.0
    %1130 = vmatpush1.msra.mxu0 0.0
    %1131 = vmatprep.subr.mxu0 0.0
    %1132 = vmatpush1.msra.mxu0 0.0
    %1133 = vmatprep.subr.mxu0 0.0
    %1134 = vmatpush1.msra.mxu0 0.0
    %1135 = vmatprep.subr.mxu0 0.0
    %1136 = vmatpush1.msra.mxu0 0.0
    %1137 = vmatprep.subr.mxu0 0.0
    %1138 = vmatpush1.msra.mxu0 0.0
    %1139 = vmatprep.subr.mxu0 0.0
    %1140 = vmatpush1.msra.mxu0 0.0
    %1141 = vmatprep.subr.mxu0 0.0
    %1142 = vmatpush1.msra.mxu0 0.0
    %1143 = vmatprep.subr.mxu0 0.0
    %1144 = vmatpush1.msra.mxu0 0.0
    %1145 = vmatprep.subr.mxu0 0.0
    %1146 = vmatpush1.msra.mxu0 0.0
    %1147 = vmatprep.subr.mxu0 0.0
    %1148 = vmatpush1.msra.mxu0 0.0
    %1149 = vmatprep.subr.mxu0 0.0
    %1150 = vmatpush1.msra.mxu0 0.0
    %1151 = vmatprep.subr.mxu0 0.0
    %1152 = vmatpush1.msra.mxu0 0.0
    %1153 = vmatprep.subr.mxu0 0.0
    %1154 = vmatpush1.msra.mxu0 0.0
    %1155 = vmatprep.subr.mxu0 0.0
    %1156 = vmatpush1.msra.mxu0 0.0
    %1157 = vmatprep.subr.mxu0 0.0
    %1158 = vmatpush1.msra.mxu0 0.0
    %1159 = vmatprep.subr.mxu0 0.0
    %1160 = vmatpush1.msra.mxu0 0.0
    %1161 = vmatprep.subr.mxu0 0.0
    %1162 = vmatpush1.msra.mxu0 0.0
    %1163 = vmatprep.subr.mxu0 0.0
    %1164 = vmatpush1.msra.mxu0 0.0
    %1165 = vmatprep.subr.mxu0 0.0
    %1166 = vmatpush1.msra.mxu0 0.0
    %1167 = vmatprep.subr.mxu0 0.0
    %1168 = vmatpush1.msra.mxu0 0.0
    %1169 = vmatprep.mubr.f32.mxu0 0.0
    %v1170 = vand.u32 %v867, 4294901760
    %v1171 = vsub.f32 %v867, %v1170
    %v1172 = vand.u32 %v1171, 4294901760
    %1173 = vmatmul.mubr.f32.gmra.mrb[0].mxu0 %v1172
    %v1174 = vpop.f32.mrb[0].mxu0
    %v1175 = vadd.f32 %v1100, %v1174
    %v1176 = vpop.f32.mrb[0].mxu0
    %1177 = vdwg.mxu0
    %1178 = vmatprep.subr.mxu0 0.0
    %v1179 = vand.u32 %v483, 4294901760
    %v1180 = vsub.f32 %v483, %v1179
    %v1181 = vand.u32 %v1180, 4294901760
    %1182 = vmatpush1.msra.mxu0 %v1181
    %1183 = vmatprep.subr.mxu0 0.0
    %v1184 = vand.u32 %v484, 4294901760
    %v1185 = vsub.f32 %v484, %v1184
    %v1186 = vand.u32 %v1185, 4294901760
    %1187 = vmatpush1.msra.mxu0 %v1186
    %1188 = vmatprep.subr.mxu0 0.0
    %1189 = vmatpush1.msra.mxu0 0.0
    %1190 = vmatprep.subr.mxu0 0.0
    %1191 = vmatpush1.msra.mxu0 0.0
    %1192 = vmatprep.subr.mxu0 0.0
    %1193 = vmatpush1.msra.mxu0 0.0
    %1194 = vmatprep.subr.mxu0 0.0
    %1195 = vmatpush1.msra.mxu0 0.0
    %1196 = vmatprep.subr.mxu0 0.0
    %1197 = vmatpush1.msra.mxu0 0.0
    %1198 = vmatprep.subr.mxu0 0.0
    %1199 = vmatpush1.msra.mxu0 0.0
    %1200 = vmatprep.subr.mxu0 0.0
    %1201 = vmatpush1.msra.mxu0 0.0
    %1202 = vmatprep.subr.mxu0 0.0
    %1203 = vmatpush1.msra.mxu0 0.0
    %1204 = vmatprep.subr.mxu0 0.0
    %1205 = vmatpush1.msra.mxu0 0.0
    %1206 = vmatprep.subr.mxu0 0.0
    %1207 = vmatpush1.msra.mxu0 0.0
    %1208 = vmatprep.subr.mxu0 0.0
    %1209 = vmatpush1.msra.mxu0 0.0
    %1210 = vmatprep.subr.mxu0 0.0
    %1211 = vmatpush1.msra.mxu0 0.0
    %1212 = vmatprep.subr.mxu0 0.0
    %1213 = vmatpush1.msra.mxu0 0.0
    %1214 = vmatprep.subr.mxu0 0.0
    %1215 = vmatpush1.msra.mxu0 0.0
    %1216 = vmatprep.subr.mxu0 0.0
    %1217 = vmatpush1.msra.mxu0 0.0
    %1218 = vmatprep.subr.mxu0 0.0
    %1219 = vmatpush1.msra.mxu0 0.0
    %1220 = vmatprep.subr.mxu0 0.0
    %1221 = vmatpush1.msra.mxu0 0.0
    %1222 = vmatprep.subr.mxu0 0.0
    %1223 = vmatpush1.msra.mxu0 0.0
    %1224 = vmatprep.subr.mxu0 0.0
    %1225 = vmatpush1.msra.mxu0 0.0
    %1226 = vmatprep.subr.mxu0 0.0
    %1227 = vmatpush1.msra.mxu0 0.0
    %1228 = vmatprep.subr.mxu0 0.0
    %1229 = vmatpush1.msra.mxu0 0.0
    %1230 = vmatprep.subr.mxu0 0.0
    %1231 = vmatpush1.msra.mxu0 0.0
    %1232 = vmatprep.subr.mxu0 0.0
    %1233 = vmatpush1.msra.mxu0 0.0
    %1234 = vmatprep.subr.mxu0 0.0
    %1235 = vmatpush1.msra.mxu0 0.0
    %1236 = vmatprep.subr.mxu0 0.0
    %1237 = vmatpush1.msra.mxu0 0.0
    %1238 = vmatprep.subr.mxu0 0.0
    %1239 = vmatpush1.msra.mxu0 0.0
    %1240 = vmatprep.subr.mxu0 0.0
    %1241 = vmatpush1.msra.mxu0 0.0
    %1242 = vmatprep.subr.mxu0 0.0
    %1243 = vmatpush1.msra.mxu0 0.0
    %1244 = vmatprep.subr.mxu0 0.0
    %1245 = vmatpush1.msra.mxu0 0.0
    %1246 = vmatprep.subr.mxu0 0.0
    %1247 = vmatpush1.msra.mxu0 0.0
    %1248 = vmatprep.mubr.f32.mxu0 0.0
    %v1249 = vand.u32 %v867, 4294901760
    %1250 = vmatmul.mubr.f32.gmra.mrb[0].mxu0 %v1249
    %v1251 = vpop.f32.mrb[0].mxu0
    %v1252 = vadd.f32 %v1175, %v1251
    %v1253 = vpop.f32.mrb[0].mxu0
    %1254 = vdwg.mxu0
    %1255 = vmatprep.subr.mxu0 0.0
    %v1256 = vand.u32 %v483, 4294901760
    %1257 = vmatpush1.msra.mxu0 %v1256
    %1258 = vmatprep.subr.mxu0 0.0
    %v1259 = vand.u32 %v484, 4294901760
    %1260 = vmatpush1.msra.mxu0 %v1259
    %1261 = vmatprep.subr.mxu0 0.0
    %1262 = vmatpush1.msra.mxu0 0.0
    %1263 = vmatprep.subr.mxu0 0.0
    %1264 = vmatpush1.msra.mxu0 0.0
    %1265 = vmatprep.subr.mxu0 0.0
    %1266 = vmatpush1.msra.mxu0 0.0
    %1267 = vmatprep.subr.mxu0 0.0
    %1268 = vmatpush1.msra.mxu0 0.0
    %1269 = vmatprep.subr.mxu0 0.0
    %1270 = vmatpush1.msra.mxu0 0.0
    %1271 = vmatprep.subr.mxu0 0.0
    %1272 = vmatpush1.msra.mxu0 0.0
    %1273 = vmatprep.subr.mxu0 0.0
    %1274 = vmatpush1.msra.mxu0 0.0
    %1275 = vmatprep.subr.mxu0 0.0
    %1276 = vmatpush1.msra.mxu0 0.0
    %1277 = vmatprep.subr.mxu0 0.0
    %1278 = vmatpush1.msra.mxu0 0.0
    %1279 = vmatprep.subr.mxu0 0.0
    %1280 = vmatpush1.msra.mxu0 0.0
    %1281 = vmatprep.subr.mxu0 0.0
    %1282 = vmatpush1.msra.mxu0 0.0
    %1283 = vmatprep.subr.mxu0 0.0
    %1284 = vmatpush1.msra.mxu0 0.0
    %1285 = vmatprep.subr.mxu0 0.0
    %1286 = vmatpush1.msra.mxu0 0.0
    %1287 = vmatprep.subr.mxu0 0.0
    %1288 = vmatpush1.msra.mxu0 0.0
    %1289 = vmatprep.subr.mxu0 0.0
    %1290 = vmatpush1.msra.mxu0 0.0
    %1291 = vmatprep.subr.mxu0 0.0
    %1292 = vmatpush1.msra.mxu0 0.0
    %1293 = vmatprep.subr.mxu0 0.0
    %1294 = vmatpush1.msra.mxu0 0.0
    %1295 = vmatprep.subr.mxu0 0.0
    %1296 = vmatpush1.msra.mxu0 0.0
    %1297 = vmatprep.subr.mxu0 0.0
    %1298 = vmatpush1.msra.mxu0 0.0
    %1299 = vmatprep.subr.mxu0 0.0
    %1300 = vmatpush1.msra.mxu0 0.0
    %1301 = vmatprep.subr.mxu0 0.0
    %1302 = vmatpush1.msra.mxu0 0.0
    %1303 = vmatprep.subr.mxu0 0.0
    %1304 = vmatpush1.msra.mxu0 0.0
    %1305 = vmatprep.subr.mxu0 0.0
    %1306 = vmatpush1.msra.mxu0 0.0
    %1307 = vmatprep.subr.mxu0 0.0
    %1308 = vmatpush1.msra.mxu0 0.0
    %1309 = vmatprep.subr.mxu0 0.0
    %1310 = vmatpush1.msra.mxu0 0.0
    %1311 = vmatprep.subr.mxu0 0.0
    %1312 = vmatpush1.msra.mxu0 0.0
    %1313 = vmatprep.subr.mxu0 0.0
    %1314 = vmatpush1.msra.mxu0 0.0
    %1315 = vmatprep.subr.mxu0 0.0
    %1316 = vmatpush1.msra.mxu0 0.0
    %1317 = vmatprep.subr.mxu0 0.0
    %1318 = vmatpush1.msra.mxu0 0.0
    %1319 = vmatprep.subr.mxu0 0.0
    %1320 = vmatpush1.msra.mxu0 0.0
    %1321 = vmatprep.mubr.f32.mxu0 0.0
    %v1322 = vand.u32 %v867, 4294901760
    %1323 = vmatmul.mubr.f32.gmra.mrb[0].mxu0 %v1322
    %v1324 = vpop.f32.mrb[0].mxu0
    %v1325 = vadd.f32 %v1252, %v1324
    %v1326 = vpop.f32.mrb[0].mxu0
    %1327 = vdwg.mxu0
    %1328 = vadd.xlane.f32.xlu0 %v1325
    %v1329 = vpop.xlane.xlu0 %1328
    %v1330 = vrot.slane %v1329, 4
    %v1331 = vadd.f32 %v1329, %v1330
    %v1332 = vrot.slane %v1331, 2
    %v1333 = vadd.f32 %v1331, %v1332
    %v1334 = vrot.slane %v1333, 1
    %v1335 = vadd.f32 %v1333, %v1334
    %v1336 = vmul.f32 %v1335, 0.125
    %1337 = vmatprep.subr.mxu0 0.0
    %v1338 = vand.u32 %v491, 4294901760
    %1339 = vmatpush1.msra.mxu0 %v1338
    %1340 = vmatprep.subr.mxu0 0.0
    %v1341 = vand.u32 %v492, 4294901760
    %1342 = vmatpush1.msra.mxu0 %v1341
    %1343 = vmatprep.subr.mxu0 0.0
    %1344 = vmatpush1.msra.mxu0 0.0
    %1345 = vmatprep.subr.mxu0 0.0
    %1346 = vmatpush1.msra.mxu0 0.0
    %1347 = vmatprep.subr.mxu0 0.0
    %1348 = vmatpush1.msra.mxu0 0.0
    %1349 = vmatprep.subr.mxu0 0.0
    %1350 = vmatpush1.msra.mxu0 0.0
    %1351 = vmatprep.subr.mxu0 0.0
    %1352 = vmatpush1.msra.mxu0 0.0
    %1353 = vmatprep.subr.mxu0 0.0
    %1354 = vmatpush1.msra.mxu0 0.0
    %1355 = vmatprep.subr.mxu0 0.0
    %1356 = vmatpush1.msra.mxu0 0.0
    %1357 = vmatprep.subr.mxu0 0.0
    %1358 = vmatpush1.msra.mxu0 0.0
    %1359 = vmatprep.subr.mxu0 0.0
    %1360 = vmatpush1.msra.mxu0 0.0
    %1361 = vmatprep.subr.mxu0 0.0
    %1362 = vmatpush1.msra.mxu0 0.0
    %1363 = vmatprep.subr.mxu0 0.0
    %1364 = vmatpush1.msra.mxu0 0.0
    %1365 = vmatprep.subr.mxu0 0.0
    %1366 = vmatpush1.msra.mxu0 0.0
    %1367 = vmatprep.subr.mxu0 0.0
    %1368 = vmatpush1.msra.mxu0 0.0
    %1369 = vmatprep.subr.mxu0 0.0
    %1370 = vmatpush1.msra.mxu0 0.0
    %1371 = vmatprep.subr.mxu0 0.0
    %1372 = vmatpush1.msra.mxu0 0.0
    %1373 = vmatprep.subr.mxu0 0.0
    %1374 = vmatpush1.msra.mxu0 0.0
    %1375 = vmatprep.subr.mxu0 0.0
    %1376 = vmatpush1.msra.mxu0 0.0
    %1377 = vmatprep.subr.mxu0 0.0
    %1378 = vmatpush1.msra.mxu0 0.0
    %1379 = vmatprep.subr.mxu0 0.0
    %1380 = vmatpush1.msra.mxu0 0.0
    %1381 = vmatprep.subr.mxu0 0.0
    %1382 = vmatpush1.msra.mxu0 0.0
    %1383 = vmatprep.subr.mxu0 0.0
    %1384 = vmatpush1.msra.mxu0 0.0
    %1385 = vmatprep.subr.mxu0 0.0
    %1386 = vmatpush1.msra.mxu0 0.0
    %1387 = vmatprep.subr.mxu0 0.0
    %1388 = vmatpush1.msra.mxu0 0.0
    %1389 = vmatprep.subr.mxu0 0.0
    %1390 = vmatpush1.msra.mxu0 0.0
    %1391 = vmatprep.subr.mxu0 0.0
    %1392 = vmatpush1.msra.mxu0 0.0
    %1393 = vmatprep.subr.mxu0 0.0
    %1394 = vmatpush1.msra.mxu0 0.0
    %1395 = vmatprep.subr.mxu0 0.0
    %1396 = vmatpush1.msra.mxu0 0.0
    %1397 = vmatprep.subr.mxu0 0.0
    %1398 = vmatpush1.msra.mxu0 0.0
    %1399 = vmatprep.subr.mxu0 0.0
    %1400 = vmatpush1.msra.mxu0 0.0
    %1401 = vmatprep.subr.mxu0 0.0
    %1402 = vmatpush1.msra.mxu0 0.0
    %1403 = vmatprep.mubr.f32.mxu0 0.0
    %v1404 = vand.u32 %v867, 4294901760
    %v1405 = vsub.f32 %v867, %v1404
    %v1406 = vand.u32 %v1405, 4294901760
    %v1407 = vsub.f32 %v1405, %v1406
    %v1408 = vand.u32 %v1407, 4294901760
    %1409 = vmatmul.mubr.f32.gmra.mrb[0].mxu0 %v1408
    %v1410 = vpop.f32.mrb[0].mxu0
    %v1411 = vadd.f32 0.0, %v1410
    %v1412 = vpop.f32.mrb[0].mxu0
    %1413 = vdwg.mxu0
    %1414 = vmatprep.subr.mxu0 0.0
    %v1415 = vand.u32 %v491, 4294901760
    %v1416 = vsub.f32 %v491, %v1415
    %v1417 = vand.u32 %v1416, 4294901760
    %v1418 = vsub.f32 %v1416, %v1417
    %v1419 = vand.u32 %v1418, 4294901760
    %1420 = vmatpush1.msra.mxu0 %v1419
    %1421 = vmatprep.subr.mxu0 0.0
    %v1422 = vand.u32 %v492, 4294901760
    %v1423 = vsub.f32 %v492, %v1422
    %v1424 = vand.u32 %v1423, 4294901760
    %v1425 = vsub.f32 %v1423, %v1424
    %v1426 = vand.u32 %v1425, 4294901760
    %1427 = vmatpush1.msra.mxu0 %v1426
    %1428 = vmatprep.subr.mxu0 0.0
    %1429 = vmatpush1.msra.mxu0 0.0
    %1430 = vmatprep.subr.mxu0 0.0
    %1431 = vmatpush1.msra.mxu0 0.0
    %1432 = vmatprep.subr.mxu0 0.0
    %1433 = vmatpush1.msra.mxu0 0.0
    %1434 = vmatprep.subr.mxu0 0.0
    %1435 = vmatpush1.msra.mxu0 0.0
    %1436 = vmatprep.subr.mxu0 0.0
    %1437 = vmatpush1.msra.mxu0 0.0
    %1438 = vmatprep.subr.mxu0 0.0
    %1439 = vmatpush1.msra.mxu0 0.0
    %1440 = vmatprep.subr.mxu0 0.0
    %1441 = vmatpush1.msra.mxu0 0.0
    %1442 = vmatprep.subr.mxu0 0.0
    %1443 = vmatpush1.msra.mxu0 0.0
    %1444 = vmatprep.subr.mxu0 0.0
    %1445 = vmatpush1.msra.mxu0 0.0
    %1446 = vmatprep.subr.mxu0 0.0
    %1447 = vmatpush1.msra.mxu0 0.0
    %1448 = vmatprep.subr.mxu0 0.0
    %1449 = vmatpush1.msra.mxu0 0.0
    %1450 = vmatprep.subr.mxu0 0.0
    %1451 = vmatpush1.msra.mxu0 0.0
    %1452 = vmatprep.subr.mxu0 0.0
    %1453 = vmatpush1.msra.mxu0 0.0
    %1454 = vmatprep.subr.mxu0 0.0
    %1455 = vmatpush1.msra.mxu0 0.0
    %1456 = vmatprep.subr.mxu0 0.0
    %1457 = vmatpush1.msra.mxu0 0.0
    %1458 = vmatprep.subr.mxu0 0.0
    %1459 = vmatpush1.msra.mxu0 0.0
    %1460 = vmatprep.subr.mxu0 0.0
    %1461 = vmatpush1.msra.mxu0 0.0
    %1462 = vmatprep.subr.mxu0 0.0
    %1463 = vmatpush1.msra.mxu0 0.0
    %1464 = vmatprep.subr.mxu0 0.0
    %1465 = vmatpush1.msra.mxu0 0.0
    %1466 = vmatprep.subr.mxu0 0.0
    %1467 = vmatpush1.msra.mxu0 0.0
    %1468 = vmatprep.subr.mxu0 0.0
    %1469 = vmatpush1.msra.mxu0 0.0
    %1470 = vmatprep.subr.mxu0 0.0
    %1471 = vmatpush1.msra.mxu0 0.0
    %1472 = vmatprep.subr.mxu0 0.0
    %1473 = vmatpush1.msra.mxu0 0.0
    %1474 = vmatprep.subr.mxu0 0.0
    %1475 = vmatpush1.msra.mxu0 0.0
    %1476 = vmatprep.subr.mxu0 0.0
    %1477 = vmatpush1.msra.mxu0 0.0
    %1478 = vmatprep.subr.mxu0 0.0
    %1479 = vmatpush1.msra.mxu0 0.0
    %1480 = vmatprep.subr.mxu0 0.0
    %1481 = vmatpush1.msra.mxu0 0.0
    %1482 = vmatprep.subr.mxu0 0.0
    %1483 = vmatpush1.msra.mxu0 0.0
    %1484 = vmatprep.subr.mxu0 0.0
    %1485 = vmatpush1.msra.mxu0 0.0
    %1486 = vmatprep.subr.mxu0 0.0
    %1487 = vmatpush1.msra.mxu0 0.0
    %1488 = vmatprep.mubr.f32.mxu0 0.0
    %v1489 = vand.u32 %v867, 4294901760
    %1490 = vmatmul.mubr.f32.gmra.mrb[0].mxu0 %v1489
    %v1491 = vpop.f32.mrb[0].mxu0
    %v1492 = vadd.f32 %v1411, %v1491
    %v1493 = vpop.f32.mrb[0].mxu0
    %1494 = vdwg.mxu0
    %1495 = vmatprep.subr.mxu0 0.0
    %v1496 = vand.u32 %v491, 4294901760
    %v1497 = vsub.f32 %v491, %v1496
    %1498 = vmatpush1.msra.mxu0 %v1497
    %1499 = vmatprep.subr.mxu0 0.0
    %v1500 = vand.u32 %v492, 4294901760
    %v1501 = vsub.f32 %v492, %v1500
    %1502 = vmatpush1.msra.mxu0 %v1501
    %1503 = vmatprep.subr.mxu0 0.0
    %1504 = vmatpush1.msra.mxu0 0.0
    %1505 = vmatprep.subr.mxu0 0.0
    %1506 = vmatpush1.msra.mxu0 0.0
    %1507 = vmatprep.subr.mxu0 0.0
    %1508 = vmatpush1.msra.mxu0 0.0
    %1509 = vmatprep.subr.mxu0 0.0
    %1510 = vmatpush1.msra.mxu0 0.0
    %1511 = vmatprep.subr.mxu0 0.0
    %1512 = vmatpush1.msra.mxu0 0.0
    %1513 = vmatprep.subr.mxu0 0.0
    %1514 = vmatpush1.msra.mxu0 0.0
    %1515 = vmatprep.subr.mxu0 0.0
    %1516 = vmatpush1.msra.mxu0 0.0
    %1517 = vmatprep.subr.mxu0 0.0
    %1518 = vmatpush1.msra.mxu0 0.0
    %1519 = vmatprep.subr.mxu0 0.0
    %1520 = vmatpush1.msra.mxu0 0.0
    %1521 = vmatprep.subr.mxu0 0.0
    %1522 = vmatpush1.msra.mxu0 0.0
    %1523 = vmatprep.subr.mxu0 0.0
    %1524 = vmatpush1.msra.mxu0 0.0
    %1525 = vmatprep.subr.mxu0 0.0
    %1526 = vmatpush1.msra.mxu0 0.0
    %1527 = vmatprep.subr.mxu0 0.0
    %1528 = vmatpush1.msra.mxu0 0.0
    %1529 = vmatprep.subr.mxu0 0.0
    %1530 = vmatpush1.msra.mxu0 0.0
    %1531 = vmatprep.subr.mxu0 0.0
    %1532 = vmatpush1.msra.mxu0 0.0
    %1533 = vmatprep.subr.mxu0 0.0
    %1534 = vmatpush1.msra.mxu0 0.0
    %1535 = vmatprep.subr.mxu0 0.0
    %1536 = vmatpush1.msra.mxu0 0.0
    %1537 = vmatprep.subr.mxu0 0.0
    %1538 = vmatpush1.msra.mxu0 0.0
    %1539 = vmatprep.subr.mxu0 0.0
    %1540 = vmatpush1.msra.mxu0 0.0
    %1541 = vmatprep.subr.mxu0 0.0
    %1542 = vmatpush1.msra.mxu0 0.0
    %1543 = vmatprep.subr.mxu0 0.0
    %1544 = vmatpush1.msra.mxu0 0.0
    %1545 = vmatprep.subr.mxu0 0.0
    %1546 = vmatpush1.msra.mxu0 0.0
    %1547 = vmatprep.subr.mxu0 0.0
    %1548 = vmatpush1.msra.mxu0 0.0
    %1549 = vmatprep.subr.mxu0 0.0
    %1550 = vmatpush1.msra.mxu0 0.0
    %1551 = vmatprep.subr.mxu0 0.0
    %1552 = vmatpush1.msra.mxu0 0.0
    %1553 = vmatprep.subr.mxu0 0.0
    %1554 = vmatpush1.msra.mxu0 0.0
    %1555 = vmatprep.subr.mxu0 0.0
    %1556 = vmatpush1.msra.mxu0 0.0
    %1557 = vmatprep.subr.mxu0 0.0
    %1558 = vmatpush1.msra.mxu0 0.0
    %1559 = vmatprep.subr.mxu0 0.0
    %1560 = vmatpush1.msra.mxu0 0.0
    %1561 = vmatprep.subr.mxu0 0.0
    %1562 = vmatpush1.msra.mxu0 0.0
    %1563 = vmatprep.mubr.f32.mxu0 0.0
    %v1564 = vand.u32 %v867, 4294901760
    %v1565 = vsub.f32 %v867, %v1564
    %1566 = vmatmul.mubr.f32.gmra.mrb[0].mxu0 %v1565
    %v1567 = vpop.f32.mrb[0].mxu0
    %v1568 = vadd.f32 %v1492, %v1567
    %v1569 = vpop.f32.mrb[0].mxu0
    %1570 = vdwg.mxu0
    %1571 = vmatprep.subr.mxu0 0.0
    %v1572 = vand.u32 %v491, 4294901760
    %1573 = vmatpush1.msra.mxu0 %v1572
    %1574 = vmatprep.subr.mxu0 0.0
    %v1575 = vand.u32 %v492, 4294901760
    %1576 = vmatpush1.msra.mxu0 %v1575
    %1577 = vmatprep.subr.mxu0 0.0
    %1578 = vmatpush1.msra.mxu0 0.0
    %1579 = vmatprep.subr.mxu0 0.0
    %1580 = vmatpush1.msra.mxu0 0.0
    %1581 = vmatprep.subr.mxu0 0.0
    %1582 = vmatpush1.msra.mxu0 0.0
    %1583 = vmatprep.subr.mxu0 0.0
    %1584 = vmatpush1.msra.mxu0 0.0
    %1585 = vmatprep.subr.mxu0 0.0
    %1586 = vmatpush1.msra.mxu0 0.0
    %1587 = vmatprep.subr.mxu0 0.0
    %1588 = vmatpush1.msra.mxu0 0.0
    %1589 = vmatprep.subr.mxu0 0.0
    %1590 = vmatpush1.msra.mxu0 0.0
    %1591 = vmatprep.subr.mxu0 0.0
    %1592 = vmatpush1.msra.mxu0 0.0
    %1593 = vmatprep.subr.mxu0 0.0
    %1594 = vmatpush1.msra.mxu0 0.0
    %1595 = vmatprep.subr.mxu0 0.0
    %1596 = vmatpush1.msra.mxu0 0.0
    %1597 = vmatprep.subr.mxu0 0.0
    %1598 = vmatpush1.msra.mxu0 0.0
    %1599 = vmatprep.subr.mxu0 0.0
    %1600 = vmatpush1.msra.mxu0 0.0
    %1601 = vmatprep.subr.mxu0 0.0
    %1602 = vmatpush1.msra.mxu0 0.0
    %1603 = vmatprep.subr.mxu0 0.0
    %1604 = vmatpush1.msra.mxu0 0.0
    %1605 = vmatprep.subr.mxu0 0.0
    %1606 = vmatpush1.msra.mxu0 0.0
    %1607 = vmatprep.subr.mxu0 0.0
    %1608 = vmatpush1.msra.mxu0 0.0
    %1609 = vmatprep.subr.mxu0 0.0
    %1610 = vmatpush1.msra.mxu0 0.0
    %1611 = vmatprep.subr.mxu0 0.0
    %1612 = vmatpush1.msra.mxu0 0.0
    %1613 = vmatprep.subr.mxu0 0.0
    %1614 = vmatpush1.msra.mxu0 0.0
    %1615 = vmatprep.subr.mxu0 0.0
    %1616 = vmatpush1.msra.mxu0 0.0
    %1617 = vmatprep.subr.mxu0 0.0
    %1618 = vmatpush1.msra.mxu0 0.0
    %1619 = vmatprep.subr.mxu0 0.0
    %1620 = vmatpush1.msra.mxu0 0.0
    %1621 = vmatprep.subr.mxu0 0.0
    %1622 = vmatpush1.msra.mxu0 0.0
    %1623 = vmatprep.subr.mxu0 0.0
    %1624 = vmatpush1.msra.mxu0 0.0
    %1625 = vmatprep.subr.mxu0 0.0
    %1626 = vmatpush1.msra.mxu0 0.0
    %1627 = vmatprep.subr.mxu0 0.0
    %1628 = vmatpush1.msra.mxu0 0.0
    %1629 = vmatprep.subr.mxu0 0.0
    %1630 = vmatpush1.msra.mxu0 0.0
    %1631 = vmatprep.subr.mxu0 0.0
    %1632 = vmatpush1.msra.mxu0 0.0
    %1633 = vmatprep.subr.mxu0 0.0
    %1634 = vmatpush1.msra.mxu0 0.0
    %1635 = vmatprep.subr.mxu0 0.0
    %1636 = vmatpush1.msra.mxu0 0.0
    %1637 = vmatprep.mubr.f32.mxu0 0.0
    %v1638 = vand.u32 %v867, 4294901760
    %v1639 = vsub.f32 %v867, %v1638
    %v1640 = vand.u32 %v1639, 4294901760
    %1641 = vmatmul.mubr.f32.gmra.mrb[0].mxu0 %v1640
    %v1642 = vpop.f32.mrb[0].mxu0
    %v1643 = vadd.f32 %v1568, %v1642
    %v1644 = vpop.f32.mrb[0].mxu0
    %1645 = vdwg.mxu0
    %1646 = vmatprep.subr.mxu0 0.0
    %v1647 = vand.u32 %v491, 4294901760
    %v1648 = vsub.f32 %v491, %v1647
    %v1649 = vand.u32 %v1648, 4294901760
    %1650 = vmatpush1.msra.mxu0 %v1649
    %1651 = vmatprep.subr.mxu0 0.0
    %v1652 = vand.u32 %v492, 4294901760
    %v1653 = vsub.f32 %v492, %v1652
    %v1654 = vand.u32 %v1653, 4294901760
    %1655 = vmatpush1.msra.mxu0 %v1654
    %1656 = vmatprep.subr.mxu0 0.0
    %1657 = vmatpush1.msra.mxu0 0.0
    %1658 = vmatprep.subr.mxu0 0.0
    %1659 = vmatpush1.msra.mxu0 0.0
    %1660 = vmatprep.subr.mxu0 0.0
    %1661 = vmatpush1.msra.mxu0 0.0
    %1662 = vmatprep.subr.mxu0 0.0
    %1663 = vmatpush1.msra.mxu0 0.0
    %1664 = vmatprep.subr.mxu0 0.0
    %1665 = vmatpush1.msra.mxu0 0.0
    %1666 = vmatprep.subr.mxu0 0.0
    %1667 = vmatpush1.msra.mxu0 0.0
    %1668 = vmatprep.subr.mxu0 0.0
    %1669 = vmatpush1.msra.mxu0 0.0
    %1670 = vmatprep.subr.mxu0 0.0
    %1671 = vmatpush1.msra.mxu0 0.0
    %1672 = vmatprep.subr.mxu0 0.0
    %1673 = vmatpush1.msra.mxu0 0.0
    %1674 = vmatprep.subr.mxu0 0.0
    %1675 = vmatpush1.msra.mxu0 0.0
    %1676 = vmatprep.subr.mxu0 0.0
    %1677 = vmatpush1.msra.mxu0 0.0
    %1678 = vmatprep.subr.mxu0 0.0
    %1679 = vmatpush1.msra.mxu0 0.0
    %1680 = vmatprep.subr.mxu0 0.0
    %1681 = vmatpush1.msra.mxu0 0.0
    %1682 = vmatprep.subr.mxu0 0.0
    %1683 = vmatpush1.msra.mxu0 0.0
    %1684 = vmatprep.subr.mxu0 0.0
    %1685 = vmatpush1.msra.mxu0 0.0
    %1686 = vmatprep.subr.mxu0 0.0
    %1687 = vmatpush1.msra.mxu0 0.0
    %1688 = vmatprep.subr.mxu0 0.0
    %1689 = vmatpush1.msra.mxu0 0.0
    %1690 = vmatprep.subr.mxu0 0.0
    %1691 = vmatpush1.msra.mxu0 0.0
    %1692 = vmatprep.subr.mxu0 0.0
    %1693 = vmatpush1.msra.mxu0 0.0
    %1694 = vmatprep.subr.mxu0 0.0
    %1695 = vmatpush1.msra.mxu0 0.0
    %1696 = vmatprep.subr.mxu0 0.0
    %1697 = vmatpush1.msra.mxu0 0.0
    %1698 = vmatprep.subr.mxu0 0.0
    %1699 = vmatpush1.msra.mxu0 0.0
    %1700 = vmatprep.subr.mxu0 0.0
    %1701 = vmatpush1.msra.mxu0 0.0
    %1702 = vmatprep.subr.mxu0 0.0
    %1703 = vmatpush1.msra.mxu0 0.0
    %1704 = vmatprep.subr.mxu0 0.0
    %1705 = vmatpush1.msra.mxu0 0.0
    %1706 = vmatprep.subr.mxu0 0.0
    %1707 = vmatpush1.msra.mxu0 0.0
    %1708 = vmatprep.subr.mxu0 0.0
    %1709 = vmatpush1.msra.mxu0 0.0
    %1710 = vmatprep.subr.mxu0 0.0
    %1711 = vmatpush1.msra.mxu0 0.0
    %1712 = vmatprep.subr.mxu0 0.0
    %1713 = vmatpush1.msra.mxu0 0.0
    %1714 = vmatprep.subr.mxu0 0.0
    %1715 = vmatpush1.msra.mxu0 0.0
    %1716 = vmatprep.mubr.f32.mxu0 0.0
    %v1717 = vand.u32 %v867, 4294901760
    %1718 = vmatmul.mubr.f32.gmra.mrb[0].mxu0 %v1717
    %v1719 = vpop.f32.mrb[0].mxu0
    %v1720 = vadd.f32 %v1643, %v1719
    %v1721 = vpop.f32.mrb[0].mxu0
    %1722 = vdwg.mxu0
    %1723 = vmatprep.subr.mxu0 0.0
    %v1724 = vand.u32 %v491, 4294901760
    %1725 = vmatpush1.msra.mxu0 %v1724
    %1726 = vmatprep.subr.mxu0 0.0
    %v1727 = vand.u32 %v492, 4294901760
    %1728 = vmatpush1.msra.mxu0 %v1727
    %1729 = vmatprep.subr.mxu0 0.0
    %1730 = vmatpush1.msra.mxu0 0.0
    %1731 = vmatprep.subr.mxu0 0.0
    %1732 = vmatpush1.msra.mxu0 0.0
    %1733 = vmatprep.subr.mxu0 0.0
    %1734 = vmatpush1.msra.mxu0 0.0
    %1735 = vmatprep.subr.mxu0 0.0
    %1736 = vmatpush1.msra.mxu0 0.0
    %1737 = vmatprep.subr.mxu0 0.0
    %1738 = vmatpush1.msra.mxu0 0.0
    %1739 = vmatprep.subr.mxu0 0.0
    %1740 = vmatpush1.msra.mxu0 0.0
    %1741 = vmatprep.subr.mxu0 0.0
    %1742 = vmatpush1.msra.mxu0 0.0
    %1743 = vmatprep.subr.mxu0 0.0
    %1744 = vmatpush1.msra.mxu0 0.0
    %1745 = vmatprep.subr.mxu0 0.0
    %1746 = vmatpush1.msra.mxu0 0.0
    %1747 = vmatprep.subr.mxu0 0.0
    %1748 = vmatpush1.msra.mxu0 0.0
    %1749 = vmatprep.subr.mxu0 0.0
    %1750 = vmatpush1.msra.mxu0 0.0
    %1751 = vmatprep.subr.mxu0 0.0
    %1752 = vmatpush1.msra.mxu0 0.0
    %1753 = vmatprep.subr.mxu0 0.0
    %1754 = vmatpush1.msra.mxu0 0.0
    %1755 = vmatprep.subr.mxu0 0.0
    %1756 = vmatpush1.msra.mxu0 0.0
    %1757 = vmatprep.subr.mxu0 0.0
    %1758 = vmatpush1.msra.mxu0 0.0
    %1759 = vmatprep.subr.mxu0 0.0
    %1760 = vmatpush1.msra.mxu0 0.0
    %1761 = vmatprep.subr.mxu0 0.0
    %1762 = vmatpush1.msra.mxu0 0.0
    %1763 = vmatprep.subr.mxu0 0.0
    %1764 = vmatpush1.msra.mxu0 0.0
    %1765 = vmatprep.subr.mxu0 0.0
    %1766 = vmatpush1.msra.mxu0 0.0
    %1767 = vmatprep.subr.mxu0 0.0
    %1768 = vmatpush1.msra.mxu0 0.0
    %1769 = vmatprep.subr.mxu0 0.0
    %1770 = vmatpush1.msra.mxu0 0.0
    %1771 = vmatprep.subr.mxu0 0.0
    %1772 = vmatpush1.msra.mxu0 0.0
    %1773 = vmatprep.subr.mxu0 0.0
    %1774 = vmatpush1.msra.mxu0 0.0
    %1775 = vmatprep.subr.mxu0 0.0
    %1776 = vmatpush1.msra.mxu0 0.0
    %1777 = vmatprep.subr.mxu0 0.0
    %1778 = vmatpush1.msra.mxu0 0.0
    %1779 = vmatprep.subr.mxu0 0.0
    %1780 = vmatpush1.msra.mxu0 0.0
    %1781 = vmatprep.subr.mxu0 0.0
    %1782 = vmatpush1.msra.mxu0 0.0
    %1783 = vmatprep.subr.mxu0 0.0
    %1784 = vmatpush1.msra.mxu0 0.0
    %1785 = vmatprep.subr.mxu0 0.0
    %1786 = vmatpush1.msra.mxu0 0.0
    %1787 = vmatprep.subr.mxu0 0.0
    %1788 = vmatpush1.msra.mxu0 0.0
    %1789 = vmatprep.mubr.f32.mxu0 0.0
    %v1790 = vand.u32 %v867, 4294901760
    %1791 = vmatmul.mubr.f32.gmra.mrb[0].mxu0 %v1790
    %v1792 = vpop.f32.mrb[0].mxu0
    %v1793 = vadd.f32 %v1720, %v1792
    %v1794 = vpop.f32.mrb[0].mxu0
    %1795 = vdwg.mxu0
    %1796 = vadd.xlane.f32.xlu0 %v1793
    %v1797 = vpop.xlane.xlu0 %1796
    %v1798 = vrot.slane %v1797, 4
    %v1799 = vadd.f32 %v1797, %v1798
    %v1800 = vrot.slane %v1799, 2
    %v1801 = vadd.f32 %v1799, %v1800
    %v1802 = vrot.slane %v1801, 1
    %v1803 = vadd.f32 %v1801, %v1802
    %v1804 = vmul.f32 %v1803, 0.125
    %v1805 = vmul.f32 %v483, %v599
    %v1806 = vmul.f32 %v484, %v600
    %1807 = vmatprep.subr.mxu0 0.0
    %v1808 = vand.u32 %v1805, 4294901760
    %1809 = vmatpush1.msra.mxu0 %v1808
    %1810 = vmatprep.subr.mxu0 0.0
    %v1811 = vand.u32 %v1806, 4294901760
    %1812 = vmatpush1.msra.mxu0 %v1811
    %1813 = vmatprep.subr.mxu0 0.0
    %1814 = vmatpush1.msra.mxu0 0.0
    %1815 = vmatprep.subr.mxu0 0.0
    %1816 = vmatpush1.msra.mxu0 0.0
    %1817 = vmatprep.subr.mxu0 0.0
    %1818 = vmatpush1.msra.mxu0 0.0
    %1819 = vmatprep.subr.mxu0 0.0
    %1820 = vmatpush1.msra.mxu0 0.0
    %1821 = vmatprep.subr.mxu0 0.0
    %1822 = vmatpush1.msra.mxu0 0.0
    %1823 = vmatprep.subr.mxu0 0.0
    %1824 = vmatpush1.msra.mxu0 0.0
    %1825 = vmatprep.subr.mxu0 0.0
    %1826 = vmatpush1.msra.mxu0 0.0
    %1827 = vmatprep.subr.mxu0 0.0
    %1828 = vmatpush1.msra.mxu0 0.0
    %1829 = vmatprep.subr.mxu0 0.0
    %1830 = vmatpush1.msra.mxu0 0.0
    %1831 = vmatprep.subr.mxu0 0.0
    %1832 = vmatpush1.msra.mxu0 0.0
    %1833 = vmatprep.subr.mxu0 0.0
    %1834 = vmatpush1.msra.mxu0 0.0
    %1835 = vmatprep.subr.mxu0 0.0
    %1836 = vmatpush1.msra.mxu0 0.0
    %1837 = vmatprep.subr.mxu0 0.0
    %1838 = vmatpush1.msra.mxu0 0.0
    %1839 = vmatprep.subr.mxu0 0.0
    %1840 = vmatpush1.msra.mxu0 0.0
    %1841 = vmatprep.subr.mxu0 0.0
    %1842 = vmatpush1.msra.mxu0 0.0
    %1843 = vmatprep.subr.mxu0 0.0
    %1844 = vmatpush1.msra.mxu0 0.0
    %1845 = vmatprep.subr.mxu0 0.0
    %1846 = vmatpush1.msra.mxu0 0.0
    %1847 = vmatprep.subr.mxu0 0.0
    %1848 = vmatpush1.msra.mxu0 0.0
    %1849 = vmatprep.subr.mxu0 0.0
    %1850 = vmatpush1.msra.mxu0 0.0
    %1851 = vmatprep.subr.mxu0 0.0
    %1852 = vmatpush1.msra.mxu0 0.0
    %1853 = vmatprep.subr.mxu0 0.0
    %1854 = vmatpush1.msra.mxu0 0.0
    %1855 = vmatprep.subr.mxu0 0.0
    %1856 = vmatpush1.msra.mxu0 0.0
    %1857 = vmatprep.subr.mxu0 0.0
    %1858 = vmatpush1.msra.mxu0 0.0
    %1859 = vmatprep.subr.mxu0 0.0
    %1860 = vmatpush1.msra.mxu0 0.0
    %1861 = vmatprep.subr.mxu0 0.0
    %1862 = vmatpush1.msra.mxu0 0.0
    %1863 = vmatprep.subr.mxu0 0.0
    %1864 = vmatpush1.msra.mxu0 0.0
    %1865 = vmatprep.subr.mxu0 0.0
    %1866 = vmatpush1.msra.mxu0 0.0
    %1867 = vmatprep.subr.mxu0 0.0
    %1868 = vmatpush1.msra.mxu0 0.0
    %1869 = vmatprep.subr.mxu0 0.0
    %1870 = vmatpush1.msra.mxu0 0.0
    %1871 = vmatprep.subr.mxu0 0.0
    %1872 = vmatpush1.msra.mxu0 0.0
    %1873 = vmatprep.mubr.f32.mxu0 0.0
    %v1874 = vand.u32 %v867, 4294901760
    %v1875 = vsub.f32 %v867, %v1874
    %v1876 = vand.u32 %v1875, 4294901760
    %v1877 = vsub.f32 %v1875, %v1876
    %v1878 = vand.u32 %v1877, 4294901760
    %1879 = vmatmul.mubr.f32.gmra.mrb[0].mxu0 %v1878
    %v1880 = vpop.f32.mrb[0].mxu0
    %v1881 = vadd.f32 0.0, %v1880
    %v1882 = vpop.f32.mrb[0].mxu0
    %1883 = vdwg.mxu0
    %1884 = vmatprep.subr.mxu0 0.0
    %v1885 = vand.u32 %v1805, 4294901760
    %v1886 = vsub.f32 %v1805, %v1885
    %v1887 = vand.u32 %v1886, 4294901760
    %v1888 = vsub.f32 %v1886, %v1887
    %v1889 = vand.u32 %v1888, 4294901760
    %1890 = vmatpush1.msra.mxu0 %v1889
    %1891 = vmatprep.subr.mxu0 0.0
    %v1892 = vand.u32 %v1806, 4294901760
    %v1893 = vsub.f32 %v1806, %v1892
    %v1894 = vand.u32 %v1893, 4294901760
    %v1895 = vsub.f32 %v1893, %v1894
    %v1896 = vand.u32 %v1895, 4294901760
    %1897 = vmatpush1.msra.mxu0 %v1896
    %1898 = vmatprep.subr.mxu0 0.0
    %1899 = vmatpush1.msra.mxu0 0.0
    %1900 = vmatprep.subr.mxu0 0.0
    %1901 = vmatpush1.msra.mxu0 0.0
    %1902 = vmatprep.subr.mxu0 0.0
    %1903 = vmatpush1.msra.mxu0 0.0
    %1904 = vmatprep.subr.mxu0 0.0
    %1905 = vmatpush1.msra.mxu0 0.0
    %1906 = vmatprep.subr.mxu0 0.0
    %1907 = vmatpush1.msra.mxu0 0.0
    %1908 = vmatprep.subr.mxu0 0.0
    %1909 = vmatpush1.msra.mxu0 0.0
    %1910 = vmatprep.subr.mxu0 0.0
    %1911 = vmatpush1.msra.mxu0 0.0
    %1912 = vmatprep.subr.mxu0 0.0
    %1913 = vmatpush1.msra.mxu0 0.0
    %1914 = vmatprep.subr.mxu0 0.0
    %1915 = vmatpush1.msra.mxu0 0.0
    %1916 = vmatprep.subr.mxu0 0.0
    %1917 = vmatpush1.msra.mxu0 0.0
    %1918 = vmatprep.subr.mxu0 0.0
    %1919 = vmatpush1.msra.mxu0 0.0
    %1920 = vmatprep.subr.mxu0 0.0
    %1921 = vmatpush1.msra.mxu0 0.0
    %1922 = vmatprep.subr.mxu0 0.0
    %1923 = vmatpush1.msra.mxu0 0.0
    %1924 = vmatprep.subr.mxu0 0.0
    %1925 = vmatpush1.msra.mxu0 0.0
    %1926 = vmatprep.subr.mxu0 0.0
    %1927 = vmatpush1.msra.mxu0 0.0
    %1928 = vmatprep.subr.mxu0 0.0
    %1929 = vmatpush1.msra.mxu0 0.0
    %1930 = vmatprep.subr.mxu0 0.0
    %1931 = vmatpush1.msra.mxu0 0.0
    %1932 = vmatprep.subr.mxu0 0.0
    %1933 = vmatpush1.msra.mxu0 0.0
    %1934 = vmatprep.subr.mxu0 0.0
    %1935 = vmatpush1.msra.mxu0 0.0
    %1936 = vmatprep.subr.mxu0 0.0
    %1937 = vmatpush1.msra.mxu0 0.0
    %1938 = vmatprep.subr.mxu0 0.0
    %1939 = vmatpush1.msra.mxu0 0.0
    %1940 = vmatprep.subr.mxu0 0.0
    %1941 = vmatpush1.msra.mxu0 0.0
    %1942 = vmatprep.subr.mxu0 0.0
    %1943 = vmatpush1.msra.mxu0 0.0
    %1944 = vmatprep.subr.mxu0 0.0
    %1945 = vmatpush1.msra.mxu0 0.0
    %1946 = vmatprep.subr.mxu0 0.0
    %1947 = vmatpush1.msra.mxu0 0.0
    %1948 = vmatprep.subr.mxu0 0.0
    %1949 = vmatpush1.msra.mxu0 0.0
    %1950 = vmatprep.subr.mxu0 0.0
    %1951 = vmatpush1.msra.mxu0 0.0
    %1952 = vmatprep.subr.mxu0 0.0
    %1953 = vmatpush1.msra.mxu0 0.0
    %1954 = vmatprep.subr.mxu0 0.0
    %1955 = vmatpush1.msra.mxu0 0.0
    %1956 = vmatprep.subr.mxu0 0.0
    %1957 = vmatpush1.msra.mxu0 0.0
    %1958 = vmatprep.mubr.f32.mxu0 0.0
    %v1959 = vand.u32 %v867, 4294901760
    %1960 = vmatmul.mubr.f32.gmra.mrb[0].mxu0 %v1959
    %v1961 = vpop.f32.mrb[0].mxu0
    %v1962 = vadd.f32 %v1881, %v1961
    %v1963 = vpop.f32.mrb[0].mxu0
    %1964 = vdwg.mxu0
    %1965 = vmatprep.subr.mxu0 0.0
    %v1966 = vand.u32 %v1805, 4294901760
    %v1967 = vsub.f32 %v1805, %v1966
    %1968 = vmatpush1.msra.mxu0 %v1967
    %1969 = vmatprep.subr.mxu0 0.0
    %v1970 = vand.u32 %v1806, 4294901760
    %v1971 = vsub.f32 %v1806, %v1970
    %1972 = vmatpush1.msra.mxu0 %v1971
    %1973 = vmatprep.subr.mxu0 0.0
    %1974 = vmatpush1.msra.mxu0 0.0
    %1975 = vmatprep.subr.mxu0 0.0
    %1976 = vmatpush1.msra.mxu0 0.0
    %1977 = vmatprep.subr.mxu0 0.0
    %1978 = vmatpush1.msra.mxu0 0.0
    %1979 = vmatprep.subr.mxu0 0.0
    %1980 = vmatpush1.msra.mxu0 0.0
    %1981 = vmatprep.subr.mxu0 0.0
    %1982 = vmatpush1.msra.mxu0 0.0
    %1983 = vmatprep.subr.mxu0 0.0
    %1984 = vmatpush1.msra.mxu0 0.0
    %1985 = vmatprep.subr.mxu0 0.0
    %1986 = vmatpush1.msra.mxu0 0.0
    %1987 = vmatprep.subr.mxu0 0.0
    %1988 = vmatpush1.msra.mxu0 0.0
    %1989 = vmatprep.subr.mxu0 0.0
    %1990 = vmatpush1.msra.mxu0 0.0
    %1991 = vmatprep.subr.mxu0 0.0
    %1992 = vmatpush1.msra.mxu0 0.0
    %1993 = vmatprep.subr.mxu0 0.0
    %1994 = vmatpush1.msra.mxu0 0.0
    %1995 = vmatprep.subr.mxu0 0.0
    %1996 = vmatpush1.msra.mxu0 0.0
    %1997 = vmatprep.subr.mxu0 0.0
    %1998 = vmatpush1.msra.mxu0 0.0
    %1999 = vmatprep.subr.mxu0 0.0
    %2000 = vmatpush1.msra.mxu0 0.0
    %2001 = vmatprep.subr.mxu0 0.0
    %2002 = vmatpush1.msra.mxu0 0.0
    %2003 = vmatprep.subr.mxu0 0.0
    %2004 = vmatpush1.msra.mxu0 0.0
    %2005 = vmatprep.subr.mxu0 0.0
    %2006 = vmatpush1.msra.mxu0 0.0
    %2007 = vmatprep.subr.mxu0 0.0
    %2008 = vmatpush1.msra.mxu0 0.0
    %2009 = vmatprep.subr.mxu0 0.0
    %2010 = vmatpush1.msra.mxu0 0.0
    %2011 = vmatprep.subr.mxu0 0.0
    %2012 = vmatpush1.msra.mxu0 0.0
    %2013 = vmatprep.subr.mxu0 0.0
    %2014 = vmatpush1.msra.mxu0 0.0
    %2015 = vmatprep.subr.mxu0 0.0
    %2016 = vmatpush1.msra.mxu0 0.0
    %2017 = vmatprep.subr.mxu0 0.0
    %2018 = vmatpush1.msra.mxu0 0.0
    %2019 = vmatprep.subr.mxu0 0.0
    %2020 = vmatpush1.msra.mxu0 0.0
    %2021 = vmatprep.subr.mxu0 0.0
    %2022 = vmatpush1.msra.mxu0 0.0
    %2023 = vmatprep.subr.mxu0 0.0
    %2024 = vmatpush1.msra.mxu0 0.0
    %2025 = vmatprep.subr.mxu0 0.0
    %2026 = vmatpush1.msra.mxu0 0.0
    %2027 = vmatprep.subr.mxu0 0.0
    %2028 = vmatpush1.msra.mxu0 0.0
    %2029 = vmatprep.subr.mxu0 0.0
    %2030 = vmatpush1.msra.mxu0 0.0
    %2031 = vmatprep.subr.mxu0 0.0
    %2032 = vmatpush1.msra.mxu0 0.0
    %2033 = vmatprep.mubr.f32.mxu0 0.0
    %v2034 = vand.u32 %v867, 4294901760
    %v2035 = vsub.f32 %v867, %v2034
    %2036 = vmatmul.mubr.f32.gmra.mrb[0].mxu0 %v2035
    %v2037 = vpop.f32.mrb[0].mxu0
    %v2038 = vadd.f32 %v1962, %v2037
    %v2039 = vpop.f32.mrb[0].mxu0
    %2040 = vdwg.mxu0
    %2041 = vmatprep.subr.mxu0 0.0
    %v2042 = vand.u32 %v1805, 4294901760
    %2043 = vmatpush1.msra.mxu0 %v2042
    %2044 = vmatprep.subr.mxu0 0.0
    %v2045 = vand.u32 %v1806, 4294901760
    %2046 = vmatpush1.msra.mxu0 %v2045
    %2047 = vmatprep.subr.mxu0 0.0
    %2048 = vmatpush1.msra.mxu0 0.0
    %2049 = vmatprep.subr.mxu0 0.0
    %2050 = vmatpush1.msra.mxu0 0.0
    %2051 = vmatprep.subr.mxu0 0.0
    %2052 = vmatpush1.msra.mxu0 0.0
    %2053 = vmatprep.subr.mxu0 0.0
    %2054 = vmatpush1.msra.mxu0 0.0
    %2055 = vmatprep.subr.mxu0 0.0
    %2056 = vmatpush1.msra.mxu0 0.0
    %2057 = vmatprep.subr.mxu0 0.0
    %2058 = vmatpush1.msra.mxu0 0.0
    %2059 = vmatprep.subr.mxu0 0.0
    %2060 = vmatpush1.msra.mxu0 0.0
    %2061 = vmatprep.subr.mxu0 0.0
    %2062 = vmatpush1.msra.mxu0 0.0
    %2063 = vmatprep.subr.mxu0 0.0
    %2064 = vmatpush1.msra.mxu0 0.0
    %2065 = vmatprep.subr.mxu0 0.0
    %2066 = vmatpush1.msra.mxu0 0.0
    %2067 = vmatprep.subr.mxu0 0.0
    %2068 = vmatpush1.msra.mxu0 0.0
    %2069 = vmatprep.subr.mxu0 0.0
    %2070 = vmatpush1.msra.mxu0 0.0
    %2071 = vmatprep.subr.mxu0 0.0
    %2072 = vmatpush1.msra.mxu0 0.0
    %2073 = vmatprep.subr.mxu0 0.0
    %2074 = vmatpush1.msra.mxu0 0.0
    %2075 = vmatprep.subr.mxu0 0.0
    %2076 = vmatpush1.msra.mxu0 0.0
    %2077 = vmatprep.subr.mxu0 0.0
    %2078 = vmatpush1.msra.mxu0 0.0
    %2079 = vmatprep.subr.mxu0 0.0
    %2080 = vmatpush1.msra.mxu0 0.0
    %2081 = vmatprep.subr.mxu0 0.0
    %2082 = vmatpush1.msra.mxu0 0.0
    %2083 = vmatprep.subr.mxu0 0.0
    %2084 = vmatpush1.msra.mxu0 0.0
    %2085 = vmatprep.subr.mxu0 0.0
    %2086 = vmatpush1.msra.mxu0 0.0
    %2087 = vmatprep.subr.mxu0 0.0
    %2088 = vmatpush1.msra.mxu0 0.0
    %2089 = vmatprep.subr.mxu0 0.0
    %2090 = vmatpush1.msra.mxu0 0.0
    %2091 = vmatprep.subr.mxu0 0.0
    %2092 = vmatpush1.msra.mxu0 0.0
    %2093 = vmatprep.subr.mxu0 0.0
    %2094 = vmatpush1.msra.mxu0 0.0
    %2095 = vmatprep.subr.mxu0 0.0
    %2096 = vmatpush1.msra.mxu0 0.0
    %2097 = vmatprep.subr.mxu0 0.0
    %2098 = vmatpush1.msra.mxu0 0.0
    %2099 = vmatprep.subr.mxu0 0.0
    %2100 = vmatpush1.msra.mxu0 0.0
    %2101 = vmatprep.subr.mxu0 0.0
    %2102 = vmatpush1.msra.mxu0 0.0
    %2103 = vmatprep.subr.mxu0 0.0
    %2104 = vmatpush1.msra.mxu0 0.0
    %2105 = vmatprep.subr.mxu0 0.0
    %2106 = vmatpush1.msra.mxu0 0.0
    %2107 = vmatprep.mubr.f32.mxu0 0.0
    %v2108 = vand.u32 %v867, 4294901760
    %v2109 = vsub.f32 %v867, %v2108
    %v2110 = vand.u32 %v2109, 4294901760
    %2111 = vmatmul.mubr.f32.gmra.mrb[0].mxu0 %v2110
    %v2112 = vpop.f32.mrb[0].mxu0
    %v2113 = vadd.f32 %v2038, %v2112
    %v2114 = vpop.f32.mrb[0].mxu0
    %2115 = vdwg.mxu0
    %2116 = vmatprep.subr.mxu0 0.0
    %v2117 = vand.u32 %v1805, 4294901760
    %v2118 = vsub.f32 %v1805, %v2117
    %v2119 = vand.u32 %v2118, 4294901760
    %2120 = vmatpush1.msra.mxu0 %v2119
    %2121 = vmatprep.subr.mxu0 0.0
    %v2122 = vand.u32 %v1806, 4294901760
    %v2123 = vsub.f32 %v1806, %v2122
    %v2124 = vand.u32 %v2123, 4294901760
    %2125 = vmatpush1.msra.mxu0 %v2124
    %2126 = vmatprep.subr.mxu0 0.0
    %2127 = vmatpush1.msra.mxu0 0.0
    %2128 = vmatprep.subr.mxu0 0.0
    %2129 = vmatpush1.msra.mxu0 0.0
    %2130 = vmatprep.subr.mxu0 0.0
    %2131 = vmatpush1.msra.mxu0 0.0
    %2132 = vmatprep.subr.mxu0 0.0
    %2133 = vmatpush1.msra.mxu0 0.0
    %2134 = vmatprep.subr.mxu0 0.0
    %2135 = vmatpush1.msra.mxu0 0.0
    %2136 = vmatprep.subr.mxu0 0.0
    %2137 = vmatpush1.msra.mxu0 0.0
    %2138 = vmatprep.subr.mxu0 0.0
    %2139 = vmatpush1.msra.mxu0 0.0
    %2140 = vmatprep.subr.mxu0 0.0
    %2141 = vmatpush1.msra.mxu0 0.0
    %2142 = vmatprep.subr.mxu0 0.0
    %2143 = vmatpush1.msra.mxu0 0.0
    %2144 = vmatprep.subr.mxu0 0.0
    %2145 = vmatpush1.msra.mxu0 0.0
    %2146 = vmatprep.subr.mxu0 0.0
    %2147 = vmatpush1.msra.mxu0 0.0
    %2148 = vmatprep.subr.mxu0 0.0
    %2149 = vmatpush1.msra.mxu0 0.0
    %2150 = vmatprep.subr.mxu0 0.0
    %2151 = vmatpush1.msra.mxu0 0.0
    %2152 = vmatprep.subr.mxu0 0.0
    %2153 = vmatpush1.msra.mxu0 0.0
    %2154 = vmatprep.subr.mxu0 0.0
    %2155 = vmatpush1.msra.mxu0 0.0
    %2156 = vmatprep.subr.mxu0 0.0
    %2157 = vmatpush1.msra.mxu0 0.0
    %2158 = vmatprep.subr.mxu0 0.0
    %2159 = vmatpush1.msra.mxu0 0.0
    %2160 = vmatprep.subr.mxu0 0.0
    %2161 = vmatpush1.msra.mxu0 0.0
    %2162 = vmatprep.subr.mxu0 0.0
    %2163 = vmatpush1.msra.mxu0 0.0
    %2164 = vmatprep.subr.mxu0 0.0
    %2165 = vmatpush1.msra.mxu0 0.0
    %2166 = vmatprep.subr.mxu0 0.0
    %2167 = vmatpush1.msra.mxu0 0.0
    %2168 = vmatprep.subr.mxu0 0.0
    %2169 = vmatpush1.msra.mxu0 0.0
    %2170 = vmatprep.subr.mxu0 0.0
    %2171 = vmatpush1.msra.mxu0 0.0
    %2172 = vmatprep.subr.mxu0 0.0
    %2173 = vmatpush1.msra.mxu0 0.0
    %2174 = vmatprep.subr.mxu0 0.0
    %2175 = vmatpush1.msra.mxu0 0.0
    %2176 = vmatprep.subr.mxu0 0.0
    %2177 = vmatpush1.msra.mxu0 0.0
    %2178 = vmatprep.subr.mxu0 0.0
    %2179 = vmatpush1.msra.mxu0 0.0
    %2180 = vmatprep.subr.mxu0 0.0
    %2181 = vmatpush1.msra.mxu0 0.0
    %2182 = vmatprep.subr.mxu0 0.0
    %2183 = vmatpush1.msra.mxu0 0.0
    %2184 = vmatprep.subr.mxu0 0.0
    %2185 = vmatpush1.msra.mxu0 0.0
    %2186 = vmatprep.mubr.f32.mxu0 0.0
    %v2187 = vand.u32 %v867, 4294901760
    %2188 = vmatmul.mubr.f32.gmra.mrb[0].mxu0 %v2187
    %v2189 = vpop.f32.mrb[0].mxu0
    %v2190 = vadd.f32 %v2113, %v2189
    %v2191 = vpop.f32.mrb[0].mxu0
    %2192 = vdwg.mxu0
    %2193 = vmatprep.subr.mxu0 0.0
    %v2194 = vand.u32 %v1805, 4294901760
    %2195 = vmatpush1.msra.mxu0 %v2194
    %2196 = vmatprep.subr.mxu0 0.0
    %v2197 = vand.u32 %v1806, 4294901760
    %2198 = vmatpush1.msra.mxu0 %v2197
    %2199 = vmatprep.subr.mxu0 0.0
    %2200 = vmatpush1.msra.mxu0 0.0
    %2201 = vmatprep.subr.mxu0 0.0
    %2202 = vmatpush1.msra.mxu0 0.0
    %2203 = vmatprep.subr.mxu0 0.0
    %2204 = vmatpush1.msra.mxu0 0.0
    %2205 = vmatprep.subr.mxu0 0.0
    %2206 = vmatpush1.msra.mxu0 0.0
    %2207 = vmatprep.subr.mxu0 0.0
    %2208 = vmatpush1.msra.mxu0 0.0
    %2209 = vmatprep.subr.mxu0 0.0
    %2210 = vmatpush1.msra.mxu0 0.0
    %2211 = vmatprep.subr.mxu0 0.0
    %2212 = vmatpush1.msra.mxu0 0.0
    %2213 = vmatprep.subr.mxu0 0.0
    %2214 = vmatpush1.msra.mxu0 0.0
    %2215 = vmatprep.subr.mxu0 0.0
    %2216 = vmatpush1.msra.mxu0 0.0
    %2217 = vmatprep.subr.mxu0 0.0
    %2218 = vmatpush1.msra.mxu0 0.0
    %2219 = vmatprep.subr.mxu0 0.0
    %2220 = vmatpush1.msra.mxu0 0.0
    %2221 = vmatprep.subr.mxu0 0.0
    %2222 = vmatpush1.msra.mxu0 0.0
    %2223 = vmatprep.subr.mxu0 0.0
    %2224 = vmatpush1.msra.mxu0 0.0
    %2225 = vmatprep.subr.mxu0 0.0
    %2226 = vmatpush1.msra.mxu0 0.0
    %2227 = vmatprep.subr.mxu0 0.0
    %2228 = vmatpush1.msra.mxu0 0.0
    %2229 = vmatprep.subr.mxu0 0.0
    %2230 = vmatpush1.msra.mxu0 0.0
    %2231 = vmatprep.subr.mxu0 0.0
    %2232 = vmatpush1.msra.mxu0 0.0
    %2233 = vmatprep.subr.mxu0 0.0
    %2234 = vmatpush1.msra.mxu0 0.0
    %2235 = vmatprep.subr.mxu0 0.0
    %2236 = vmatpush1.msra.mxu0 0.0
    %2237 = vmatprep.subr.mxu0 0.0
    %2238 = vmatpush1.msra.mxu0 0.0
    %2239 = vmatprep.subr.mxu0 0.0
    %2240 = vmatpush1.msra.mxu0 0.0
    %2241 = vmatprep.subr.mxu0 0.0
    %2242 = vmatpush1.msra.mxu0 0.0
    %2243 = vmatprep.subr.mxu0 0.0
    %2244 = vmatpush1.msra.mxu0 0.0
    %2245 = vmatprep.subr.mxu0 0.0
    %2246 = vmatpush1.msra.mxu0 0.0
    %2247 = vmatprep.subr.mxu0 0.0
    %2248 = vmatpush1.msra.mxu0 0.0
    %2249 = vmatprep.subr.mxu0 0.0
    %2250 = vmatpush1.msra.mxu0 0.0
    %2251 = vmatprep.subr.mxu0 0.0
    %2252 = vmatpush1.msra.mxu0 0.0
    %2253 = vmatprep.subr.mxu0 0.0
    %2254 = vmatpush1.msra.mxu0 0.0
    %2255 = vmatprep.subr.mxu0 0.0
    %2256 = vmatpush1.msra.mxu0 0.0
    %2257 = vmatprep.subr.mxu0 0.0
    %2258 = vmatpush1.msra.mxu0 0.0
    %2259 = vmatprep.mubr.f32.mxu0 0.0
    %v2260 = vand.u32 %v867, 4294901760
    %2261 = vmatmul.mubr.f32.gmra.mrb[0].mxu0 %v2260
    %v2262 = vpop.f32.mrb[0].mxu0
    %v2263 = vadd.f32 %v2190, %v2262
    %v2264 = vpop.f32.mrb[0].mxu0
    %2265 = vdwg.mxu0
    %2266 = vadd.xlane.f32.xlu0 %v2263
    %v2267 = vpop.xlane.xlu0 %2266
    %v2268 = vrot.slane %v2267, 4
    %v2269 = vadd.f32 %v2267, %v2268
    %v2270 = vrot.slane %v2269, 2
    %v2271 = vadd.f32 %v2269, %v2270
    %v2272 = vrot.slane %v2271, 1
    %v2273 = vadd.f32 %v2271, %v2272
    %v2274 = vmul.f32 %v2273, 0.125
    %v2275 = vmul.f32 %v687, %v491
    %v2276 = vmul.f32 %v688, %v492
    %2277 = vmatprep.subr.mxu0 0.0
    %v2278 = vand.u32 %v2275, 4294901760
    %2279 = vmatpush1.msra.mxu0 %v2278
    %2280 = vmatprep.subr.mxu0 0.0
    %v2281 = vand.u32 %v2276, 4294901760
    %2282 = vmatpush1.msra.mxu0 %v2281
    %2283 = vmatprep.subr.mxu0 0.0
    %2284 = vmatpush1.msra.mxu0 0.0
    %2285 = vmatprep.subr.mxu0 0.0
    %2286 = vmatpush1.msra.mxu0 0.0
    %2287 = vmatprep.subr.mxu0 0.0
    %2288 = vmatpush1.msra.mxu0 0.0
    %2289 = vmatprep.subr.mxu0 0.0
    %2290 = vmatpush1.msra.mxu0 0.0
    %2291 = vmatprep.subr.mxu0 0.0
    %2292 = vmatpush1.msra.mxu0 0.0
    %2293 = vmatprep.subr.mxu0 0.0
    %2294 = vmatpush1.msra.mxu0 0.0
    %2295 = vmatprep.subr.mxu0 0.0
    %2296 = vmatpush1.msra.mxu0 0.0
    %2297 = vmatprep.subr.mxu0 0.0
    %2298 = vmatpush1.msra.mxu0 0.0
    %2299 = vmatprep.subr.mxu0 0.0
    %2300 = vmatpush1.msra.mxu0 0.0
    %2301 = vmatprep.subr.mxu0 0.0
    %2302 = vmatpush1.msra.mxu0 0.0
    %2303 = vmatprep.subr.mxu0 0.0
    %2304 = vmatpush1.msra.mxu0 0.0
    %2305 = vmatprep.subr.mxu0 0.0
    %2306 = vmatpush1.msra.mxu0 0.0
    %2307 = vmatprep.subr.mxu0 0.0
    %2308 = vmatpush1.msra.mxu0 0.0
    %2309 = vmatprep.subr.mxu0 0.0
    %2310 = vmatpush1.msra.mxu0 0.0
    %2311 = vmatprep.subr.mxu0 0.0
    %2312 = vmatpush1.msra.mxu0 0.0
    %2313 = vmatprep.subr.mxu0 0.0
    %2314 = vmatpush1.msra.mxu0 0.0
    %2315 = vmatprep.subr.mxu0 0.0
    %2316 = vmatpush1.msra.mxu0 0.0
    %2317 = vmatprep.subr.mxu0 0.0
    %2318 = vmatpush1.msra.mxu0 0.0
    %2319 = vmatprep.subr.mxu0 0.0
    %2320 = vmatpush1.msra.mxu0 0.0
    %2321 = vmatprep.subr.mxu0 0.0
    %2322 = vmatpush1.msra.mxu0 0.0
    %2323 = vmatprep.subr.mxu0 0.0
    %2324 = vmatpush1.msra.mxu0 0.0
    %2325 = vmatprep.subr.mxu0 0.0
    %2326 = vmatpush1.msra.mxu0 0.0
    %2327 = vmatprep.subr.mxu0 0.0
    %2328 = vmatpush1.msra.mxu0 0.0
    %2329 = vmatprep.subr.mxu0 0.0
    %2330 = vmatpush1.msra.mxu0 0.0
    %2331 = vmatprep.subr.mxu0 0.0
    %2332 = vmatpush1.msra.mxu0 0.0
    %2333 = vmatprep.subr.mxu0 0.0
    %2334 = vmatpush1.msra.mxu0 0.0
    %2335 = vmatprep.subr.mxu0 0.0
    %2336 = vmatpush1.msra.mxu0 0.0
    %2337 = vmatprep.subr.mxu0 0.0
    %2338 = vmatpush1.msra.mxu0 0.0
    %2339 = vmatprep.subr.mxu0 0.0
    %2340 = vmatpush1.msra.mxu0 0.0
    %2341 = vmatprep.subr.mxu0 0.0
    %2342 = vmatpush1.msra.mxu0 0.0
    %2343 = vmatprep.mubr.f32.mxu0 0.0
    %v2344 = vand.u32 %v867, 4294901760
    %v2345 = vsub.f32 %v867, %v2344
    %v2346 = vand.u32 %v2345, 4294901760
    %v2347 = vsub.f32 %v2345, %v2346
    %v2348 = vand.u32 %v2347, 4294901760
    %2349 = vmatmul.mubr.f32.gmra.mrb[0].mxu0 %v2348
    %v2350 = vpop.f32.mrb[0].mxu0
    %v2351 = vadd.f32 0.0, %v2350
    %v2352 = vpop.f32.mrb[0].mxu0
    %2353 = vdwg.mxu0
    %2354 = vmatprep.subr.mxu0 0.0
    %v2355 = vand.u32 %v2275, 4294901760
    %v2356 = vsub.f32 %v2275, %v2355
    %v2357 = vand.u32 %v2356, 4294901760
    %v2358 = vsub.f32 %v2356, %v2357
    %v2359 = vand.u32 %v2358, 4294901760
    %2360 = vmatpush1.msra.mxu0 %v2359
    %2361 = vmatprep.subr.mxu0 0.0
    %v2362 = vand.u32 %v2276, 4294901760
    %v2363 = vsub.f32 %v2276, %v2362
    %v2364 = vand.u32 %v2363, 4294901760
    %v2365 = vsub.f32 %v2363, %v2364
    %v2366 = vand.u32 %v2365, 4294901760
    %2367 = vmatpush1.msra.mxu0 %v2366
    %2368 = vmatprep.subr.mxu0 0.0
    %2369 = vmatpush1.msra.mxu0 0.0
    %2370 = vmatprep.subr.mxu0 0.0
    %2371 = vmatpush1.msra.mxu0 0.0
    %2372 = vmatprep.subr.mxu0 0.0
    %2373 = vmatpush1.msra.mxu0 0.0
    %2374 = vmatprep.subr.mxu0 0.0
    %2375 = vmatpush1.msra.mxu0 0.0
    %2376 = vmatprep.subr.mxu0 0.0
    %2377 = vmatpush1.msra.mxu0 0.0
    %2378 = vmatprep.subr.mxu0 0.0
    %2379 = vmatpush1.msra.mxu0 0.0
    %2380 = vmatprep.subr.mxu0 0.0
    %2381 = vmatpush1.msra.mxu0 0.0
    %2382 = vmatprep.subr.mxu0 0.0
    %2383 = vmatpush1.msra.mxu0 0.0
    %2384 = vmatprep.subr.mxu0 0.0
    %2385 = vmatpush1.msra.mxu0 0.0
    %2386 = vmatprep.subr.mxu0 0.0
    %2387 = vmatpush1.msra.mxu0 0.0
    %2388 = vmatprep.subr.mxu0 0.0
    %2389 = vmatpush1.msra.mxu0 0.0
    %2390 = vmatprep.subr.mxu0 0.0
    %2391 = vmatpush1.msra.mxu0 0.0
    %2392 = vmatprep.subr.mxu0 0.0
    %2393 = vmatpush1.msra.mxu0 0.0
    %2394 = vmatprep.subr.mxu0 0.0
    %2395 = vmatpush1.msra.mxu0 0.0
    %2396 = vmatprep.subr.mxu0 0.0
    %2397 = vmatpush1.msra.mxu0 0.0
    %2398 = vmatprep.subr.mxu0 0.0
    %2399 = vmatpush1.msra.mxu0 0.0
    %2400 = vmatprep.subr.mxu0 0.0
    %2401 = vmatpush1.msra.mxu0 0.0
    %2402 = vmatprep.subr.mxu0 0.0
    %2403 = vmatpush1.msra.mxu0 0.0
    %2404 = vmatprep.subr.mxu0 0.0
    %2405 = vmatpush1.msra.mxu0 0.0
    %2406 = vmatprep.subr.mxu0 0.0
    %2407 = vmatpush1.msra.mxu0 0.0
    %2408 = vmatprep.subr.mxu0 0.0
    %2409 = vmatpush1.msra.mxu0 0.0
    %2410 = vmatprep.subr.mxu0 0.0
    %2411 = vmatpush1.msra.mxu0 0.0
    %2412 = vmatprep.subr.mxu0 0.0
    %2413 = vmatpush1.msra.mxu0 0.0
    %2414 = vmatprep.subr.mxu0 0.0
    %2415 = vmatpush1.msra.mxu0 0.0
    %2416 = vmatprep.subr.mxu0 0.0
    %2417 = vmatpush1.msra.mxu0 0.0
    %2418 = vmatprep.subr.mxu0 0.0
    %2419 = vmatpush1.msra.mxu0 0.0
    %2420 = vmatprep.subr.mxu0 0.0
    %2421 = vmatpush1.msra.mxu0 0.0
    %2422 = vmatprep.subr.mxu0 0.0
    %2423 = vmatpush1.msra.mxu0 0.0
    %2424 = vmatprep.subr.mxu0 0.0
    %2425 = vmatpush1.msra.mxu0 0.0
    %2426 = vmatprep.subr.mxu0 0.0
    %2427 = vmatpush1.msra.mxu0 0.0
    %2428 = vmatprep.mubr.f32.mxu0 0.0
    %v2429 = vand.u32 %v867, 4294901760
    %2430 = vmatmul.mubr.f32.gmra.mrb[0].mxu0 %v2429
    %v2431 = vpop.f32.mrb[0].mxu0
    %v2432 = vadd.f32 %v2351, %v2431
    %v2433 = vpop.f32.mrb[0].mxu0
    %2434 = vdwg.mxu0
    %2435 = vmatprep.subr.mxu0 0.0
    %v2436 = vand.u32 %v2275, 4294901760
    %v2437 = vsub.f32 %v2275, %v2436
    %2438 = vmatpush1.msra.mxu0 %v2437
    %2439 = vmatprep.subr.mxu0 0.0
    %v2440 = vand.u32 %v2276, 4294901760
    %v2441 = vsub.f32 %v2276, %v2440
    %2442 = vmatpush1.msra.mxu0 %v2441
    %2443 = vmatprep.subr.mxu0 0.0
    %2444 = vmatpush1.msra.mxu0 0.0
    %2445 = vmatprep.subr.mxu0 0.0
    %2446 = vmatpush1.msra.mxu0 0.0
    %2447 = vmatprep.subr.mxu0 0.0
    %2448 = vmatpush1.msra.mxu0 0.0
    %2449 = vmatprep.subr.mxu0 0.0
    %2450 = vmatpush1.msra.mxu0 0.0
    %2451 = vmatprep.subr.mxu0 0.0
    %2452 = vmatpush1.msra.mxu0 0.0
    %2453 = vmatprep.subr.mxu0 0.0
    %2454 = vmatpush1.msra.mxu0 0.0
    %2455 = vmatprep.subr.mxu0 0.0
    %2456 = vmatpush1.msra.mxu0 0.0
    %2457 = vmatprep.subr.mxu0 0.0
    %2458 = vmatpush1.msra.mxu0 0.0
    %2459 = vmatprep.subr.mxu0 0.0
    %2460 = vmatpush1.msra.mxu0 0.0
    %2461 = vmatprep.subr.mxu0 0.0
    %2462 = vmatpush1.msra.mxu0 0.0
    %2463 = vmatprep.subr.mxu0 0.0
    %2464 = vmatpush1.msra.mxu0 0.0
    %2465 = vmatprep.subr.mxu0 0.0
    %2466 = vmatpush1.msra.mxu0 0.0
    %2467 = vmatprep.subr.mxu0 0.0
    %2468 = vmatpush1.msra.mxu0 0.0
    %2469 = vmatprep.subr.mxu0 0.0
    %2470 = vmatpush1.msra.mxu0 0.0
    %2471 = vmatprep.subr.mxu0 0.0
    %2472 = vmatpush1.msra.mxu0 0.0
    %2473 = vmatprep.subr.mxu0 0.0
    %2474 = vmatpush1.msra.mxu0 0.0
    %2475 = vmatprep.subr.mxu0 0.0
    %2476 = vmatpush1.msra.mxu0 0.0
    %2477 = vmatprep.subr.mxu0 0.0
    %2478 = vmatpush1.msra.mxu0 0.0
    %2479 = vmatprep.subr.mxu0 0.0
    %2480 = vmatpush1.msra.mxu0 0.0
    %2481 = vmatprep.subr.mxu0 0.0
    %2482 = vmatpush1.msra.mxu0 0.0
    %2483 = vmatprep.subr.mxu0 0.0
    %2484 = vmatpush1.msra.mxu0 0.0
    %2485 = vmatprep.subr.mxu0 0.0
    %2486 = vmatpush1.msra.mxu0 0.0
    %2487 = vmatprep.subr.mxu0 0.0
    %2488 = vmatpush1.msra.mxu0 0.0
    %2489 = vmatprep.subr.mxu0 0.0
    %2490 = vmatpush1.msra.mxu0 0.0
    %2491 = vmatprep.subr.mxu0 0.0
    %2492 = vmatpush1.msra.mxu0 0.0
    %2493 = vmatprep.subr.mxu0 0.0
    %2494 = vmatpush1.msra.mxu0 0.0
    %2495 = vmatprep.subr.mxu0 0.0
    %2496 = vmatpush1.msra.mxu0 0.0
    %2497 = vmatprep.subr.mxu0 0.0
    %2498 = vmatpush1.msra.mxu0 0.0
    %2499 = vmatprep.subr.mxu0 0.0
    %2500 = vmatpush1.msra.mxu0 0.0
    %2501 = vmatprep.subr.mxu0 0.0
    %2502 = vmatpush1.msra.mxu0 0.0
    %2503 = vmatprep.mubr.f32.mxu0 0.0
    %v2504 = vand.u32 %v867, 4294901760
    %v2505 = vsub.f32 %v867, %v2504
    %2506 = vmatmul.mubr.f32.gmra.mrb[0].mxu0 %v2505
    %v2507 = vpop.f32.mrb[0].mxu0
    %v2508 = vadd.f32 %v2432, %v2507
    %v2509 = vpop.f32.mrb[0].mxu0
    %2510 = vdwg.mxu0
    %2511 = vmatprep.subr.mxu0 0.0
    %v2512 = vand.u32 %v2275, 4294901760
    %2513 = vmatpush1.msra.mxu0 %v2512
    %2514 = vmatprep.subr.mxu0 0.0
    %v2515 = vand.u32 %v2276, 4294901760
    %2516 = vmatpush1.msra.mxu0 %v2515
    %2517 = vmatprep.subr.mxu0 0.0
    %2518 = vmatpush1.msra.mxu0 0.0
    %2519 = vmatprep.subr.mxu0 0.0
    %2520 = vmatpush1.msra.mxu0 0.0
    %2521 = vmatprep.subr.mxu0 0.0
    %2522 = vmatpush1.msra.mxu0 0.0
    %2523 = vmatprep.subr.mxu0 0.0
    %2524 = vmatpush1.msra.mxu0 0.0
    %2525 = vmatprep.subr.mxu0 0.0
    %2526 = vmatpush1.msra.mxu0 0.0
    %2527 = vmatprep.subr.mxu0 0.0
    %2528 = vmatpush1.msra.mxu0 0.0
    %2529 = vmatprep.subr.mxu0 0.0
    %2530 = vmatpush1.msra.mxu0 0.0
    %2531 = vmatprep.subr.mxu0 0.0
    %2532 = vmatpush1.msra.mxu0 0.0
    %2533 = vmatprep.subr.mxu0 0.0
    %2534 = vmatpush1.msra.mxu0 0.0
    %2535 = vmatprep.subr.mxu0 0.0
    %2536 = vmatpush1.msra.mxu0 0.0
    %2537 = vmatprep.subr.mxu0 0.0
    %2538 = vmatpush1.msra.mxu0 0.0
    %2539 = vmatprep.subr.mxu0 0.0
    %2540 = vmatpush1.msra.mxu0 0.0
    %2541 = vmatprep.subr.mxu0 0.0
    %2542 = vmatpush1.msra.mxu0 0.0
    %2543 = vmatprep.subr.mxu0 0.0
    %2544 = vmatpush1.msra.mxu0 0.0
    %2545 = vmatprep.subr.mxu0 0.0
    %2546 = vmatpush1.msra.mxu0 0.0
    %2547 = vmatprep.subr.mxu0 0.0
    %2548 = vmatpush1.msra.mxu0 0.0
    %2549 = vmatprep.subr.mxu0 0.0
    %2550 = vmatpush1.msra.mxu0 0.0
    %2551 = vmatprep.subr.mxu0 0.0
    %2552 = vmatpush1.msra.mxu0 0.0
    %2553 = vmatprep.subr.mxu0 0.0
    %2554 = vmatpush1.msra.mxu0 0.0
    %2555 = vmatprep.subr.mxu0 0.0
    %2556 = vmatpush1.msra.mxu0 0.0
    %2557 = vmatprep.subr.mxu0 0.0
    %2558 = vmatpush1.msra.mxu0 0.0
    %2559 = vmatprep.subr.mxu0 0.0
    %2560 = vmatpush1.msra.mxu0 0.0
    %2561 = vmatprep.subr.mxu0 0.0
    %2562 = vmatpush1.msra.mxu0 0.0
    %2563 = vmatprep.subr.mxu0 0.0
    %2564 = vmatpush1.msra.mxu0 0.0
    %2565 = vmatprep.subr.mxu0 0.0
    %2566 = vmatpush1.msra.mxu0 0.0
    %2567 = vmatprep.subr.mxu0 0.0
    %2568 = vmatpush1.msra.mxu0 0.0
    %2569 = vmatprep.subr.mxu0 0.0
    %2570 = vmatpush1.msra.mxu0 0.0
    %2571 = vmatprep.subr.mxu0 0.0
    %2572 = vmatpush1.msra.mxu0 0.0
    %2573 = vmatprep.subr.mxu0 0.0
    %2574 = vmatpush1.msra.mxu0 0.0
    %2575 = vmatprep.subr.mxu0 0.0
    %2576 = vmatpush1.msra.mxu0 0.0
    %2577 = vmatprep.mubr.f32.mxu0 0.0
    %v2578 = vand.u32 %v867, 4294901760
    %v2579 = vsub.f32 %v867, %v2578
    %v2580 = vand.u32 %v2579, 4294901760
    %2581 = vmatmul.mubr.f32.gmra.mrb[0].mxu0 %v2580
    %v2582 = vpop.f32.mrb[0].mxu0
    %v2583 = vadd.f32 %v2508, %v2582
    %v2584 = vpop.f32.mrb[0].mxu0
    %2585 = vdwg.mxu0
    %2586 = vmatprep.subr.mxu0 0.0
    %v2587 = vand.u32 %v2275, 4294901760
    %v2588 = vsub.f32 %v2275, %v2587
    %v2589 = vand.u32 %v2588, 4294901760
    %2590 = vmatpush1.msra.mxu0 %v2589
    %2591 = vmatprep.subr.mxu0 0.0
    %v2592 = vand.u32 %v2276, 4294901760
    %v2593 = vsub.f32 %v2276, %v2592
    %v2594 = vand.u32 %v2593, 4294901760
    %2595 = vmatpush1.msra.mxu0 %v2594
    %2596 = vmatprep.subr.mxu0 0.0
    %2597 = vmatpush1.msra.mxu0 0.0
    %2598 = vmatprep.subr.mxu0 0.0
    %2599 = vmatpush1.msra.mxu0 0.0
    %2600 = vmatprep.subr.mxu0 0.0
    %2601 = vmatpush1.msra.mxu0 0.0
    %2602 = vmatprep.subr.mxu0 0.0
    %2603 = vmatpush1.msra.mxu0 0.0
    %2604 = vmatprep.subr.mxu0 0.0
    %2605 = vmatpush1.msra.mxu0 0.0
    %2606 = vmatprep.subr.mxu0 0.0
    %2607 = vmatpush1.msra.mxu0 0.0
    %2608 = vmatprep.subr.mxu0 0.0
    %2609 = vmatpush1.msra.mxu0 0.0
    %2610 = vmatprep.subr.mxu0 0.0
    %2611 = vmatpush1.msra.mxu0 0.0
    %2612 = vmatprep.subr.mxu0 0.0
    %2613 = vmatpush1.msra.mxu0 0.0
    %2614 = vmatprep.subr.mxu0 0.0
    %2615 = vmatpush1.msra.mxu0 0.0
    %2616 = vmatprep.subr.mxu0 0.0
    %2617 = vmatpush1.msra.mxu0 0.0
    %2618 = vmatprep.subr.mxu0 0.0
    %2619 = vmatpush1.msra.mxu0 0.0
    %2620 = vmatprep.subr.mxu0 0.0
    %2621 = vmatpush1.msra.mxu0 0.0
    %2622 = vmatprep.subr.mxu0 0.0
    %2623 = vmatpush1.msra.mxu0 0.0
    %2624 = vmatprep.subr.mxu0 0.0
    %2625 = vmatpush1.msra.mxu0 0.0
    %2626 = vmatprep.subr.mxu0 0.0
    %2627 = vmatpush1.msra.mxu0 0.0
    %2628 = vmatprep.subr.mxu0 0.0
    %2629 = vmatpush1.msra.mxu0 0.0
    %2630 = vmatprep.subr.mxu0 0.0
    %2631 = vmatpush1.msra.mxu0 0.0
    %2632 = vmatprep.subr.mxu0 0.0
    %2633 = vmatpush1.msra.mxu0 0.0
    %2634 = vmatprep.subr.mxu0 0.0
    %2635 = vmatpush1.msra.mxu0 0.0
    %2636 = vmatprep.subr.mxu0 0.0
    %2637 = vmatpush1.msra.mxu0 0.0
    %2638 = vmatprep.subr.mxu0 0.0
    %2639 = vmatpush1.msra.mxu0 0.0
    %2640 = vmatprep.subr.mxu0 0.0
    %2641 = vmatpush1.msra.mxu0 0.0
    %2642 = vmatprep.subr.mxu0 0.0
    %2643 = vmatpush1.msra.mxu0 0.0
    %2644 = vmatprep.subr.mxu0 0.0
    %2645 = vmatpush1.msra.mxu0 0.0
    %2646 = vmatprep.subr.mxu0 0.0
    %2647 = vmatpush1.msra.mxu0 0.0
    %2648 = vmatprep.subr.mxu0 0.0
    %2649 = vmatpush1.msra.mxu0 0.0
    %2650 = vmatprep.subr.mxu0 0.0
    %2651 = vmatpush1.msra.mxu0 0.0
    %2652 = vmatprep.subr.mxu0 0.0
    %2653 = vmatpush1.msra.mxu0 0.0
    %2654 = vmatprep.subr.mxu0 0.0
    %2655 = vmatpush1.msra.mxu0 0.0
    %2656 = vmatprep.mubr.f32.mxu0 0.0
    %v2657 = vand.u32 %v867, 4294901760
    %2658 = vmatmul.mubr.f32.gmra.mrb[0].mxu0 %v2657
    %v2659 = vpop.f32.mrb[0].mxu0
    %v2660 = vadd.f32 %v2583, %v2659
    %v2661 = vpop.f32.mrb[0].mxu0
    %2662 = vdwg.mxu0
    %2663 = vmatprep.subr.mxu0 0.0
    %v2664 = vand.u32 %v2275, 4294901760
    %2665 = vmatpush1.msra.mxu0 %v2664
    %2666 = vmatprep.subr.mxu0 0.0
    %v2667 = vand.u32 %v2276, 4294901760
    %2668 = vmatpush1.msra.mxu0 %v2667
    %2669 = vmatprep.subr.mxu0 0.0
    %2670 = vmatpush1.msra.mxu0 0.0
    %2671 = vmatprep.subr.mxu0 0.0
    %2672 = vmatpush1.msra.mxu0 0.0
    %2673 = vmatprep.subr.mxu0 0.0
    %2674 = vmatpush1.msra.mxu0 0.0
    %2675 = vmatprep.subr.mxu0 0.0
    %2676 = vmatpush1.msra.mxu0 0.0
    %2677 = vmatprep.subr.mxu0 0.0
    %2678 = vmatpush1.msra.mxu0 0.0
    %2679 = vmatprep.subr.mxu0 0.0
    %2680 = vmatpush1.msra.mxu0 0.0
    %2681 = vmatprep.subr.mxu0 0.0
    %2682 = vmatpush1.msra.mxu0 0.0
    %2683 = vmatprep.subr.mxu0 0.0
    %2684 = vmatpush1.msra.mxu0 0.0
    %2685 = vmatprep.subr.mxu0 0.0
    %2686 = vmatpush1.msra.mxu0 0.0
    %2687 = vmatprep.subr.mxu0 0.0
    %2688 = vmatpush1.msra.mxu0 0.0
    %2689 = vmatprep.subr.mxu0 0.0
    %2690 = vmatpush1.msra.mxu0 0.0
    %2691 = vmatprep.subr.mxu0 0.0
    %2692 = vmatpush1.msra.mxu0 0.0
    %2693 = vmatprep.subr.mxu0 0.0
    %2694 = vmatpush1.msra.mxu0 0.0
    %2695 = vmatprep.subr.mxu0 0.0
    %2696 = vmatpush1.msra.mxu0 0.0
    %2697 = vmatprep.subr.mxu0 0.0
    %2698 = vmatpush1.msra.mxu0 0.0
    %2699 = vmatprep.subr.mxu0 0.0
    %2700 = vmatpush1.msra.mxu0 0.0
    %2701 = vmatprep.subr.mxu0 0.0
    %2702 = vmatpush1.msra.mxu0 0.0
    %2703 = vmatprep.subr.mxu0 0.0
    %2704 = vmatpush1.msra.mxu0 0.0
    %2705 = vmatprep.subr.mxu0 0.0
    %2706 = vmatpush1.msra.mxu0 0.0
    %2707 = vmatprep.subr.mxu0 0.0
    %2708 = vmatpush1.msra.mxu0 0.0
    %2709 = vmatprep.subr.mxu0 0.0
    %2710 = vmatpush1.msra.mxu0 0.0
    %2711 = vmatprep.subr.mxu0 0.0
    %2712 = vmatpush1.msra.mxu0 0.0
    %2713 = vmatprep.subr.mxu0 0.0
    %2714 = vmatpush1.msra.mxu0 0.0
    %2715 = vmatprep.subr.mxu0 0.0
    %2716 = vmatpush1.msra.mxu0 0.0
    %2717 = vmatprep.subr.mxu0 0.0
    %2718 = vmatpush1.msra.mxu0 0.0
    %2719 = vmatprep.subr.mxu0 0.0
    %2720 = vmatpush1.msra.mxu0 0.0
    %2721 = vmatprep.subr.mxu0 0.0
    %2722 = vmatpush1.msra.mxu0 0.0
    %2723 = vmatprep.subr.mxu0 0.0
    %2724 = vmatpush1.msra.mxu0 0.0
    %2725 = vmatprep.subr.mxu0 0.0
    %2726 = vmatpush1.msra.mxu0 0.0
    %2727 = vmatprep.subr.mxu0 0.0
    %2728 = vmatpush1.msra.mxu0 0.0
    %2729 = vmatprep.mubr.f32.mxu0 0.0
    %v2730 = vand.u32 %v867, 4294901760
    %2731 = vmatmul.mubr.f32.gmra.mrb[0].mxu0 %v2730
    %v2732 = vpop.f32.mrb[0].mxu0
    %v2733 = vadd.f32 %v2660, %v2732
    %v2734 = vpop.f32.mrb[0].mxu0
    %2735 = vdwg.mxu0
    %2736 = vadd.xlane.f32.xlu0 %v2733
    %v2737 = vpop.xlane.xlu0 %2736
    %v2738 = vrot.slane %v2737, 4
    %v2739 = vadd.f32 %v2737, %v2738
    %v2740 = vrot.slane %v2739, 2
    %v2741 = vadd.f32 %v2739, %v2740
    %v2742 = vrot.slane %v2741, 1
    %v2743 = vadd.f32 %v2741, %v2742
    %v2744 = vmul.f32 %v2743, 0.125
    %2745 = vmatprep.subr.mxu0 0.0
    %v2746 = vand.u32 %v499, 4294901760
    %2747 = vmatpush1.msra.mxu0 %v2746
    %2748 = vmatprep.subr.mxu0 0.0
    %v2749 = vand.u32 %v500, 4294901760
    %2750 = vmatpush1.msra.mxu0 %v2749
    %2751 = vmatprep.subr.mxu0 0.0
    %2752 = vmatpush1.msra.mxu0 0.0
    %2753 = vmatprep.subr.mxu0 0.0
    %2754 = vmatpush1.msra.mxu0 0.0
    %2755 = vmatprep.subr.mxu0 0.0
    %2756 = vmatpush1.msra.mxu0 0.0
    %2757 = vmatprep.subr.mxu0 0.0
    %2758 = vmatpush1.msra.mxu0 0.0
    %2759 = vmatprep.subr.mxu0 0.0
    %2760 = vmatpush1.msra.mxu0 0.0
    %2761 = vmatprep.subr.mxu0 0.0
    %2762 = vmatpush1.msra.mxu0 0.0
    %2763 = vmatprep.subr.mxu0 0.0
    %2764 = vmatpush1.msra.mxu0 0.0
    %2765 = vmatprep.subr.mxu0 0.0
    %2766 = vmatpush1.msra.mxu0 0.0
    %2767 = vmatprep.subr.mxu0 0.0
    %2768 = vmatpush1.msra.mxu0 0.0
    %2769 = vmatprep.subr.mxu0 0.0
    %2770 = vmatpush1.msra.mxu0 0.0
    %2771 = vmatprep.subr.mxu0 0.0
    %2772 = vmatpush1.msra.mxu0 0.0
    %2773 = vmatprep.subr.mxu0 0.0
    %2774 = vmatpush1.msra.mxu0 0.0
    %2775 = vmatprep.subr.mxu0 0.0
    %2776 = vmatpush1.msra.mxu0 0.0
    %2777 = vmatprep.subr.mxu0 0.0
    %2778 = vmatpush1.msra.mxu0 0.0
    %2779 = vmatprep.subr.mxu0 0.0
    %2780 = vmatpush1.msra.mxu0 0.0
    %2781 = vmatprep.subr.mxu0 0.0
    %2782 = vmatpush1.msra.mxu0 0.0
    %2783 = vmatprep.subr.mxu0 0.0
    %2784 = vmatpush1.msra.mxu0 0.0
    %2785 = vmatprep.subr.mxu0 0.0
    %2786 = vmatpush1.msra.mxu0 0.0
    %2787 = vmatprep.subr.mxu0 0.0
    %2788 = vmatpush1.msra.mxu0 0.0
    %2789 = vmatprep.subr.mxu0 0.0
    %2790 = vmatpush1.msra.mxu0 0.0
    %2791 = vmatprep.subr.mxu0 0.0
    %2792 = vmatpush1.msra.mxu0 0.0
    %2793 = vmatprep.subr.mxu0 0.0
    %2794 = vmatpush1.msra.mxu0 0.0
    %2795 = vmatprep.subr.mxu0 0.0
    %2796 = vmatpush1.msra.mxu0 0.0
    %2797 = vmatprep.subr.mxu0 0.0
    %2798 = vmatpush1.msra.mxu0 0.0
    %2799 = vmatprep.subr.mxu0 0.0
    %2800 = vmatpush1.msra.mxu0 0.0
    %2801 = vmatprep.subr.mxu0 0.0
    %2802 = vmatpush1.msra.mxu0 0.0
    %2803 = vmatprep.subr.mxu0 0.0
    %2804 = vmatpush1.msra.mxu0 0.0
    %2805 = vmatprep.subr.mxu0 0.0
    %2806 = vmatpush1.msra.mxu0 0.0
    %2807 = vmatprep.subr.mxu0 0.0
    %2808 = vmatpush1.msra.mxu0 0.0
    %2809 = vmatprep.subr.mxu0 0.0
    %2810 = vmatpush1.msra.mxu0 0.0
    %2811 = vmatprep.mubr.f32.mxu0 0.0
    %v2812 = vand.u32 %v867, 4294901760
    %v2813 = vsub.f32 %v867, %v2812
    %v2814 = vand.u32 %v2813, 4294901760
    %v2815 = vsub.f32 %v2813, %v2814
    %v2816 = vand.u32 %v2815, 4294901760
    %2817 = vmatmul.mubr.f32.gmra.mrb[0].mxu0 %v2816
    %v2818 = vpop.f32.mrb[0].mxu0
    %v2819 = vadd.f32 0.0, %v2818
    %v2820 = vpop.f32.mrb[0].mxu0
    %2821 = vdwg.mxu0
    %2822 = vmatprep.subr.mxu0 0.0
    %v2823 = vand.u32 %v499, 4294901760
    %v2824 = vsub.f32 %v499, %v2823
    %v2825 = vand.u32 %v2824, 4294901760
    %v2826 = vsub.f32 %v2824, %v2825
    %v2827 = vand.u32 %v2826, 4294901760
    %2828 = vmatpush1.msra.mxu0 %v2827
    %2829 = vmatprep.subr.mxu0 0.0
    %v2830 = vand.u32 %v500, 4294901760
    %v2831 = vsub.f32 %v500, %v2830
    %v2832 = vand.u32 %v2831, 4294901760
    %v2833 = vsub.f32 %v2831, %v2832
    %v2834 = vand.u32 %v2833, 4294901760
    %2835 = vmatpush1.msra.mxu0 %v2834
    %2836 = vmatprep.subr.mxu0 0.0
    %2837 = vmatpush1.msra.mxu0 0.0
    %2838 = vmatprep.subr.mxu0 0.0
    %2839 = vmatpush1.msra.mxu0 0.0
    %2840 = vmatprep.subr.mxu0 0.0
    %2841 = vmatpush1.msra.mxu0 0.0
    %2842 = vmatprep.subr.mxu0 0.0
    %2843 = vmatpush1.msra.mxu0 0.0
    %2844 = vmatprep.subr.mxu0 0.0
    %2845 = vmatpush1.msra.mxu0 0.0
    %2846 = vmatprep.subr.mxu0 0.0
    %2847 = vmatpush1.msra.mxu0 0.0
    %2848 = vmatprep.subr.mxu0 0.0
    %2849 = vmatpush1.msra.mxu0 0.0
    %2850 = vmatprep.subr.mxu0 0.0
    %2851 = vmatpush1.msra.mxu0 0.0
    %2852 = vmatprep.subr.mxu0 0.0
    %2853 = vmatpush1.msra.mxu0 0.0
    %2854 = vmatprep.subr.mxu0 0.0
    %2855 = vmatpush1.msra.mxu0 0.0
    %2856 = vmatprep.subr.mxu0 0.0
    %2857 = vmatpush1.msra.mxu0 0.0
    %2858 = vmatprep.subr.mxu0 0.0
    %2859 = vmatpush1.msra.mxu0 0.0
    %2860 = vmatprep.subr.mxu0 0.0
    %2861 = vmatpush1.msra.mxu0 0.0
    %2862 = vmatprep.subr.mxu0 0.0
    %2863 = vmatpush1.msra.mxu0 0.0
    %2864 = vmatprep.subr.mxu0 0.0
    %2865 = vmatpush1.msra.mxu0 0.0
    %2866 = vmatprep.subr.mxu0 0.0
    %2867 = vmatpush1.msra.mxu0 0.0
    %2868 = vmatprep.subr.mxu0 0.0
    %2869 = vmatpush1.msra.mxu0 0.0
    %2870 = vmatprep.subr.mxu0 0.0
    %2871 = vmatpush1.msra.mxu0 0.0
    %2872 = vmatprep.subr.mxu0 0.0
    %2873 = vmatpush1.msra.mxu0 0.0
    %2874 = vmatprep.subr.mxu0 0.0
    %2875 = vmatpush1.msra.mxu0 0.0
    %2876 = vmatprep.subr.mxu0 0.0
    %2877 = vmatpush1.msra.mxu0 0.0
    %2878 = vmatprep.subr.mxu0 0.0
    %2879 = vmatpush1.msra.mxu0 0.0
    %2880 = vmatprep.subr.mxu0 0.0
    %2881 = vmatpush1.msra.mxu0 0.0
    %2882 = vmatprep.subr.mxu0 0.0
    %2883 = vmatpush1.msra.mxu0 0.0
    %2884 = vmatprep.subr.mxu0 0.0
    %2885 = vmatpush1.msra.mxu0 0.0
    %2886 = vmatprep.subr.mxu0 0.0
    %2887 = vmatpush1.msra.mxu0 0.0
    %2888 = vmatprep.subr.mxu0 0.0
    %2889 = vmatpush1.msra.mxu0 0.0
    %2890 = vmatprep.subr.mxu0 0.0
    %2891 = vmatpush1.msra.mxu0 0.0
    %2892 = vmatprep.subr.mxu0 0.0
    %2893 = vmatpush1.msra.mxu0 0.0
    %2894 = vmatprep.subr.mxu0 0.0
    %2895 = vmatpush1.msra.mxu0 0.0
    %2896 = vmatprep.mubr.f32.mxu0 0.0
    %v2897 = vand.u32 %v867, 4294901760
    %2898 = vmatmul.mubr.f32.gmra.mrb[0].mxu0 %v2897
    %v2899 = vpop.f32.mrb[0].mxu0
    %v2900 = vadd.f32 %v2819, %v2899
    %v2901 = vpop.f32.mrb[0].mxu0
    %2902 = vdwg.mxu0
    %2903 = vmatprep.subr.mxu0 0.0
    %v2904 = vand.u32 %v499, 4294901760
    %v2905 = vsub.f32 %v499, %v2904
    %2906 = vmatpush1.msra.mxu0 %v2905
    %2907 = vmatprep.subr.mxu0 0.0
    %v2908 = vand.u32 %v500, 4294901760
    %v2909 = vsub.f32 %v500, %v2908
    %2910 = vmatpush1.msra.mxu0 %v2909
    %2911 = vmatprep.subr.mxu0 0.0
    %2912 = vmatpush1.msra.mxu0 0.0
    %2913 = vmatprep.subr.mxu0 0.0
    %2914 = vmatpush1.msra.mxu0 0.0
    %2915 = vmatprep.subr.mxu0 0.0
    %2916 = vmatpush1.msra.mxu0 0.0
    %2917 = vmatprep.subr.mxu0 0.0
    %2918 = vmatpush1.msra.mxu0 0.0
    %2919 = vmatprep.subr.mxu0 0.0
    %2920 = vmatpush1.msra.mxu0 0.0
    %2921 = vmatprep.subr.mxu0 0.0
    %2922 = vmatpush1.msra.mxu0 0.0
    %2923 = vmatprep.subr.mxu0 0.0
    %2924 = vmatpush1.msra.mxu0 0.0
    %2925 = vmatprep.subr.mxu0 0.0
    %2926 = vmatpush1.msra.mxu0 0.0
    %2927 = vmatprep.subr.mxu0 0.0
    %2928 = vmatpush1.msra.mxu0 0.0
    %2929 = vmatprep.subr.mxu0 0.0
    %2930 = vmatpush1.msra.mxu0 0.0
    %2931 = vmatprep.subr.mxu0 0.0
    %2932 = vmatpush1.msra.mxu0 0.0
    %2933 = vmatprep.subr.mxu0 0.0
    %2934 = vmatpush1.msra.mxu0 0.0
    %2935 = vmatprep.subr.mxu0 0.0
    %2936 = vmatpush1.msra.mxu0 0.0
    %2937 = vmatprep.subr.mxu0 0.0
    %2938 = vmatpush1.msra.mxu0 0.0
    %2939 = vmatprep.subr.mxu0 0.0
    %2940 = vmatpush1.msra.mxu0 0.0
    %2941 = vmatprep.subr.mxu0 0.0
    %2942 = vmatpush1.msra.mxu0 0.0
    %2943 = vmatprep.subr.mxu0 0.0
    %2944 = vmatpush1.msra.mxu0 0.0
    %2945 = vmatprep.subr.mxu0 0.0
    %2946 = vmatpush1.msra.mxu0 0.0
    %2947 = vmatprep.subr.mxu0 0.0
    %2948 = vmatpush1.msra.mxu0 0.0
    %2949 = vmatprep.subr.mxu0 0.0
    %2950 = vmatpush1.msra.mxu0 0.0
    %2951 = vmatprep.subr.mxu0 0.0
    %2952 = vmatpush1.msra.mxu0 0.0
    %2953 = vmatprep.subr.mxu0 0.0
    %2954 = vmatpush1.msra.mxu0 0.0
    %2955 = vmatprep.subr.mxu0 0.0
    %2956 = vmatpush1.msra.mxu0 0.0
    %2957 = vmatprep.subr.mxu0 0.0
    %2958 = vmatpush1.msra.mxu0 0.0
    %2959 = vmatprep.subr.mxu0 0.0
    %2960 = vmatpush1.msra.mxu0 0.0
    %2961 = vmatprep.subr.mxu0 0.0
    %2962 = vmatpush1.msra.mxu0 0.0
    %2963 = vmatprep.subr.mxu0 0.0
    %2964 = vmatpush1.msra.mxu0 0.0
    %2965 = vmatprep.subr.mxu0 0.0
    %2966 = vmatpush1.msra.mxu0 0.0
    %2967 = vmatprep.subr.mxu0 0.0
    %2968 = vmatpush1.msra.mxu0 0.0
    %2969 = vmatprep.subr.mxu0 0.0
    %2970 = vmatpush1.msra.mxu0 0.0
    %2971 = vmatprep.mubr.f32.mxu0 0.0
    %v2972 = vand.u32 %v867, 4294901760
    %v2973 = vsub.f32 %v867, %v2972
    %2974 = vmatmul.mubr.f32.gmra.mrb[0].mxu0 %v2973
    %v2975 = vpop.f32.mrb[0].mxu0
    %v2976 = vadd.f32 %v2900, %v2975
    %v2977 = vpop.f32.mrb[0].mxu0
    %2978 = vdwg.mxu0
    %2979 = vmatprep.subr.mxu0 0.0
    %v2980 = vand.u32 %v499, 4294901760
    %2981 = vmatpush1.msra.mxu0 %v2980
    %2982 = vmatprep.subr.mxu0 0.0
    %v2983 = vand.u32 %v500, 4294901760
    %2984 = vmatpush1.msra.mxu0 %v2983
    %2985 = vmatprep.subr.mxu0 0.0
    %2986 = vmatpush1.msra.mxu0 0.0
    %2987 = vmatprep.subr.mxu0 0.0
    %2988 = vmatpush1.msra.mxu0 0.0
    %2989 = vmatprep.subr.mxu0 0.0
    %2990 = vmatpush1.msra.mxu0 0.0
    %2991 = vmatprep.subr.mxu0 0.0
    %2992 = vmatpush1.msra.mxu0 0.0
    %2993 = vmatprep.subr.mxu0 0.0
    %2994 = vmatpush1.msra.mxu0 0.0
    %2995 = vmatprep.subr.mxu0 0.0
    %2996 = vmatpush1.msra.mxu0 0.0
    %2997 = vmatprep.subr.mxu0 0.0
    %2998 = vmatpush1.msra.mxu0 0.0
    %2999 = vmatprep.subr.mxu0 0.0
    %3000 = vmatpush1.msra.mxu0 0.0
    %3001 = vmatprep.subr.mxu0 0.0
    %3002 = vmatpush1.msra.mxu0 0.0
    %3003 = vmatprep.subr.mxu0 0.0
    %3004 = vmatpush1.msra.mxu0 0.0
    %3005 = vmatprep.subr.mxu0 0.0
    %3006 = vmatpush1.msra.mxu0 0.0
    %3007 = vmatprep.subr.mxu0 0.0
    %3008 = vmatpush1.msra.mxu0 0.0
    %3009 = vmatprep.subr.mxu0 0.0
    %3010 = vmatpush1.msra.mxu0 0.0
    %3011 = vmatprep.subr.mxu0 0.0
    %3012 = vmatpush1.msra.mxu0 0.0
    %3013 = vmatprep.subr.mxu0 0.0
    %3014 = vmatpush1.msra.mxu0 0.0
    %3015 = vmatprep.subr.mxu0 0.0
    %3016 = vmatpush1.msra.mxu0 0.0
    %3017 = vmatprep.subr.mxu0 0.0
    %3018 = vmatpush1.msra.mxu0 0.0
    %3019 = vmatprep.subr.mxu0 0.0
    %3020 = vmatpush1.msra.mxu0 0.0
    %3021 = vmatprep.subr.mxu0 0.0
    %3022 = vmatpush1.msra.mxu0 0.0
    %3023 = vmatprep.subr.mxu0 0.0
    %3024 = vmatpush1.msra.mxu0 0.0
    %3025 = vmatprep.subr.mxu0 0.0
    %3026 = vmatpush1.msra.mxu0 0.0
    %3027 = vmatprep.subr.mxu0 0.0
    %3028 = vmatpush1.msra.mxu0 0.0
    %3029 = vmatprep.subr.mxu0 0.0
    %3030 = vmatpush1.msra.mxu0 0.0
    %3031 = vmatprep.subr.mxu0 0.0
    %3032 = vmatpush1.msra.mxu0 0.0
    %3033 = vmatprep.subr.mxu0 0.0
    %3034 = vmatpush1.msra.mxu0 0.0
    %3035 = vmatprep.subr.mxu0 0.0
    %3036 = vmatpush1.msra.mxu0 0.0
    %3037 = vmatprep.subr.mxu0 0.0
    %3038 = vmatpush1.msra.mxu0 0.0
    %3039 = vmatprep.subr.mxu0 0.0
    %3040 = vmatpush1.msra.mxu0 0.0
    %3041 = vmatprep.subr.mxu0 0.0
    %3042 = vmatpush1.msra.mxu0 0.0
    %3043 = vmatprep.subr.mxu0 0.0
    %3044 = vmatpush1.msra.mxu0 0.0
    %3045 = vmatprep.mubr.f32.mxu0 0.0
    %v3046 = vand.u32 %v867, 4294901760
    %v3047 = vsub.f32 %v867, %v3046
    %v3048 = vand.u32 %v3047, 4294901760
    %3049 = vmatmul.mubr.f32.gmra.mrb[0].mxu0 %v3048
    %v3050 = vpop.f32.mrb[0].mxu0
    %v3051 = vadd.f32 %v2976, %v3050
    %v3052 = vpop.f32.mrb[0].mxu0
    %3053 = vdwg.mxu0
    %3054 = vmatprep.subr.mxu0 0.0
    %v3055 = vand.u32 %v499, 4294901760
    %v3056 = vsub.f32 %v499, %v3055
    %v3057 = vand.u32 %v3056, 4294901760
    %3058 = vmatpush1.msra.mxu0 %v3057
    %3059 = vmatprep.subr.mxu0 0.0
    %v3060 = vand.u32 %v500, 4294901760
    %v3061 = vsub.f32 %v500, %v3060
    %v3062 = vand.u32 %v3061, 4294901760
    %3063 = vmatpush1.msra.mxu0 %v3062
    %3064 = vmatprep.subr.mxu0 0.0
    %3065 = vmatpush1.msra.mxu0 0.0
    %3066 = vmatprep.subr.mxu0 0.0
    %3067 = vmatpush1.msra.mxu0 0.0
    %3068 = vmatprep.subr.mxu0 0.0
    %3069 = vmatpush1.msra.mxu0 0.0
    %3070 = vmatprep.subr.mxu0 0.0
    %3071 = vmatpush1.msra.mxu0 0.0
    %3072 = vmatprep.subr.mxu0 0.0
    %3073 = vmatpush1.msra.mxu0 0.0
    %3074 = vmatprep.subr.mxu0 0.0
    %3075 = vmatpush1.msra.mxu0 0.0
    %3076 = vmatprep.subr.mxu0 0.0
    %3077 = vmatpush1.msra.mxu0 0.0
    %3078 = vmatprep.subr.mxu0 0.0
    %3079 = vmatpush1.msra.mxu0 0.0
    %3080 = vmatprep.subr.mxu0 0.0
    %3081 = vmatpush1.msra.mxu0 0.0
    %3082 = vmatprep.subr.mxu0 0.0
    %3083 = vmatpush1.msra.mxu0 0.0
    %3084 = vmatprep.subr.mxu0 0.0
    %3085 = vmatpush1.msra.mxu0 0.0
    %3086 = vmatprep.subr.mxu0 0.0
    %3087 = vmatpush1.msra.mxu0 0.0
    %3088 = vmatprep.subr.mxu0 0.0
    %3089 = vmatpush1.msra.mxu0 0.0
    %3090 = vmatprep.subr.mxu0 0.0
    %3091 = vmatpush1.msra.mxu0 0.0
    %3092 = vmatprep.subr.mxu0 0.0
    %3093 = vmatpush1.msra.mxu0 0.0
    %3094 = vmatprep.subr.mxu0 0.0
    %3095 = vmatpush1.msra.mxu0 0.0
    %3096 = vmatprep.subr.mxu0 0.0
    %3097 = vmatpush1.msra.mxu0 0.0
    %3098 = vmatprep.subr.mxu0 0.0
    %3099 = vmatpush1.msra.mxu0 0.0
    %3100 = vmatprep.subr.mxu0 0.0
    %3101 = vmatpush1.msra.mxu0 0.0
    %3102 = vmatprep.subr.mxu0 0.0
    %3103 = vmatpush1.msra.mxu0 0.0
    %3104 = vmatprep.subr.mxu0 0.0
    %3105 = vmatpush1.msra.mxu0 0.0
    %3106 = vmatprep.subr.mxu0 0.0
    %3107 = vmatpush1.msra.mxu0 0.0
    %3108 = vmatprep.subr.mxu0 0.0
    %3109 = vmatpush1.msra.mxu0 0.0
    %3110 = vmatprep.subr.mxu0 0.0
    %3111 = vmatpush1.msra.mxu0 0.0
    %3112 = vmatprep.subr.mxu0 0.0
    %3113 = vmatpush1.msra.mxu0 0.0
    %3114 = vmatprep.subr.mxu0 0.0
    %3115 = vmatpush1.msra.mxu0 0.0
    %3116 = vmatprep.subr.mxu0 0.0
    %3117 = vmatpush1.msra.mxu0 0.0
    %3118 = vmatprep.subr.mxu0 0.0
    %3119 = vmatpush1.msra.mxu0 0.0
    %3120 = vmatprep.subr.mxu0 0.0
    %3121 = vmatpush1.msra.mxu0 0.0
    %3122 = vmatprep.subr.mxu0 0.0
    %3123 = vmatpush1.msra.mxu0 0.0
    %3124 = vmatprep.mubr.f32.mxu0 0.0
    %v3125 = vand.u32 %v867, 4294901760
    %3126 = vmatmul.mubr.f32.gmra.mrb[0].mxu0 %v3125
    %v3127 = vpop.f32.mrb[0].mxu0
    %v3128 = vadd.f32 %v3051, %v3127
    %v3129 = vpop.f32.mrb[0].mxu0
    %3130 = vdwg.mxu0
    %3131 = vmatprep.subr.mxu0 0.0
    %v3132 = vand.u32 %v499, 4294901760
    %3133 = vmatpush1.msra.mxu0 %v3132
    %3134 = vmatprep.subr.mxu0 0.0
    %v3135 = vand.u32 %v500, 4294901760
    %3136 = vmatpush1.msra.mxu0 %v3135
    %3137 = vmatprep.subr.mxu0 0.0
    %3138 = vmatpush1.msra.mxu0 0.0
    %3139 = vmatprep.subr.mxu0 0.0
    %3140 = vmatpush1.msra.mxu0 0.0
    %3141 = vmatprep.subr.mxu0 0.0
    %3142 = vmatpush1.msra.mxu0 0.0
    %3143 = vmatprep.subr.mxu0 0.0
    %3144 = vmatpush1.msra.mxu0 0.0
    %3145 = vmatprep.subr.mxu0 0.0
    %3146 = vmatpush1.msra.mxu0 0.0
    %3147 = vmatprep.subr.mxu0 0.0
    %3148 = vmatpush1.msra.mxu0 0.0
    %3149 = vmatprep.subr.mxu0 0.0
    %3150 = vmatpush1.msra.mxu0 0.0
    %3151 = vmatprep.subr.mxu0 0.0
    %3152 = vmatpush1.msra.mxu0 0.0
    %3153 = vmatprep.subr.mxu0 0.0
    %3154 = vmatpush1.msra.mxu0 0.0
    %3155 = vmatprep.subr.mxu0 0.0
    %3156 = vmatpush1.msra.mxu0 0.0
    %3157 = vmatprep.subr.mxu0 0.0
    %3158 = vmatpush1.msra.mxu0 0.0
    %3159 = vmatprep.subr.mxu0 0.0
    %3160 = vmatpush1.msra.mxu0 0.0
    %3161 = vmatprep.subr.mxu0 0.0
    %3162 = vmatpush1.msra.mxu0 0.0
    %3163 = vmatprep.subr.mxu0 0.0
    %3164 = vmatpush1.msra.mxu0 0.0
    %3165 = vmatprep.subr.mxu0 0.0
    %3166 = vmatpush1.msra.mxu0 0.0
    %3167 = vmatprep.subr.mxu0 0.0
    %3168 = vmatpush1.msra.mxu0 0.0
    %3169 = vmatprep.subr.mxu0 0.0
    %3170 = vmatpush1.msra.mxu0 0.0
    %3171 = vmatprep.subr.mxu0 0.0
    %3172 = vmatpush1.msra.mxu0 0.0
    %3173 = vmatprep.subr.mxu0 0.0
    %3174 = vmatpush1.msra.mxu0 0.0
    %3175 = vmatprep.subr.mxu0 0.0
    %3176 = vmatpush1.msra.mxu0 0.0
    %3177 = vmatprep.subr.mxu0 0.0
    %3178 = vmatpush1.msra.mxu0 0.0
    %3179 = vmatprep.subr.mxu0 0.0
    %3180 = vmatpush1.msra.mxu0 0.0
    %3181 = vmatprep.subr.mxu0 0.0
    %3182 = vmatpush1.msra.mxu0 0.0
    %3183 = vmatprep.subr.mxu0 0.0
    %3184 = vmatpush1.msra.mxu0 0.0
    %3185 = vmatprep.subr.mxu0 0.0
    %3186 = vmatpush1.msra.mxu0 0.0
    %3187 = vmatprep.subr.mxu0 0.0
    %3188 = vmatpush1.msra.mxu0 0.0
    %3189 = vmatprep.subr.mxu0 0.0
    %3190 = vmatpush1.msra.mxu0 0.0
    %3191 = vmatprep.subr.mxu0 0.0
    %3192 = vmatpush1.msra.mxu0 0.0
    %3193 = vmatprep.subr.mxu0 0.0
    %3194 = vmatpush1.msra.mxu0 0.0
    %3195 = vmatprep.subr.mxu0 0.0
    %3196 = vmatpush1.msra.mxu0 0.0
    %3197 = vmatprep.mubr.f32.mxu0 0.0
    %v3198 = vand.u32 %v867, 4294901760
    %3199 = vmatmul.mubr.f32.gmra.mrb[0].mxu0 %v3198
    %v3200 = vpop.f32.mrb[0].mxu0
    %v3201 = vadd.f32 %v3128, %v3200
    %v3202 = vpop.f32.mrb[0].mxu0
    %3203 = vdwg.mxu0
    %3204 = vadd.xlane.f32.xlu0 %v3201
    %v3205 = vpop.xlane.xlu0 %3204
    %v3206 = vrot.slane %v3205, 4
    %v3207 = vadd.f32 %v3205, %v3206
    %v3208 = vrot.slane %v3207, 2
    %v3209 = vadd.f32 %v3207, %v3208
    %v3210 = vrot.slane %v3209, 1
    %v3211 = vadd.f32 %v3209, %v3210
    %v3212 = vmul.f32 %v3211, 0.125
    %3213 = vmatprep.subr.mxu0 0.0
    %v3214 = vand.u32 %v507, 4294901760
    %3215 = vmatpush1.msra.mxu0 %v3214
    %3216 = vmatprep.subr.mxu0 0.0
    %v3217 = vand.u32 %v508, 4294901760
    %3218 = vmatpush1.msra.mxu0 %v3217
    %3219 = vmatprep.subr.mxu0 0.0
    %3220 = vmatpush1.msra.mxu0 0.0
    %3221 = vmatprep.subr.mxu0 0.0
    %3222 = vmatpush1.msra.mxu0 0.0
    %3223 = vmatprep.subr.mxu0 0.0
    %3224 = vmatpush1.msra.mxu0 0.0
    %3225 = vmatprep.subr.mxu0 0.0
    %3226 = vmatpush1.msra.mxu0 0.0
    %3227 = vmatprep.subr.mxu0 0.0
    %3228 = vmatpush1.msra.mxu0 0.0
    %3229 = vmatprep.subr.mxu0 0.0
    %3230 = vmatpush1.msra.mxu0 0.0
    %3231 = vmatprep.subr.mxu0 0.0
    %3232 = vmatpush1.msra.mxu0 0.0
    %3233 = vmatprep.subr.mxu0 0.0
    %3234 = vmatpush1.msra.mxu0 0.0
    %3235 = vmatprep.subr.mxu0 0.0
    %3236 = vmatpush1.msra.mxu0 0.0
    %3237 = vmatprep.subr.mxu0 0.0
    %3238 = vmatpush1.msra.mxu0 0.0
    %3239 = vmatprep.subr.mxu0 0.0
    %3240 = vmatpush1.msra.mxu0 0.0
    %3241 = vmatprep.subr.mxu0 0.0
    %3242 = vmatpush1.msra.mxu0 0.0
    %3243 = vmatprep.subr.mxu0 0.0
    %3244 = vmatpush1.msra.mxu0 0.0
    %3245 = vmatprep.subr.mxu0 0.0
    %3246 = vmatpush1.msra.mxu0 0.0
    %3247 = vmatprep.subr.mxu0 0.0
    %3248 = vmatpush1.msra.mxu0 0.0
    %3249 = vmatprep.subr.mxu0 0.0
    %3250 = vmatpush1.msra.mxu0 0.0
    %3251 = vmatprep.subr.mxu0 0.0
    %3252 = vmatpush1.msra.mxu0 0.0
    %3253 = vmatprep.subr.mxu0 0.0
    %3254 = vmatpush1.msra.mxu0 0.0
    %3255 = vmatprep.subr.mxu0 0.0
    %3256 = vmatpush1.msra.mxu0 0.0
    %3257 = vmatprep.subr.mxu0 0.0
    %3258 = vmatpush1.msra.mxu0 0.0
    %3259 = vmatprep.subr.mxu0 0.0
    %3260 = vmatpush1.msra.mxu0 0.0
    %3261 = vmatprep.subr.mxu0 0.0
    %3262 = vmatpush1.msra.mxu0 0.0
    %3263 = vmatprep.subr.mxu0 0.0
    %3264 = vmatpush1.msra.mxu0 0.0
    %3265 = vmatprep.subr.mxu0 0.0
    %3266 = vmatpush1.msra.mxu0 0.0
    %3267 = vmatprep.subr.mxu0 0.0
    %3268 = vmatpush1.msra.mxu0 0.0
    %3269 = vmatprep.subr.mxu0 0.0
    %3270 = vmatpush1.msra.mxu0 0.0
    %3271 = vmatprep.subr.mxu0 0.0
    %3272 = vmatpush1.msra.mxu0 0.0
    %3273 = vmatprep.subr.mxu0 0.0
    %3274 = vmatpush1.msra.mxu0 0.0
    %3275 = vmatprep.subr.mxu0 0.0
    %3276 = vmatpush1.msra.mxu0 0.0
    %3277 = vmatprep.subr.mxu0 0.0
    %3278 = vmatpush1.msra.mxu0 0.0
    %3279 = vmatprep.mubr.f32.mxu0 0.0
    %v3280 = vand.u32 %v867, 4294901760
    %v3281 = vsub.f32 %v867, %v3280
    %v3282 = vand.u32 %v3281, 4294901760
    %v3283 = vsub.f32 %v3281, %v3282
    %v3284 = vand.u32 %v3283, 4294901760
    %3285 = vmatmul.mubr.f32.gmra.mrb[0].mxu0 %v3284
    %v3286 = vpop.f32.mrb[0].mxu0
    %v3287 = vadd.f32 0.0, %v3286
    %v3288 = vpop.f32.mrb[0].mxu0
    %3289 = vdwg.mxu0
    %3290 = vmatprep.subr.mxu0 0.0
    %v3291 = vand.u32 %v507, 4294901760
    %v3292 = vsub.f32 %v507, %v3291
    %v3293 = vand.u32 %v3292, 4294901760
    %v3294 = vsub.f32 %v3292, %v3293
    %v3295 = vand.u32 %v3294, 4294901760
    %3296 = vmatpush1.msra.mxu0 %v3295
    %3297 = vmatprep.subr.mxu0 0.0
    %v3298 = vand.u32 %v508, 4294901760
    %v3299 = vsub.f32 %v508, %v3298
    %v3300 = vand.u32 %v3299, 4294901760
    %v3301 = vsub.f32 %v3299, %v3300
    %v3302 = vand.u32 %v3301, 4294901760
    %3303 = vmatpush1.msra.mxu0 %v3302
    %3304 = vmatprep.subr.mxu0 0.0
    %3305 = vmatpush1.msra.mxu0 0.0
    %3306 = vmatprep.subr.mxu0 0.0
    %3307 = vmatpush1.msra.mxu0 0.0
    %3308 = vmatprep.subr.mxu0 0.0
    %3309 = vmatpush1.msra.mxu0 0.0
    %3310 = vmatprep.subr.mxu0 0.0
    %3311 = vmatpush1.msra.mxu0 0.0
    %3312 = vmatprep.subr.mxu0 0.0
    %3313 = vmatpush1.msra.mxu0 0.0
    %3314 = vmatprep.subr.mxu0 0.0
    %3315 = vmatpush1.msra.mxu0 0.0
    %3316 = vmatprep.subr.mxu0 0.0
    %3317 = vmatpush1.msra.mxu0 0.0
    %3318 = vmatprep.subr.mxu0 0.0
    %3319 = vmatpush1.msra.mxu0 0.0
    %3320 = vmatprep.subr.mxu0 0.0
    %3321 = vmatpush1.msra.mxu0 0.0
    %3322 = vmatprep.subr.mxu0 0.0
    %3323 = vmatpush1.msra.mxu0 0.0
    %3324 = vmatprep.subr.mxu0 0.0
    %3325 = vmatpush1.msra.mxu0 0.0
    %3326 = vmatprep.subr.mxu0 0.0
    %3327 = vmatpush1.msra.mxu0 0.0
    %3328 = vmatprep.subr.mxu0 0.0
    %3329 = vmatpush1.msra.mxu0 0.0
    %3330 = vmatprep.subr.mxu0 0.0
    %3331 = vmatpush1.msra.mxu0 0.0
    %3332 = vmatprep.subr.mxu0 0.0
    %3333 = vmatpush1.msra.mxu0 0.0
    %3334 = vmatprep.subr.mxu0 0.0
    %3335 = vmatpush1.msra.mxu0 0.0
    %3336 = vmatprep.subr.mxu0 0.0
    %3337 = vmatpush1.msra.mxu0 0.0
    %3338 = vmatprep.subr.mxu0 0.0
    %3339 = vmatpush1.msra.mxu0 0.0
    %3340 = vmatprep.subr.mxu0 0.0
    %3341 = vmatpush1.msra.mxu0 0.0
    %3342 = vmatprep.subr.mxu0 0.0
    %3343 = vmatpush1.msra.mxu0 0.0
    %3344 = vmatprep.subr.mxu0 0.0
    %3345 = vmatpush1.msra.mxu0 0.0
    %3346 = vmatprep.subr.mxu0 0.0
    %3347 = vmatpush1.msra.mxu0 0.0
    %3348 = vmatprep.subr.mxu0 0.0
    %3349 = vmatpush1.msra.mxu0 0.0
    %3350 = vmatprep.subr.mxu0 0.0
    %3351 = vmatpush1.msra.mxu0 0.0
    %3352 = vmatprep.subr.mxu0 0.0
    %3353 = vmatpush1.msra.mxu0 0.0
    %3354 = vmatprep.subr.mxu0 0.0
    %3355 = vmatpush1.msra.mxu0 0.0
    %3356 = vmatprep.subr.mxu0 0.0
    %3357 = vmatpush1.msra.mxu0 0.0
    %3358 = vmatprep.subr.mxu0 0.0
    %3359 = vmatpush1.msra.mxu0 0.0
    %3360 = vmatprep.subr.mxu0 0.0
    %3361 = vmatpush1.msra.mxu0 0.0
    %3362 = vmatprep.subr.mxu0 0.0
    %3363 = vmatpush1.msra.mxu0 0.0
    %3364 = vmatprep.mubr.f32.mxu0 0.0
    %v3365 = vand.u32 %v867, 4294901760
    %3366 = vmatmul.mubr.f32.gmra.mrb[0].mxu0 %v3365
    %v3367 = vpop.f32.mrb[0].mxu0
    %v3368 = vadd.f32 %v3287, %v3367
    %v3369 = vpop.f32.mrb[0].mxu0
    %3370 = vdwg.mxu0
    %3371 = vmatprep.subr.mxu0 0.0
    %v3372 = vand.u32 %v507, 4294901760
    %v3373 = vsub.f32 %v507, %v3372
    %3374 = vmatpush1.msra.mxu0 %v3373
    %3375 = vmatprep.subr.mxu0 0.0
    %v3376 = vand.u32 %v508, 4294901760
    %v3377 = vsub.f32 %v508, %v3376
    %3378 = vmatpush1.msra.mxu0 %v3377
    %3379 = vmatprep.subr.mxu0 0.0
    %3380 = vmatpush1.msra.mxu0 0.0
    %3381 = vmatprep.subr.mxu0 0.0
    %3382 = vmatpush1.msra.mxu0 0.0
    %3383 = vmatprep.subr.mxu0 0.0
    %3384 = vmatpush1.msra.mxu0 0.0
    %3385 = vmatprep.subr.mxu0 0.0
    %3386 = vmatpush1.msra.mxu0 0.0
    %3387 = vmatprep.subr.mxu0 0.0
    %3388 = vmatpush1.msra.mxu0 0.0
    %3389 = vmatprep.subr.mxu0 0.0
    %3390 = vmatpush1.msra.mxu0 0.0
    %3391 = vmatprep.subr.mxu0 0.0
    %3392 = vmatpush1.msra.mxu0 0.0
    %3393 = vmatprep.subr.mxu0 0.0
    %3394 = vmatpush1.msra.mxu0 0.0
    %3395 = vmatprep.subr.mxu0 0.0
    %3396 = vmatpush1.msra.mxu0 0.0
    %3397 = vmatprep.subr.mxu0 0.0
    %3398 = vmatpush1.msra.mxu0 0.0
    %3399 = vmatprep.subr.mxu0 0.0
    %3400 = vmatpush1.msra.mxu0 0.0
    %3401 = vmatprep.subr.mxu0 0.0
    %3402 = vmatpush1.msra.mxu0 0.0
    %3403 = vmatprep.subr.mxu0 0.0
    %3404 = vmatpush1.msra.mxu0 0.0
    %3405 = vmatprep.subr.mxu0 0.0
    %3406 = vmatpush1.msra.mxu0 0.0
    %3407 = vmatprep.subr.mxu0 0.0
    %3408 = vmatpush1.msra.mxu0 0.0
    %3409 = vmatprep.subr.mxu0 0.0
    %3410 = vmatpush1.msra.mxu0 0.0
    %3411 = vmatprep.subr.mxu0 0.0
    %3412 = vmatpush1.msra.mxu0 0.0
    %3413 = vmatprep.subr.mxu0 0.0
    %3414 = vmatpush1.msra.mxu0 0.0
    %3415 = vmatprep.subr.mxu0 0.0
    %3416 = vmatpush1.msra.mxu0 0.0
    %3417 = vmatprep.subr.mxu0 0.0
    %3418 = vmatpush1.msra.mxu0 0.0
    %3419 = vmatprep.subr.mxu0 0.0
    %3420 = vmatpush1.msra.mxu0 0.0
    %3421 = vmatprep.subr.mxu0 0.0
    %3422 = vmatpush1.msra.mxu0 0.0
    %3423 = vmatprep.subr.mxu0 0.0
    %3424 = vmatpush1.msra.mxu0 0.0
    %3425 = vmatprep.subr.mxu0 0.0
    %3426 = vmatpush1.msra.mxu0 0.0
    %3427 = vmatprep.subr.mxu0 0.0
    %3428 = vmatpush1.msra.mxu0 0.0
    %3429 = vmatprep.subr.mxu0 0.0
    %3430 = vmatpush1.msra.mxu0 0.0
    %3431 = vmatprep.subr.mxu0 0.0
    %3432 = vmatpush1.msra.mxu0 0.0
    %3433 = vmatprep.subr.mxu0 0.0
    %3434 = vmatpush1.msra.mxu0 0.0
    %3435 = vmatprep.subr.mxu0 0.0
    %3436 = vmatpush1.msra.mxu0 0.0
    %3437 = vmatprep.subr.mxu0 0.0
    %3438 = vmatpush1.msra.mxu0 0.0
    %3439 = vmatprep.mubr.f32.mxu0 0.0
    %v3440 = vand.u32 %v867, 4294901760
    %v3441 = vsub.f32 %v867, %v3440
    %3442 = vmatmul.mubr.f32.gmra.mrb[0].mxu0 %v3441
    %v3443 = vpop.f32.mrb[0].mxu0
    %v3444 = vadd.f32 %v3368, %v3443
    %v3445 = vpop.f32.mrb[0].mxu0
    %3446 = vdwg.mxu0
    %3447 = vmatprep.subr.mxu0 0.0
    %v3448 = vand.u32 %v507, 4294901760
    %3449 = vmatpush1.msra.mxu0 %v3448
    %3450 = vmatprep.subr.mxu0 0.0
    %v3451 = vand.u32 %v508, 4294901760
    %3452 = vmatpush1.msra.mxu0 %v3451
    %3453 = vmatprep.subr.mxu0 0.0
    %3454 = vmatpush1.msra.mxu0 0.0
    %3455 = vmatprep.subr.mxu0 0.0
    %3456 = vmatpush1.msra.mxu0 0.0
    %3457 = vmatprep.subr.mxu0 0.0
    %3458 = vmatpush1.msra.mxu0 0.0
    %3459 = vmatprep.subr.mxu0 0.0
    %3460 = vmatpush1.msra.mxu0 0.0
    %3461 = vmatprep.subr.mxu0 0.0
    %3462 = vmatpush1.msra.mxu0 0.0
    %3463 = vmatprep.subr.mxu0 0.0
    %3464 = vmatpush1.msra.mxu0 0.0
    %3465 = vmatprep.subr.mxu0 0.0
    %3466 = vmatpush1.msra.mxu0 0.0
    %3467 = vmatprep.subr.mxu0 0.0
    %3468 = vmatpush1.msra.mxu0 0.0
    %3469 = vmatprep.subr.mxu0 0.0
    %3470 = vmatpush1.msra.mxu0 0.0
    %3471 = vmatprep.subr.mxu0 0.0
    %3472 = vmatpush1.msra.mxu0 0.0
    %3473 = vmatprep.subr.mxu0 0.0
    %3474 = vmatpush1.msra.mxu0 0.0
    %3475 = vmatprep.subr.mxu0 0.0
    %3476 = vmatpush1.msra.mxu0 0.0
    %3477 = vmatprep.subr.mxu0 0.0
    %3478 = vmatpush1.msra.mxu0 0.0
    %3479 = vmatprep.subr.mxu0 0.0
    %3480 = vmatpush1.msra.mxu0 0.0
    %3481 = vmatprep.subr.mxu0 0.0
    %3482 = vmatpush1.msra.mxu0 0.0
    %3483 = vmatprep.subr.mxu0 0.0
    %3484 = vmatpush1.msra.mxu0 0.0
    %3485 = vmatprep.subr.mxu0 0.0
    %3486 = vmatpush1.msra.mxu0 0.0
    %3487 = vmatprep.subr.mxu0 0.0
    %3488 = vmatpush1.msra.mxu0 0.0
    %3489 = vmatprep.subr.mxu0 0.0
    %3490 = vmatpush1.msra.mxu0 0.0
    %3491 = vmatprep.subr.mxu0 0.0
    %3492 = vmatpush1.msra.mxu0 0.0
    %3493 = vmatprep.subr.mxu0 0.0
    %3494 = vmatpush1.msra.mxu0 0.0
    %3495 = vmatprep.subr.mxu0 0.0
    %3496 = vmatpush1.msra.mxu0 0.0
    %3497 = vmatprep.subr.mxu0 0.0
    %3498 = vmatpush1.msra.mxu0 0.0
    %3499 = vmatprep.subr.mxu0 0.0
    %3500 = vmatpush1.msra.mxu0 0.0
    %3501 = vmatprep.subr.mxu0 0.0
    %3502 = vmatpush1.msra.mxu0 0.0
    %3503 = vmatprep.subr.mxu0 0.0
    %3504 = vmatpush1.msra.mxu0 0.0
    %3505 = vmatprep.subr.mxu0 0.0
    %3506 = vmatpush1.msra.mxu0 0.0
    %3507 = vmatprep.subr.mxu0 0.0
    %3508 = vmatpush1.msra.mxu0 0.0
    %3509 = vmatprep.subr.mxu0 0.0
    %3510 = vmatpush1.msra.mxu0 0.0
    %3511 = vmatprep.subr.mxu0 0.0
    %3512 = vmatpush1.msra.mxu0 0.0
    %3513 = vmatprep.mubr.f32.mxu0 0.0
    %v3514 = vand.u32 %v867, 4294901760
    %v3515 = vsub.f32 %v867, %v3514
    %v3516 = vand.u32 %v3515, 4294901760
    %3517 = vmatmul.mubr.f32.gmra.mrb[0].mxu0 %v3516
    %v3518 = vpop.f32.mrb[0].mxu0
    %v3519 = vadd.f32 %v3444, %v3518
    %v3520 = vpop.f32.mrb[0].mxu0
    %3521 = vdwg.mxu0
    %3522 = vmatprep.subr.mxu0 0.0
    %v3523 = vand.u32 %v507, 4294901760
    %v3524 = vsub.f32 %v507, %v3523
    %v3525 = vand.u32 %v3524, 4294901760
    %3526 = vmatpush1.msra.mxu0 %v3525
    %3527 = vmatprep.subr.mxu0 0.0
    %v3528 = vand.u32 %v508, 4294901760
    %v3529 = vsub.f32 %v508, %v3528
    %v3530 = vand.u32 %v3529, 4294901760
    %3531 = vmatpush1.msra.mxu0 %v3530
    %3532 = vmatprep.subr.mxu0 0.0
    %3533 = vmatpush1.msra.mxu0 0.0
    %3534 = vmatprep.subr.mxu0 0.0
    %3535 = vmatpush1.msra.mxu0 0.0
    %3536 = vmatprep.subr.mxu0 0.0
    %3537 = vmatpush1.msra.mxu0 0.0
    %3538 = vmatprep.subr.mxu0 0.0
    %3539 = vmatpush1.msra.mxu0 0.0
    %3540 = vmatprep.subr.mxu0 0.0
    %3541 = vmatpush1.msra.mxu0 0.0
    %3542 = vmatprep.subr.mxu0 0.0
    %3543 = vmatpush1.msra.mxu0 0.0
    %3544 = vmatprep.subr.mxu0 0.0
    %3545 = vmatpush1.msra.mxu0 0.0
    %3546 = vmatprep.subr.mxu0 0.0
    %3547 = vmatpush1.msra.mxu0 0.0
    %3548 = vmatprep.subr.mxu0 0.0
    %3549 = vmatpush1.msra.mxu0 0.0
    %3550 = vmatprep.subr.mxu0 0.0
    %3551 = vmatpush1.msra.mxu0 0.0
    %3552 = vmatprep.subr.mxu0 0.0
    %3553 = vmatpush1.msra.mxu0 0.0
    %3554 = vmatprep.subr.mxu0 0.0
    %3555 = vmatpush1.msra.mxu0 0.0
    %3556 = vmatprep.subr.mxu0 0.0
    %3557 = vmatpush1.msra.mxu0 0.0
    %3558 = vmatprep.subr.mxu0 0.0
    %3559 = vmatpush1.msra.mxu0 0.0
    %3560 = vmatprep.subr.mxu0 0.0
    %3561 = vmatpush1.msra.mxu0 0.0
    %3562 = vmatprep.subr.mxu0 0.0
    %3563 = vmatpush1.msra.mxu0 0.0
    %3564 = vmatprep.subr.mxu0 0.0
    %3565 = vmatpush1.msra.mxu0 0.0
    %3566 = vmatprep.subr.mxu0 0.0
    %3567 = vmatpush1.msra.mxu0 0.0
    %3568 = vmatprep.subr.mxu0 0.0
    %3569 = vmatpush1.msra.mxu0 0.0
    %3570 = vmatprep.subr.mxu0 0.0
    %3571 = vmatpush1.msra.mxu0 0.0
    %3572 = vmatprep.subr.mxu0 0.0
    %3573 = vmatpush1.msra.mxu0 0.0
    %3574 = vmatprep.subr.mxu0 0.0
    %3575 = vmatpush1.msra.mxu0 0.0
    %3576 = vmatprep.subr.mxu0 0.0
    %3577 = vmatpush1.msra.mxu0 0.0
    %3578 = vmatprep.subr.mxu0 0.0
    %3579 = vmatpush1.msra.mxu0 0.0
    %3580 = vmatprep.subr.mxu0 0.0
    %3581 = vmatpush1.msra.mxu0 0.0
    %3582 = vmatprep.subr.mxu0 0.0
    %3583 = vmatpush1.msra.mxu0 0.0
    %3584 = vmatprep.subr.mxu0 0.0
    %3585 = vmatpush1.msra.mxu0 0.0
    %3586 = vmatprep.subr.mxu0 0.0
    %3587 = vmatpush1.msra.mxu0 0.0
    %3588 = vmatprep.subr.mxu0 0.0
    %3589 = vmatpush1.msra.mxu0 0.0
    %3590 = vmatprep.subr.mxu0 0.0
    %3591 = vmatpush1.msra.mxu0 0.0
    %3592 = vmatprep.mubr.f32.mxu0 0.0
    %v3593 = vand.u32 %v867, 4294901760
    %3594 = vmatmul.mubr.f32.gmra.mrb[0].mxu0 %v3593
    %v3595 = vpop.f32.mrb[0].mxu0
    %v3596 = vadd.f32 %v3519, %v3595
    %v3597 = vpop.f32.mrb[0].mxu0
    %3598 = vdwg.mxu0
    %3599 = vmatprep.subr.mxu0 0.0
    %v3600 = vand.u32 %v507, 4294901760
    %3601 = vmatpush1.msra.mxu0 %v3600
    %3602 = vmatprep.subr.mxu0 0.0
    %v3603 = vand.u32 %v508, 4294901760
    %3604 = vmatpush1.msra.mxu0 %v3603
    %3605 = vmatprep.subr.mxu0 0.0
    %3606 = vmatpush1.msra.mxu0 0.0
    %3607 = vmatprep.subr.mxu0 0.0
    %3608 = vmatpush1.msra.mxu0 0.0
    %3609 = vmatprep.subr.mxu0 0.0
    %3610 = vmatpush1.msra.mxu0 0.0
    %3611 = vmatprep.subr.mxu0 0.0
    %3612 = vmatpush1.msra.mxu0 0.0
    %3613 = vmatprep.subr.mxu0 0.0
    %3614 = vmatpush1.msra.mxu0 0.0
    %3615 = vmatprep.subr.mxu0 0.0
    %3616 = vmatpush1.msra.mxu0 0.0
    %3617 = vmatprep.subr.mxu0 0.0
    %3618 = vmatpush1.msra.mxu0 0.0
    %3619 = vmatprep.subr.mxu0 0.0
    %3620 = vmatpush1.msra.mxu0 0.0
    %3621 = vmatprep.subr.mxu0 0.0
    %3622 = vmatpush1.msra.mxu0 0.0
    %3623 = vmatprep.subr.mxu0 0.0
    %3624 = vmatpush1.msra.mxu0 0.0
    %3625 = vmatprep.subr.mxu0 0.0
    %3626 = vmatpush1.msra.mxu0 0.0
    %3627 = vmatprep.subr.mxu0 0.0
    %3628 = vmatpush1.msra.mxu0 0.0
    %3629 = vmatprep.subr.mxu0 0.0
    %3630 = vmatpush1.msra.mxu0 0.0
    %3631 = vmatprep.subr.mxu0 0.0
    %3632 = vmatpush1.msra.mxu0 0.0
    %3633 = vmatprep.subr.mxu0 0.0
    %3634 = vmatpush1.msra.mxu0 0.0
    %3635 = vmatprep.subr.mxu0 0.0
    %3636 = vmatpush1.msra.mxu0 0.0
    %3637 = vmatprep.subr.mxu0 0.0
    %3638 = vmatpush1.msra.mxu0 0.0
    %3639 = vmatprep.subr.mxu0 0.0
    %3640 = vmatpush1.msra.mxu0 0.0
    %3641 = vmatprep.subr.mxu0 0.0
    %3642 = vmatpush1.msra.mxu0 0.0
    %3643 = vmatprep.subr.mxu0 0.0
    %3644 = vmatpush1.msra.mxu0 0.0
    %3645 = vmatprep.subr.mxu0 0.0
    %3646 = vmatpush1.msra.mxu0 0.0
    %3647 = vmatprep.subr.mxu0 0.0
    %3648 = vmatpush1.msra.mxu0 0.0
    %3649 = vmatprep.subr.mxu0 0.0
    %3650 = vmatpush1.msra.mxu0 0.0
    %3651 = vmatprep.subr.mxu0 0.0
    %3652 = vmatpush1.msra.mxu0 0.0
    %3653 = vmatprep.subr.mxu0 0.0
    %3654 = vmatpush1.msra.mxu0 0.0
    %3655 = vmatprep.subr.mxu0 0.0
    %3656 = vmatpush1.msra.mxu0 0.0
    %3657 = vmatprep.subr.mxu0 0.0
    %3658 = vmatpush1.msra.mxu0 0.0
    %3659 = vmatprep.subr.mxu0 0.0
    %3660 = vmatpush1.msra.mxu0 0.0
    %3661 = vmatprep.subr.mxu0 0.0
    %3662 = vmatpush1.msra.mxu0 0.0
    %3663 = vmatprep.subr.mxu0 0.0
    %3664 = vmatpush1.msra.mxu0 0.0
    %3665 = vmatprep.mubr.f32.mxu0 0.0
    %v3666 = vand.u32 %v867, 4294901760
    %3667 = vmatmul.mubr.f32.gmra.mrb[0].mxu0 %v3666
    %v3668 = vpop.f32.mrb[0].mxu0
    %v3669 = vadd.f32 %v3596, %v3668
    %v3670 = vpop.f32.mrb[0].mxu0
    %3671 = vdwg.mxu0
    %3672 = vadd.xlane.f32.xlu0 %v3669
    %v3673 = vpop.xlane.xlu0 %3672
    %v3674 = vrot.slane %v3673, 4
    %v3675 = vadd.f32 %v3673, %v3674
    %v3676 = vrot.slane %v3675, 2
    %v3677 = vadd.f32 %v3675, %v3676
    %v3678 = vrot.slane %v3677, 1
    %v3679 = vadd.f32 %v3677, %v3678
    %v3680 = vmul.f32 %v3679, 0.125
    %v3681 = vmul.f32 %v499, %v775
    %v3682 = vmul.f32 %v500, %v776
    %3683 = vmatprep.subr.mxu0 0.0
    %v3684 = vand.u32 %v3681, 4294901760
    %3685 = vmatpush1.msra.mxu0 %v3684
    %3686 = vmatprep.subr.mxu0 0.0
    %v3687 = vand.u32 %v3682, 4294901760
    %3688 = vmatpush1.msra.mxu0 %v3687
    %3689 = vmatprep.subr.mxu0 0.0
    %3690 = vmatpush1.msra.mxu0 0.0
    %3691 = vmatprep.subr.mxu0 0.0
    %3692 = vmatpush1.msra.mxu0 0.0
    %3693 = vmatprep.subr.mxu0 0.0
    %3694 = vmatpush1.msra.mxu0 0.0
    %3695 = vmatprep.subr.mxu0 0.0
    %3696 = vmatpush1.msra.mxu0 0.0
    %3697 = vmatprep.subr.mxu0 0.0
    %3698 = vmatpush1.msra.mxu0 0.0
    %3699 = vmatprep.subr.mxu0 0.0
    %3700 = vmatpush1.msra.mxu0 0.0
    %3701 = vmatprep.subr.mxu0 0.0
    %3702 = vmatpush1.msra.mxu0 0.0
    %3703 = vmatprep.subr.mxu0 0.0
    %3704 = vmatpush1.msra.mxu0 0.0
    %3705 = vmatprep.subr.mxu0 0.0
    %3706 = vmatpush1.msra.mxu0 0.0
    %3707 = vmatprep.subr.mxu0 0.0
    %3708 = vmatpush1.msra.mxu0 0.0
    %3709 = vmatprep.subr.mxu0 0.0
    %3710 = vmatpush1.msra.mxu0 0.0
    %3711 = vmatprep.subr.mxu0 0.0
    %3712 = vmatpush1.msra.mxu0 0.0
    %3713 = vmatprep.subr.mxu0 0.0
    %3714 = vmatpush1.msra.mxu0 0.0
    %3715 = vmatprep.subr.mxu0 0.0
    %3716 = vmatpush1.msra.mxu0 0.0
    %3717 = vmatprep.subr.mxu0 0.0
    %3718 = vmatpush1.msra.mxu0 0.0
    %3719 = vmatprep.subr.mxu0 0.0
    %3720 = vmatpush1.msra.mxu0 0.0
    %3721 = vmatprep.subr.mxu0 0.0
    %3722 = vmatpush1.msra.mxu0 0.0
    %3723 = vmatprep.subr.mxu0 0.0
    %3724 = vmatpush1.msra.mxu0 0.0
    %3725 = vmatprep.subr.mxu0 0.0
    %3726 = vmatpush1.msra.mxu0 0.0
    %3727 = vmatprep.subr.mxu0 0.0
    %3728 = vmatpush1.msra.mxu0 0.0
    %3729 = vmatprep.subr.mxu0 0.0
    %3730 = vmatpush1.msra.mxu0 0.0
    %3731 = vmatprep.subr.mxu0 0.0
    %3732 = vmatpush1.msra.mxu0 0.0
    %3733 = vmatprep.subr.mxu0 0.0
    %3734 = vmatpush1.msra.mxu0 0.0
    %3735 = vmatprep.subr.mxu0 0.0
    %3736 = vmatpush1.msra.mxu0 0.0
    %3737 = vmatprep.subr.mxu0 0.0
    %3738 = vmatpush1.msra.mxu0 0.0
    %3739 = vmatprep.subr.mxu0 0.0
    %3740 = vmatpush1.msra.mxu0 0.0
    %3741 = vmatprep.subr.mxu0 0.0
    %3742 = vmatpush1.msra.mxu0 0.0
    %3743 = vmatprep.subr.mxu0 0.0
    %3744 = vmatpush1.msra.mxu0 0.0
    %3745 = vmatprep.subr.mxu0 0.0
    %3746 = vmatpush1.msra.mxu0 0.0
    %3747 = vmatprep.subr.mxu0 0.0
    %3748 = vmatpush1.msra.mxu0 0.0
    %3749 = vmatprep.mubr.f32.mxu0 0.0
    %v3750 = vand.u32 %v867, 4294901760
    %v3751 = vsub.f32 %v867, %v3750
    %v3752 = vand.u32 %v3751, 4294901760
    %v3753 = vsub.f32 %v3751, %v3752
    %v3754 = vand.u32 %v3753, 4294901760
    %3755 = vmatmul.mubr.f32.gmra.mrb[0].mxu0 %v3754
    %v3756 = vpop.f32.mrb[0].mxu0
    %v3757 = vadd.f32 0.0, %v3756
    %v3758 = vpop.f32.mrb[0].mxu0
    %3759 = vdwg.mxu0
    %3760 = vmatprep.subr.mxu0 0.0
    %v3761 = vand.u32 %v3681, 4294901760
    %v3762 = vsub.f32 %v3681, %v3761
    %v3763 = vand.u32 %v3762, 4294901760
    %v3764 = vsub.f32 %v3762, %v3763
    %v3765 = vand.u32 %v3764, 4294901760
    %3766 = vmatpush1.msra.mxu0 %v3765
    %3767 = vmatprep.subr.mxu0 0.0
    %v3768 = vand.u32 %v3682, 4294901760
    %v3769 = vsub.f32 %v3682, %v3768
    %v3770 = vand.u32 %v3769, 4294901760
    %v3771 = vsub.f32 %v3769, %v3770
    %v3772 = vand.u32 %v3771, 4294901760
    %3773 = vmatpush1.msra.mxu0 %v3772
    %3774 = vmatprep.subr.mxu0 0.0
    %3775 = vmatpush1.msra.mxu0 0.0
    %3776 = vmatprep.subr.mxu0 0.0
    %3777 = vmatpush1.msra.mxu0 0.0
    %3778 = vmatprep.subr.mxu0 0.0
    %3779 = vmatpush1.msra.mxu0 0.0
    %3780 = vmatprep.subr.mxu0 0.0
    %3781 = vmatpush1.msra.mxu0 0.0
    %3782 = vmatprep.subr.mxu0 0.0
    %3783 = vmatpush1.msra.mxu0 0.0
    %3784 = vmatprep.subr.mxu0 0.0
    %3785 = vmatpush1.msra.mxu0 0.0
    %3786 = vmatprep.subr.mxu0 0.0
    %3787 = vmatpush1.msra.mxu0 0.0
    %3788 = vmatprep.subr.mxu0 0.0
    %3789 = vmatpush1.msra.mxu0 0.0
    %3790 = vmatprep.subr.mxu0 0.0
    %3791 = vmatpush1.msra.mxu0 0.0
    %3792 = vmatprep.subr.mxu0 0.0
    %3793 = vmatpush1.msra.mxu0 0.0
    %3794 = vmatprep.subr.mxu0 0.0
    %3795 = vmatpush1.msra.mxu0 0.0
    %3796 = vmatprep.subr.mxu0 0.0
    %3797 = vmatpush1.msra.mxu0 0.0
    %3798 = vmatprep.subr.mxu0 0.0
    %3799 = vmatpush1.msra.mxu0 0.0
    %3800 = vmatprep.subr.mxu0 0.0
    %3801 = vmatpush1.msra.mxu0 0.0
    %3802 = vmatprep.subr.mxu0 0.0
    %3803 = vmatpush1.msra.mxu0 0.0
    %3804 = vmatprep.subr.mxu0 0.0
    %3805 = vmatpush1.msra.mxu0 0.0
    %3806 = vmatprep.subr.mxu0 0.0
    %3807 = vmatpush1.msra.mxu0 0.0
    %3808 = vmatprep.subr.mxu0 0.0
    %3809 = vmatpush1.msra.mxu0 0.0
    %3810 = vmatprep.subr.mxu0 0.0
    %3811 = vmatpush1.msra.mxu0 0.0
    %3812 = vmatprep.subr.mxu0 0.0
    %3813 = vmatpush1.msra.mxu0 0.0
    %3814 = vmatprep.subr.mxu0 0.0
    %3815 = vmatpush1.msra.mxu0 0.0
    %3816 = vmatprep.subr.mxu0 0.0
    %3817 = vmatpush1.msra.mxu0 0.0
    %3818 = vmatprep.subr.mxu0 0.0
    %3819 = vmatpush1.msra.mxu0 0.0
    %3820 = vmatprep.subr.mxu0 0.0
    %3821 = vmatpush1.msra.mxu0 0.0
    %3822 = vmatprep.subr.mxu0 0.0
    %3823 = vmatpush1.msra.mxu0 0.0
    %3824 = vmatprep.subr.mxu0 0.0
    %3825 = vmatpush1.msra.mxu0 0.0
    %3826 = vmatprep.subr.mxu0 0.0
    %3827 = vmatpush1.msra.mxu0 0.0
    %3828 = vmatprep.subr.mxu0 0.0
    %3829 = vmatpush1.msra.mxu0 0.0
    %3830 = vmatprep.subr.mxu0 0.0
    %3831 = vmatpush1.msra.mxu0 0.0
    %3832 = vmatprep.subr.mxu0 0.0
    %3833 = vmatpush1.msra.mxu0 0.0
    %3834 = vmatprep.mubr.f32.mxu0 0.0
    %v3835 = vand.u32 %v867, 4294901760
    %3836 = vmatmul.mubr.f32.gmra.mrb[0].mxu0 %v3835
    %v3837 = vpop.f32.mrb[0].mxu0
    %v3838 = vadd.f32 %v3757, %v3837
    %v3839 = vpop.f32.mrb[0].mxu0
    %3840 = vdwg.mxu0
    %3841 = vmatprep.subr.mxu0 0.0
    %v3842 = vand.u32 %v3681, 4294901760
    %v3843 = vsub.f32 %v3681, %v3842
    %3844 = vmatpush1.msra.mxu0 %v3843
    %3845 = vmatprep.subr.mxu0 0.0
    %v3846 = vand.u32 %v3682, 4294901760
    %v3847 = vsub.f32 %v3682, %v3846
    %3848 = vmatpush1.msra.mxu0 %v3847
    %3849 = vmatprep.subr.mxu0 0.0
    %3850 = vmatpush1.msra.mxu0 0.0
    %3851 = vmatprep.subr.mxu0 0.0
    %3852 = vmatpush1.msra.mxu0 0.0
    %3853 = vmatprep.subr.mxu0 0.0
    %3854 = vmatpush1.msra.mxu0 0.0
    %3855 = vmatprep.subr.mxu0 0.0
    %3856 = vmatpush1.msra.mxu0 0.0
    %3857 = vmatprep.subr.mxu0 0.0
    %3858 = vmatpush1.msra.mxu0 0.0
    %3859 = vmatprep.subr.mxu0 0.0
    %3860 = vmatpush1.msra.mxu0 0.0
    %3861 = vmatprep.subr.mxu0 0.0
    %3862 = vmatpush1.msra.mxu0 0.0
    %3863 = vmatprep.subr.mxu0 0.0
    %3864 = vmatpush1.msra.mxu0 0.0
    %3865 = vmatprep.subr.mxu0 0.0
    %3866 = vmatpush1.msra.mxu0 0.0
    %3867 = vmatprep.subr.mxu0 0.0
    %3868 = vmatpush1.msra.mxu0 0.0
    %3869 = vmatprep.subr.mxu0 0.0
    %3870 = vmatpush1.msra.mxu0 0.0
    %3871 = vmatprep.subr.mxu0 0.0
    %3872 = vmatpush1.msra.mxu0 0.0
    %3873 = vmatprep.subr.mxu0 0.0
    %3874 = vmatpush1.msra.mxu0 0.0
    %3875 = vmatprep.subr.mxu0 0.0
    %3876 = vmatpush1.msra.mxu0 0.0
    %3877 = vmatprep.subr.mxu0 0.0
    %3878 = vmatpush1.msra.mxu0 0.0
    %3879 = vmatprep.subr.mxu0 0.0
    %3880 = vmatpush1.msra.mxu0 0.0
    %3881 = vmatprep.subr.mxu0 0.0
    %3882 = vmatpush1.msra.mxu0 0.0
    %3883 = vmatprep.subr.mxu0 0.0
    %3884 = vmatpush1.msra.mxu0 0.0
    %3885 = vmatprep.subr.mxu0 0.0
    %3886 = vmatpush1.msra.mxu0 0.0
    %3887 = vmatprep.subr.mxu0 0.0
    %3888 = vmatpush1.msra.mxu0 0.0
    %3889 = vmatprep.subr.mxu0 0.0
    %3890 = vmatpush1.msra.mxu0 0.0
    %3891 = vmatprep.subr.mxu0 0.0
    %3892 = vmatpush1.msra.mxu0 0.0
    %3893 = vmatprep.subr.mxu0 0.0
    %3894 = vmatpush1.msra.mxu0 0.0
    %3895 = vmatprep.subr.mxu0 0.0
    %3896 = vmatpush1.msra.mxu0 0.0
    %3897 = vmatprep.subr.mxu0 0.0
    %3898 = vmatpush1.msra.mxu0 0.0
    %3899 = vmatprep.subr.mxu0 0.0
    %3900 = vmatpush1.msra.mxu0 0.0
    %3901 = vmatprep.subr.mxu0 0.0
    %3902 = vmatpush1.msra.mxu0 0.0
    %3903 = vmatprep.subr.mxu0 0.0
    %3904 = vmatpush1.msra.mxu0 0.0
    %3905 = vmatprep.subr.mxu0 0.0
    %3906 = vmatpush1.msra.mxu0 0.0
    %3907 = vmatprep.subr.mxu0 0.0
    %3908 = vmatpush1.msra.mxu0 0.0
    %3909 = vmatprep.mubr.f32.mxu0 0.0
    %v3910 = vand.u32 %v867, 4294901760
    %v3911 = vsub.f32 %v867, %v3910
    %3912 = vmatmul.mubr.f32.gmra.mrb[0].mxu0 %v3911
    %v3913 = vpop.f32.mrb[0].mxu0
    %v3914 = vadd.f32 %v3838, %v3913
    %v3915 = vpop.f32.mrb[0].mxu0
    %3916 = vdwg.mxu0
    %3917 = vmatprep.subr.mxu0 0.0
    %v3918 = vand.u32 %v3681, 4294901760
    %3919 = vmatpush1.msra.mxu0 %v3918
    %3920 = vmatprep.subr.mxu0 0.0
    %v3921 = vand.u32 %v3682, 4294901760
    %3922 = vmatpush1.msra.mxu0 %v3921
    %3923 = vmatprep.subr.mxu0 0.0
    %3924 = vmatpush1.msra.mxu0 0.0
    %3925 = vmatprep.subr.mxu0 0.0
    %3926 = vmatpush1.msra.mxu0 0.0
    %3927 = vmatprep.subr.mxu0 0.0
    %3928 = vmatpush1.msra.mxu0 0.0
    %3929 = vmatprep.subr.mxu0 0.0
    %3930 = vmatpush1.msra.mxu0 0.0
    %3931 = vmatprep.subr.mxu0 0.0
    %3932 = vmatpush1.msra.mxu0 0.0
    %3933 = vmatprep.subr.mxu0 0.0
    %3934 = vmatpush1.msra.mxu0 0.0
    %3935 = vmatprep.subr.mxu0 0.0
    %3936 = vmatpush1.msra.mxu0 0.0
    %3937 = vmatprep.subr.mxu0 0.0
    %3938 = vmatpush1.msra.mxu0 0.0
    %3939 = vmatprep.subr.mxu0 0.0
    %3940 = vmatpush1.msra.mxu0 0.0
    %3941 = vmatprep.subr.mxu0 0.0
    %3942 = vmatpush1.msra.mxu0 0.0
    %3943 = vmatprep.subr.mxu0 0.0
    %3944 = vmatpush1.msra.mxu0 0.0
    %3945 = vmatprep.subr.mxu0 0.0
    %3946 = vmatpush1.msra.mxu0 0.0
    %3947 = vmatprep.subr.mxu0 0.0
    %3948 = vmatpush1.msra.mxu0 0.0
    %3949 = vmatprep.subr.mxu0 0.0
    %3950 = vmatpush1.msra.mxu0 0.0
    %3951 = vmatprep.subr.mxu0 0.0
    %3952 = vmatpush1.msra.mxu0 0.0
    %3953 = vmatprep.subr.mxu0 0.0
    %3954 = vmatpush1.msra.mxu0 0.0
    %3955 = vmatprep.subr.mxu0 0.0
    %3956 = vmatpush1.msra.mxu0 0.0
    %3957 = vmatprep.subr.mxu0 0.0
    %3958 = vmatpush1.msra.mxu0 0.0
    %3959 = vmatprep.subr.mxu0 0.0
    %3960 = vmatpush1.msra.mxu0 0.0
    %3961 = vmatprep.subr.mxu0 0.0
    %3962 = vmatpush1.msra.mxu0 0.0
    %3963 = vmatprep.subr.mxu0 0.0
    %3964 = vmatpush1.msra.mxu0 0.0
    %3965 = vmatprep.subr.mxu0 0.0
    %3966 = vmatpush1.msra.mxu0 0.0
    %3967 = vmatprep.subr.mxu0 0.0
    %3968 = vmatpush1.msra.mxu0 0.0
    %3969 = vmatprep.subr.mxu0 0.0
    %3970 = vmatpush1.msra.mxu0 0.0
    %3971 = vmatprep.subr.mxu0 0.0
    %3972 = vmatpush1.msra.mxu0 0.0
    %3973 = vmatprep.subr.mxu0 0.0
    %3974 = vmatpush1.msra.mxu0 0.0
    %3975 = vmatprep.subr.mxu0 0.0
    %3976 = vmatpush1.msra.mxu0 0.0
    %3977 = vmatprep.subr.mxu0 0.0
    %3978 = vmatpush1.msra.mxu0 0.0
    %3979 = vmatprep.subr.mxu0 0.0
    %3980 = vmatpush1.msra.mxu0 0.0
    %3981 = vmatprep.subr.mxu0 0.0
    %3982 = vmatpush1.msra.mxu0 0.0
    %3983 = vmatprep.mubr.f32.mxu0 0.0
    %v3984 = vand.u32 %v867, 4294901760
    %v3985 = vsub.f32 %v867, %v3984
    %v3986 = vand.u32 %v3985, 4294901760
    %3987 = vmatmul.mubr.f32.gmra.mrb[0].mxu0 %v3986
    %v3988 = vpop.f32.mrb[0].mxu0
    %v3989 = vadd.f32 %v3914, %v3988
    %v3990 = vpop.f32.mrb[0].mxu0
    %3991 = vdwg.mxu0
    %3992 = vmatprep.subr.mxu0 0.0
    %v3993 = vand.u32 %v3681, 4294901760
    %v3994 = vsub.f32 %v3681, %v3993
    %v3995 = vand.u32 %v3994, 4294901760
    %3996 = vmatpush1.msra.mxu0 %v3995
    %3997 = vmatprep.subr.mxu0 0.0
    %v3998 = vand.u32 %v3682, 4294901760
    %v3999 = vsub.f32 %v3682, %v3998
    %v4000 = vand.u32 %v3999, 4294901760
    %4001 = vmatpush1.msra.mxu0 %v4000
    %4002 = vmatprep.subr.mxu0 0.0
    %4003 = vmatpush1.msra.mxu0 0.0
    %4004 = vmatprep.subr.mxu0 0.0
    %4005 = vmatpush1.msra.mxu0 0.0
    %4006 = vmatprep.subr.mxu0 0.0
    %4007 = vmatpush1.msra.mxu0 0.0
    %4008 = vmatprep.subr.mxu0 0.0
    %4009 = vmatpush1.msra.mxu0 0.0
    %4010 = vmatprep.subr.mxu0 0.0
    %4011 = vmatpush1.msra.mxu0 0.0
    %4012 = vmatprep.subr.mxu0 0.0
    %4013 = vmatpush1.msra.mxu0 0.0
    %4014 = vmatprep.subr.mxu0 0.0
    %4015 = vmatpush1.msra.mxu0 0.0
    %4016 = vmatprep.subr.mxu0 0.0
    %4017 = vmatpush1.msra.mxu0 0.0
    %4018 = vmatprep.subr.mxu0 0.0
    %4019 = vmatpush1.msra.mxu0 0.0
    %4020 = vmatprep.subr.mxu0 0.0
    %4021 = vmatpush1.msra.mxu0 0.0
    %4022 = vmatprep.subr.mxu0 0.0
    %4023 = vmatpush1.msra.mxu0 0.0
    %4024 = vmatprep.subr.mxu0 0.0
    %4025 = vmatpush1.msra.mxu0 0.0
    %4026 = vmatprep.subr.mxu0 0.0
    %4027 = vmatpush1.msra.mxu0 0.0
    %4028 = vmatprep.subr.mxu0 0.0
    %4029 = vmatpush1.msra.mxu0 0.0
    %4030 = vmatprep.subr.mxu0 0.0
    %4031 = vmatpush1.msra.mxu0 0.0
    %4032 = vmatprep.subr.mxu0 0.0
    %4033 = vmatpush1.msra.mxu0 0.0
    %4034 = vmatprep.subr.mxu0 0.0
    %4035 = vmatpush1.msra.mxu0 0.0
    %4036 = vmatprep.subr.mxu0 0.0
    %4037 = vmatpush1.msra.mxu0 0.0
    %4038 = vmatprep.subr.mxu0 0.0
    %4039 = vmatpush1.msra.mxu0 0.0
    %4040 = vmatprep.subr.mxu0 0.0
    %4041 = vmatpush1.msra.mxu0 0.0
    %4042 = vmatprep.subr.mxu0 0.0
    %4043 = vmatpush1.msra.mxu0 0.0
    %4044 = vmatprep.subr.mxu0 0.0
    %4045 = vmatpush1.msra.mxu0 0.0
    %4046 = vmatprep.subr.mxu0 0.0
    %4047 = vmatpush1.msra.mxu0 0.0
    %4048 = vmatprep.subr.mxu0 0.0
    %4049 = vmatpush1.msra.mxu0 0.0
    %4050 = vmatprep.subr.mxu0 0.0
    %4051 = vmatpush1.msra.mxu0 0.0
    %4052 = vmatprep.subr.mxu0 0.0
    %4053 = vmatpush1.msra.mxu0 0.0
    %4054 = vmatprep.subr.mxu0 0.0
    %4055 = vmatpush1.msra.mxu0 0.0
    %4056 = vmatprep.subr.mxu0 0.0
    %4057 = vmatpush1.msra.mxu0 0.0
    %4058 = vmatprep.subr.mxu0 0.0
    %4059 = vmatpush1.msra.mxu0 0.0
    %4060 = vmatprep.subr.mxu0 0.0
    %4061 = vmatpush1.msra.mxu0 0.0
    %4062 = vmatprep.mubr.f32.mxu0 0.0
    %v4063 = vand.u32 %v867, 4294901760
    %4064 = vmatmul.mubr.f32.gmra.mrb[0].mxu0 %v4063
    %v4065 = vpop.f32.mrb[0].mxu0
    %v4066 = vadd.f32 %v3989, %v4065
    %v4067 = vpop.f32.mrb[0].mxu0
    %4068 = vdwg.mxu0
    %4069 = vmatprep.subr.mxu0 0.0
    %v4070 = vand.u32 %v3681, 4294901760
    %4071 = vmatpush1.msra.mxu0 %v4070
    %4072 = vmatprep.subr.mxu0 0.0
    %v4073 = vand.u32 %v3682, 4294901760
    %4074 = vmatpush1.msra.mxu0 %v4073
    %4075 = vmatprep.subr.mxu0 0.0
    %4076 = vmatpush1.msra.mxu0 0.0
    %4077 = vmatprep.subr.mxu0 0.0
    %4078 = vmatpush1.msra.mxu0 0.0
    %4079 = vmatprep.subr.mxu0 0.0
    %4080 = vmatpush1.msra.mxu0 0.0
    %4081 = vmatprep.subr.mxu0 0.0
    %4082 = vmatpush1.msra.mxu0 0.0
    %4083 = vmatprep.subr.mxu0 0.0
    %4084 = vmatpush1.msra.mxu0 0.0
    %4085 = vmatprep.subr.mxu0 0.0
    %4086 = vmatpush1.msra.mxu0 0.0
    %4087 = vmatprep.subr.mxu0 0.0
    %4088 = vmatpush1.msra.mxu0 0.0
    %4089 = vmatprep.subr.mxu0 0.0
    %4090 = vmatpush1.msra.mxu0 0.0
    %4091 = vmatprep.subr.mxu0 0.0
    %4092 = vmatpush1.msra.mxu0 0.0
    %4093 = vmatprep.subr.mxu0 0.0
    %4094 = vmatpush1.msra.mxu0 0.0
    %4095 = vmatprep.subr.mxu0 0.0
    %4096 = vmatpush1.msra.mxu0 0.0
    %4097 = vmatprep.subr.mxu0 0.0
    %4098 = vmatpush1.msra.mxu0 0.0
    %4099 = vmatprep.subr.mxu0 0.0
    %4100 = vmatpush1.msra.mxu0 0.0
    %4101 = vmatprep.subr.mxu0 0.0
    %4102 = vmatpush1.msra.mxu0 0.0
    %4103 = vmatprep.subr.mxu0 0.0
    %4104 = vmatpush1.msra.mxu0 0.0
    %4105 = vmatprep.subr.mxu0 0.0
    %4106 = vmatpush1.msra.mxu0 0.0
    %4107 = vmatprep.subr.mxu0 0.0
    %4108 = vmatpush1.msra.mxu0 0.0
    %4109 = vmatprep.subr.mxu0 0.0
    %4110 = vmatpush1.msra.mxu0 0.0
    %4111 = vmatprep.subr.mxu0 0.0
    %4112 = vmatpush1.msra.mxu0 0.0
    %4113 = vmatprep.subr.mxu0 0.0
    %4114 = vmatpush1.msra.mxu0 0.0
    %4115 = vmatprep.subr.mxu0 0.0
    %4116 = vmatpush1.msra.mxu0 0.0
    %4117 = vmatprep.subr.mxu0 0.0
    %4118 = vmatpush1.msra.mxu0 0.0
    %4119 = vmatprep.subr.mxu0 0.0
    %4120 = vmatpush1.msra.mxu0 0.0
    %4121 = vmatprep.subr.mxu0 0.0
    %4122 = vmatpush1.msra.mxu0 0.0
    %4123 = vmatprep.subr.mxu0 0.0
    %4124 = vmatpush1.msra.mxu0 0.0
    %4125 = vmatprep.subr.mxu0 0.0
    %4126 = vmatpush1.msra.mxu0 0.0
    %4127 = vmatprep.subr.mxu0 0.0
    %4128 = vmatpush1.msra.mxu0 0.0
    %4129 = vmatprep.subr.mxu0 0.0
    %4130 = vmatpush1.msra.mxu0 0.0
    %4131 = vmatprep.subr.mxu0 0.0
    %4132 = vmatpush1.msra.mxu0 0.0
    %4133 = vmatprep.subr.mxu0 0.0
    %4134 = vmatpush1.msra.mxu0 0.0
    %4135 = vmatprep.mubr.f32.mxu0 0.0
    %v4136 = vand.u32 %v867, 4294901760
    %4137 = vmatmul.mubr.f32.gmra.mrb[0].mxu0 %v4136
    %v4138 = vpop.f32.mrb[0].mxu0
    %v4139 = vadd.f32 %v4066, %v4138
    %v4140 = vpop.f32.mrb[0].mxu0
    %4141 = vdwg.mxu0
    %4142 = vadd.xlane.f32.xlu0 %v4139
    %v4143 = vpop.xlane.xlu0 %4142
    %v4144 = vrot.slane %v4143, 4
    %v4145 = vadd.f32 %v4143, %v4144
    %v4146 = vrot.slane %v4145, 2
    %v4147 = vadd.f32 %v4145, %v4146
    %v4148 = vrot.slane %v4147, 1
    %v4149 = vadd.f32 %v4147, %v4148
    %v4150 = vmul.f32 %v4149, 0.125
    %v4151 = vmul.f32 %v863, %v507
    %v4152 = vmul.f32 %v864, %v508
    %4153 = vmatprep.subr.mxu0 0.0
    %v4154 = vand.u32 %v4151, 4294901760
    %4155 = vmatpush1.msra.mxu0 %v4154
    %4156 = vmatprep.subr.mxu0 0.0
    %v4157 = vand.u32 %v4152, 4294901760
    %4158 = vmatpush1.msra.mxu0 %v4157
    %4159 = vmatprep.subr.mxu0 0.0
    %4160 = vmatpush1.msra.mxu0 0.0
    %4161 = vmatprep.subr.mxu0 0.0
    %4162 = vmatpush1.msra.mxu0 0.0
    %4163 = vmatprep.subr.mxu0 0.0
    %4164 = vmatpush1.msra.mxu0 0.0
    %4165 = vmatprep.subr.mxu0 0.0
    %4166 = vmatpush1.msra.mxu0 0.0
    %4167 = vmatprep.subr.mxu0 0.0
    %4168 = vmatpush1.msra.mxu0 0.0
    %4169 = vmatprep.subr.mxu0 0.0
    %4170 = vmatpush1.msra.mxu0 0.0
    %4171 = vmatprep.subr.mxu0 0.0
    %4172 = vmatpush1.msra.mxu0 0.0
    %4173 = vmatprep.subr.mxu0 0.0
    %4174 = vmatpush1.msra.mxu0 0.0
    %4175 = vmatprep.subr.mxu0 0.0
    %4176 = vmatpush1.msra.mxu0 0.0
    %4177 = vmatprep.subr.mxu0 0.0
    %4178 = vmatpush1.msra.mxu0 0.0
    %4179 = vmatprep.subr.mxu0 0.0
    %4180 = vmatpush1.msra.mxu0 0.0
    %4181 = vmatprep.subr.mxu0 0.0
    %4182 = vmatpush1.msra.mxu0 0.0
    %4183 = vmatprep.subr.mxu0 0.0
    %4184 = vmatpush1.msra.mxu0 0.0
    %4185 = vmatprep.subr.mxu0 0.0
    %4186 = vmatpush1.msra.mxu0 0.0
    %4187 = vmatprep.subr.mxu0 0.0
    %4188 = vmatpush1.msra.mxu0 0.0
    %4189 = vmatprep.subr.mxu0 0.0
    %4190 = vmatpush1.msra.mxu0 0.0
    %4191 = vmatprep.subr.mxu0 0.0
    %4192 = vmatpush1.msra.mxu0 0.0
    %4193 = vmatprep.subr.mxu0 0.0
    %4194 = vmatpush1.msra.mxu0 0.0
    %4195 = vmatprep.subr.mxu0 0.0
    %4196 = vmatpush1.msra.mxu0 0.0
    %4197 = vmatprep.subr.mxu0 0.0
    %4198 = vmatpush1.msra.mxu0 0.0
    %4199 = vmatprep.subr.mxu0 0.0
    %4200 = vmatpush1.msra.mxu0 0.0
    %4201 = vmatprep.subr.mxu0 0.0
    %4202 = vmatpush1.msra.mxu0 0.0
    %4203 = vmatprep.subr.mxu0 0.0
    %4204 = vmatpush1.msra.mxu0 0.0
    %4205 = vmatprep.subr.mxu0 0.0
    %4206 = vmatpush1.msra.mxu0 0.0
    %4207 = vmatprep.subr.mxu0 0.0
    %4208 = vmatpush1.msra.mxu0 0.0
    %4209 = vmatprep.subr.mxu0 0.0
    %4210 = vmatpush1.msra.mxu0 0.0
    %4211 = vmatprep.subr.mxu0 0.0
    %4212 = vmatpush1.msra.mxu0 0.0
    %4213 = vmatprep.subr.mxu0 0.0
    %4214 = vmatpush1.msra.mxu0 0.0
    %4215 = vmatprep.subr.mxu0 0.0
    %4216 = vmatpush1.msra.mxu0 0.0
    %4217 = vmatprep.subr.mxu0 0.0
    %4218 = vmatpush1.msra.mxu0 0.0
    %4219 = vmatprep.mubr.f32.mxu0 0.0
    %v4220 = vand.u32 %v867, 4294901760
    %v4221 = vsub.f32 %v867, %v4220
    %v4222 = vand.u32 %v4221, 4294901760
    %v4223 = vsub.f32 %v4221, %v4222
    %v4224 = vand.u32 %v4223, 4294901760
    %4225 = vmatmul.mubr.f32.gmra.mrb[0].mxu0 %v4224
    %v4226 = vpop.f32.mrb[0].mxu0
    %v4227 = vadd.f32 0.0, %v4226
    %v4228 = vpop.f32.mrb[0].mxu0
    %4229 = vdwg.mxu0
    %4230 = vmatprep.subr.mxu0 0.0
    %v4231 = vand.u32 %v4151, 4294901760
    %v4232 = vsub.f32 %v4151, %v4231
    %v4233 = vand.u32 %v4232, 4294901760
    %v4234 = vsub.f32 %v4232, %v4233
    %v4235 = vand.u32 %v4234, 4294901760
    %4236 = vmatpush1.msra.mxu0 %v4235
    %4237 = vmatprep.subr.mxu0 0.0
    %v4238 = vand.u32 %v4152, 4294901760
    %v4239 = vsub.f32 %v4152, %v4238
    %v4240 = vand.u32 %v4239, 4294901760
    %v4241 = vsub.f32 %v4239, %v4240
    %v4242 = vand.u32 %v4241, 4294901760
    %4243 = vmatpush1.msra.mxu0 %v4242
    %4244 = vmatprep.subr.mxu0 0.0
    %4245 = vmatpush1.msra.mxu0 0.0
    %4246 = vmatprep.subr.mxu0 0.0
    %4247 = vmatpush1.msra.mxu0 0.0
    %4248 = vmatprep.subr.mxu0 0.0
    %4249 = vmatpush1.msra.mxu0 0.0
    %4250 = vmatprep.subr.mxu0 0.0
    %4251 = vmatpush1.msra.mxu0 0.0
    %4252 = vmatprep.subr.mxu0 0.0
    %4253 = vmatpush1.msra.mxu0 0.0
    %4254 = vmatprep.subr.mxu0 0.0
    %4255 = vmatpush1.msra.mxu0 0.0
    %4256 = vmatprep.subr.mxu0 0.0
    %4257 = vmatpush1.msra.mxu0 0.0
    %4258 = vmatprep.subr.mxu0 0.0
    %4259 = vmatpush1.msra.mxu0 0.0
    %4260 = vmatprep.subr.mxu0 0.0
    %4261 = vmatpush1.msra.mxu0 0.0
    %4262 = vmatprep.subr.mxu0 0.0
    %4263 = vmatpush1.msra.mxu0 0.0
    %4264 = vmatprep.subr.mxu0 0.0
    %4265 = vmatpush1.msra.mxu0 0.0
    %4266 = vmatprep.subr.mxu0 0.0
    %4267 = vmatpush1.msra.mxu0 0.0
    %4268 = vmatprep.subr.mxu0 0.0
    %4269 = vmatpush1.msra.mxu0 0.0
    %4270 = vmatprep.subr.mxu0 0.0
    %4271 = vmatpush1.msra.mxu0 0.0
    %4272 = vmatprep.subr.mxu0 0.0
    %4273 = vmatpush1.msra.mxu0 0.0
    %4274 = vmatprep.subr.mxu0 0.0
    %4275 = vmatpush1.msra.mxu0 0.0
    %4276 = vmatprep.subr.mxu0 0.0
    %4277 = vmatpush1.msra.mxu0 0.0
    %4278 = vmatprep.subr.mxu0 0.0
    %4279 = vmatpush1.msra.mxu0 0.0
    %4280 = vmatprep.subr.mxu0 0.0
    %4281 = vmatpush1.msra.mxu0 0.0
    %4282 = vmatprep.subr.mxu0 0.0
    %4283 = vmatpush1.msra.mxu0 0.0
    %4284 = vmatprep.subr.mxu0 0.0
    %4285 = vmatpush1.msra.mxu0 0.0
    %4286 = vmatprep.subr.mxu0 0.0
    %4287 = vmatpush1.msra.mxu0 0.0
    %4288 = vmatprep.subr.mxu0 0.0
    %4289 = vmatpush1.msra.mxu0 0.0
    %4290 = vmatprep.subr.mxu0 0.0
    %4291 = vmatpush1.msra.mxu0 0.0
    %4292 = vmatprep.subr.mxu0 0.0
    %4293 = vmatpush1.msra.mxu0 0.0
    %4294 = vmatprep.subr.mxu0 0.0
    %4295 = vmatpush1.msra.mxu0 0.0
    %4296 = vmatprep.subr.mxu0 0.0
    %4297 = vmatpush1.msra.mxu0 0.0
    %4298 = vmatprep.subr.mxu0 0.0
    %4299 = vmatpush1.msra.mxu0 0.0
    %4300 = vmatprep.subr.mxu0 0.0
    %4301 = vmatpush1.msra.mxu0 0.0
    %4302 = vmatprep.subr.mxu0 0.0
    %4303 = vmatpush1.msra.mxu0 0.0
    %4304 = vmatprep.mubr.f32.mxu0 0.0
    %v4305 = vand.u32 %v867, 4294901760
    %4306 = vmatmul.mubr.f32.gmra.mrb[0].mxu0 %v4305
    %v4307 = vpop.f32.mrb[0].mxu0
    %v4308 = vadd.f32 %v4227, %v4307
    %v4309 = vpop.f32.mrb[0].mxu0
    %4310 = vdwg.mxu0
    %4311 = vmatprep.subr.mxu0 0.0
    %v4312 = vand.u32 %v4151, 4294901760
    %v4313 = vsub.f32 %v4151, %v4312
    %4314 = vmatpush1.msra.mxu0 %v4313
    %4315 = vmatprep.subr.mxu0 0.0
    %v4316 = vand.u32 %v4152, 4294901760
    %v4317 = vsub.f32 %v4152, %v4316
    %4318 = vmatpush1.msra.mxu0 %v4317
    %4319 = vmatprep.subr.mxu0 0.0
    %4320 = vmatpush1.msra.mxu0 0.0
    %4321 = vmatprep.subr.mxu0 0.0
    %4322 = vmatpush1.msra.mxu0 0.0
    %4323 = vmatprep.subr.mxu0 0.0
    %4324 = vmatpush1.msra.mxu0 0.0
    %4325 = vmatprep.subr.mxu0 0.0
    %4326 = vmatpush1.msra.mxu0 0.0
    %4327 = vmatprep.subr.mxu0 0.0
    %4328 = vmatpush1.msra.mxu0 0.0
    %4329 = vmatprep.subr.mxu0 0.0
    %4330 = vmatpush1.msra.mxu0 0.0
    %4331 = vmatprep.subr.mxu0 0.0
    %4332 = vmatpush1.msra.mxu0 0.0
    %4333 = vmatprep.subr.mxu0 0.0
    %4334 = vmatpush1.msra.mxu0 0.0
    %4335 = vmatprep.subr.mxu0 0.0
    %4336 = vmatpush1.msra.mxu0 0.0
    %4337 = vmatprep.subr.mxu0 0.0
    %4338 = vmatpush1.msra.mxu0 0.0
    %4339 = vmatprep.subr.mxu0 0.0
    %4340 = vmatpush1.msra.mxu0 0.0
    %4341 = vmatprep.subr.mxu0 0.0
    %4342 = vmatpush1.msra.mxu0 0.0
    %4343 = vmatprep.subr.mxu0 0.0
    %4344 = vmatpush1.msra.mxu0 0.0
    %4345 = vmatprep.subr.mxu0 0.0
    %4346 = vmatpush1.msra.mxu0 0.0
    %4347 = vmatprep.subr.mxu0 0.0
    %4348 = vmatpush1.msra.mxu0 0.0
    %4349 = vmatprep.subr.mxu0 0.0
    %4350 = vmatpush1.msra.mxu0 0.0
    %4351 = vmatprep.subr.mxu0 0.0
    %4352 = vmatpush1.msra.mxu0 0.0
    %4353 = vmatprep.subr.mxu0 0.0
    %4354 = vmatpush1.msra.mxu0 0.0
    %4355 = vmatprep.subr.mxu0 0.0
    %4356 = vmatpush1.msra.mxu0 0.0
    %4357 = vmatprep.subr.mxu0 0.0
    %4358 = vmatpush1.msra.mxu0 0.0
    %4359 = vmatprep.subr.mxu0 0.0
    %4360 = vmatpush1.msra.mxu0 0.0
    %4361 = vmatprep.subr.mxu0 0.0
    %4362 = vmatpush1.msra.mxu0 0.0
    %4363 = vmatprep.subr.mxu0 0.0
    %4364 = vmatpush1.msra.mxu0 0.0
    %4365 = vmatprep.subr.mxu0 0.0
    %4366 = vmatpush1.msra.mxu0 0.0
    %4367 = vmatprep.subr.mxu0 0.0
    %4368 = vmatpush1.msra.mxu0 0.0
    %4369 = vmatprep.subr.mxu0 0.0
    %4370 = vmatpush1.msra.mxu0 0.0
    %4371 = vmatprep.subr.mxu0 0.0
    %4372 = vmatpush1.msra.mxu0 0.0
    %4373 = vmatprep.subr.mxu0 0.0
    %4374 = vmatpush1.msra.mxu0 0.0
    %4375 = vmatprep.subr.mxu0 0.0
    %4376 = vmatpush1.msra.mxu0 0.0
    %4377 = vmatprep.subr.mxu0 0.0
    %4378 = vmatpush1.msra.mxu0 0.0
    %4379 = vmatprep.mubr.f32.mxu0 0.0
    %v4380 = vand.u32 %v867, 4294901760
    %v4381 = vsub.f32 %v867, %v4380
    %4382 = vmatmul.mubr.f32.gmra.mrb[0].mxu0 %v4381
    %v4383 = vpop.f32.mrb[0].mxu0
    %v4384 = vadd.f32 %v4308, %v4383
    %v4385 = vpop.f32.mrb[0].mxu0
    %4386 = vdwg.mxu0
    %4387 = vmatprep.subr.mxu0 0.0
    %v4388 = vand.u32 %v4151, 4294901760
    %4389 = vmatpush1.msra.mxu0 %v4388
    %4390 = vmatprep.subr.mxu0 0.0
    %v4391 = vand.u32 %v4152, 4294901760
    %4392 = vmatpush1.msra.mxu0 %v4391
    %4393 = vmatprep.subr.mxu0 0.0
    %4394 = vmatpush1.msra.mxu0 0.0
    %4395 = vmatprep.subr.mxu0 0.0
    %4396 = vmatpush1.msra.mxu0 0.0
    %4397 = vmatprep.subr.mxu0 0.0
    %4398 = vmatpush1.msra.mxu0 0.0
    %4399 = vmatprep.subr.mxu0 0.0
    %4400 = vmatpush1.msra.mxu0 0.0
    %4401 = vmatprep.subr.mxu0 0.0
    %4402 = vmatpush1.msra.mxu0 0.0
    %4403 = vmatprep.subr.mxu0 0.0
    %4404 = vmatpush1.msra.mxu0 0.0
    %4405 = vmatprep.subr.mxu0 0.0
    %4406 = vmatpush1.msra.mxu0 0.0
    %4407 = vmatprep.subr.mxu0 0.0
    %4408 = vmatpush1.msra.mxu0 0.0
    %4409 = vmatprep.subr.mxu0 0.0
    %4410 = vmatpush1.msra.mxu0 0.0
    %4411 = vmatprep.subr.mxu0 0.0
    %4412 = vmatpush1.msra.mxu0 0.0
    %4413 = vmatprep.subr.mxu0 0.0
    %4414 = vmatpush1.msra.mxu0 0.0
    %4415 = vmatprep.subr.mxu0 0.0
    %4416 = vmatpush1.msra.mxu0 0.0
    %4417 = vmatprep.subr.mxu0 0.0
    %4418 = vmatpush1.msra.mxu0 0.0
    %4419 = vmatprep.subr.mxu0 0.0
    %4420 = vmatpush1.msra.mxu0 0.0
    %4421 = vmatprep.subr.mxu0 0.0
    %4422 = vmatpush1.msra.mxu0 0.0
    %4423 = vmatprep.subr.mxu0 0.0
    %4424 = vmatpush1.msra.mxu0 0.0
    %4425 = vmatprep.subr.mxu0 0.0
    %4426 = vmatpush1.msra.mxu0 0.0
    %4427 = vmatprep.subr.mxu0 0.0
    %4428 = vmatpush1.msra.mxu0 0.0
    %4429 = vmatprep.subr.mxu0 0.0
    %4430 = vmatpush1.msra.mxu0 0.0
    %4431 = vmatprep.subr.mxu0 0.0
    %4432 = vmatpush1.msra.mxu0 0.0
    %4433 = vmatprep.subr.mxu0 0.0
    %4434 = vmatpush1.msra.mxu0 0.0
    %4435 = vmatprep.subr.mxu0 0.0
    %4436 = vmatpush1.msra.mxu0 0.0
    %4437 = vmatprep.subr.mxu0 0.0
    %4438 = vmatpush1.msra.mxu0 0.0
    %4439 = vmatprep.subr.mxu0 0.0
    %4440 = vmatpush1.msra.mxu0 0.0
    %4441 = vmatprep.subr.mxu0 0.0
    %4442 = vmatpush1.msra.mxu0 0.0
    %4443 = vmatprep.subr.mxu0 0.0
    %4444 = vmatpush1.msra.mxu0 0.0
    %4445 = vmatprep.subr.mxu0 0.0
    %4446 = vmatpush1.msra.mxu0 0.0
    %4447 = vmatprep.subr.mxu0 0.0
    %4448 = vmatpush1.msra.mxu0 0.0
    %4449 = vmatprep.subr.mxu0 0.0
    %4450 = vmatpush1.msra.mxu0 0.0
    %4451 = vmatprep.subr.mxu0 0.0
    %4452 = vmatpush1.msra.mxu0 0.0
    %4453 = vmatprep.mubr.f32.mxu0 0.0
    %v4454 = vand.u32 %v867, 4294901760
    %v4455 = vsub.f32 %v867, %v4454
    %v4456 = vand.u32 %v4455, 4294901760
    %4457 = vmatmul.mubr.f32.gmra.mrb[0].mxu0 %v4456
    %v4458 = vpop.f32.mrb[0].mxu0
    %v4459 = vadd.f32 %v4384, %v4458
    %v4460 = vpop.f32.mrb[0].mxu0
    %4461 = vdwg.mxu0
    %4462 = vmatprep.subr.mxu0 0.0
    %v4463 = vand.u32 %v4151, 4294901760
    %v4464 = vsub.f32 %v4151, %v4463
    %v4465 = vand.u32 %v4464, 4294901760
    %4466 = vmatpush1.msra.mxu0 %v4465
    %4467 = vmatprep.subr.mxu0 0.0
    %v4468 = vand.u32 %v4152, 4294901760
    %v4469 = vsub.f32 %v4152, %v4468
    %v4470 = vand.u32 %v4469, 4294901760
    %4471 = vmatpush1.msra.mxu0 %v4470
    %4472 = vmatprep.subr.mxu0 0.0
    %4473 = vmatpush1.msra.mxu0 0.0
    %4474 = vmatprep.subr.mxu0 0.0
    %4475 = vmatpush1.msra.mxu0 0.0
    %4476 = vmatprep.subr.mxu0 0.0
    %4477 = vmatpush1.msra.mxu0 0.0
    %4478 = vmatprep.subr.mxu0 0.0
    %4479 = vmatpush1.msra.mxu0 0.0
    %4480 = vmatprep.subr.mxu0 0.0
    %4481 = vmatpush1.msra.mxu0 0.0
    %4482 = vmatprep.subr.mxu0 0.0
    %4483 = vmatpush1.msra.mxu0 0.0
    %4484 = vmatprep.subr.mxu0 0.0
    %4485 = vmatpush1.msra.mxu0 0.0
    %4486 = vmatprep.subr.mxu0 0.0
    %4487 = vmatpush1.msra.mxu0 0.0
    %4488 = vmatprep.subr.mxu0 0.0
    %4489 = vmatpush1.msra.mxu0 0.0
    %4490 = vmatprep.subr.mxu0 0.0
    %4491 = vmatpush1.msra.mxu0 0.0
    %4492 = vmatprep.subr.mxu0 0.0
    %4493 = vmatpush1.msra.mxu0 0.0
    %4494 = vmatprep.subr.mxu0 0.0
    %4495 = vmatpush1.msra.mxu0 0.0
    %4496 = vmatprep.subr.mxu0 0.0
    %4497 = vmatpush1.msra.mxu0 0.0
    %4498 = vmatprep.subr.mxu0 0.0
    %4499 = vmatpush1.msra.mxu0 0.0
    %4500 = vmatprep.subr.mxu0 0.0
    %4501 = vmatpush1.msra.mxu0 0.0
    %4502 = vmatprep.subr.mxu0 0.0
    %4503 = vmatpush1.msra.mxu0 0.0
    %4504 = vmatprep.subr.mxu0 0.0
    %4505 = vmatpush1.msra.mxu0 0.0
    %4506 = vmatprep.subr.mxu0 0.0
    %4507 = vmatpush1.msra.mxu0 0.0
    %4508 = vmatprep.subr.mxu0 0.0
    %4509 = vmatpush1.msra.mxu0 0.0
    %4510 = vmatprep.subr.mxu0 0.0
    %4511 = vmatpush1.msra.mxu0 0.0
    %4512 = vmatprep.subr.mxu0 0.0
    %4513 = vmatpush1.msra.mxu0 0.0
    %4514 = vmatprep.subr.mxu0 0.0
    %4515 = vmatpush1.msra.mxu0 0.0
    %4516 = vmatprep.subr.mxu0 0.0
    %4517 = vmatpush1.msra.mxu0 0.0
    %4518 = vmatprep.subr.mxu0 0.0
    %4519 = vmatpush1.msra.mxu0 0.0
    %4520 = vmatprep.subr.mxu0 0.0
    %4521 = vmatpush1.msra.mxu0 0.0
    %4522 = vmatprep.subr.mxu0 0.0
    %4523 = vmatpush1.msra.mxu0 0.0
    %4524 = vmatprep.subr.mxu0 0.0
    %4525 = vmatpush1.msra.mxu0 0.0
    %4526 = vmatprep.subr.mxu0 0.0
    %4527 = vmatpush1.msra.mxu0 0.0
    %4528 = vmatprep.subr.mxu0 0.0
    %4529 = vmatpush1.msra.mxu0 0.0
    %4530 = vmatprep.subr.mxu0 0.0
    %4531 = vmatpush1.msra.mxu0 0.0
    %4532 = vmatprep.mubr.f32.mxu0 0.0
    %v4533 = vand.u32 %v867, 4294901760
    %4534 = vmatmul.mubr.f32.gmra.mrb[0].mxu0 %v4533
    %v4535 = vpop.f32.mrb[0].mxu0
    %v4536 = vadd.f32 %v4459, %v4535
    %v4537 = vpop.f32.mrb[0].mxu0
    %4538 = vdwg.mxu0
    %4539 = vmatprep.subr.mxu0 0.0
    %v4540 = vand.u32 %v4151, 4294901760
    %4541 = vmatpush1.msra.mxu0 %v4540
    %4542 = vmatprep.subr.mxu0 0.0
    %v4543 = vand.u32 %v4152, 4294901760
    %4544 = vmatpush1.msra.mxu0 %v4543
    %4545 = vmatprep.subr.mxu0 0.0
    %4546 = vmatpush1.msra.mxu0 0.0
    %4547 = vmatprep.subr.mxu0 0.0
    %4548 = vmatpush1.msra.mxu0 0.0
    %4549 = vmatprep.subr.mxu0 0.0
    %4550 = vmatpush1.msra.mxu0 0.0
    %4551 = vmatprep.subr.mxu0 0.0
    %4552 = vmatpush1.msra.mxu0 0.0
    %4553 = vmatprep.subr.mxu0 0.0
    %4554 = vmatpush1.msra.mxu0 0.0
    %4555 = vmatprep.subr.mxu0 0.0
    %4556 = vmatpush1.msra.mxu0 0.0
    %4557 = vmatprep.subr.mxu0 0.0
    %4558 = vmatpush1.msra.mxu0 0.0
    %4559 = vmatprep.subr.mxu0 0.0
    %4560 = vmatpush1.msra.mxu0 0.0
    %4561 = vmatprep.subr.mxu0 0.0
    %4562 = vmatpush1.msra.mxu0 0.0
    %4563 = vmatprep.subr.mxu0 0.0
    %4564 = vmatpush1.msra.mxu0 0.0
    %4565 = vmatprep.subr.mxu0 0.0
    %4566 = vmatpush1.msra.mxu0 0.0
    %4567 = vmatprep.subr.mxu0 0.0
    %4568 = vmatpush1.msra.mxu0 0.0
    %4569 = vmatprep.subr.mxu0 0.0
    %4570 = vmatpush1.msra.mxu0 0.0
    %4571 = vmatprep.subr.mxu0 0.0
    %4572 = vmatpush1.msra.mxu0 0.0
    %4573 = vmatprep.subr.mxu0 0.0
    %4574 = vmatpush1.msra.mxu0 0.0
    %4575 = vmatprep.subr.mxu0 0.0
    %4576 = vmatpush1.msra.mxu0 0.0
    %4577 = vmatprep.subr.mxu0 0.0
    %4578 = vmatpush1.msra.mxu0 0.0
    %4579 = vmatprep.subr.mxu0 0.0
    %4580 = vmatpush1.msra.mxu0 0.0
    %4581 = vmatprep.subr.mxu0 0.0
    %4582 = vmatpush1.msra.mxu0 0.0
    %4583 = vmatprep.subr.mxu0 0.0
    %4584 = vmatpush1.msra.mxu0 0.0
    %4585 = vmatprep.subr.mxu0 0.0
    %4586 = vmatpush1.msra.mxu0 0.0
    %4587 = vmatprep.subr.mxu0 0.0
    %4588 = vmatpush1.msra.mxu0 0.0
    %4589 = vmatprep.subr.mxu0 0.0
    %4590 = vmatpush1.msra.mxu0 0.0
    %4591 = vmatprep.subr.mxu0 0.0
    %4592 = vmatpush1.msra.mxu0 0.0
    %4593 = vmatprep.subr.mxu0 0.0
    %4594 = vmatpush1.msra.mxu0 0.0
    %4595 = vmatprep.subr.mxu0 0.0
    %4596 = vmatpush1.msra.mxu0 0.0
    %4597 = vmatprep.subr.mxu0 0.0
    %4598 = vmatpush1.msra.mxu0 0.0
    %4599 = vmatprep.subr.mxu0 0.0
    %4600 = vmatpush1.msra.mxu0 0.0
    %4601 = vmatprep.subr.mxu0 0.0
    %4602 = vmatpush1.msra.mxu0 0.0
    %4603 = vmatprep.subr.mxu0 0.0
    %4604 = vmatpush1.msra.mxu0 0.0
    %4605 = vmatprep.mubr.f32.mxu0 0.0
    %v4606 = vand.u32 %v867, 4294901760
    %4607 = vmatmul.mubr.f32.gmra.mrb[0].mxu0 %v4606
    %v4608 = vpop.f32.mrb[0].mxu0
    %v4609 = vadd.f32 %v4536, %v4608
    %v4610 = vpop.f32.mrb[0].mxu0
    %4611 = vdwg.mxu0
    %4612 = vadd.xlane.f32.xlu0 %v4609
    %v4613 = vpop.xlane.xlu0 %4612
    %v4614 = vrot.slane %v4613, 4
    %v4615 = vadd.f32 %v4613, %v4614
    %v4616 = vrot.slane %v4615, 2
    %v4617 = vadd.f32 %v4615, %v4616
    %v4618 = vrot.slane %v4617, 1
    %v4619 = vadd.f32 %v4617, %v4618
    %v4620 = vmul.f32 %v4619, 0.125
    %vm4621 = vcmp.eq.s32.totalorder %v189, 0
    %v4622 = vsel %vm4621, %v1336, 0.0
    %v4623 = vadd.f32 %v4622, 0.0
    %vm4624 = vcmp.eq.s32.totalorder %v189, 1
    %v4625 = vsel %vm4624, %v1804, 0.0
    %v4626 = vadd.f32 %v4623, %v4625
    %vm4627 = vcmp.eq.s32.totalorder %v189, 2
    %v4628 = vsel %vm4627, %v2274, 0.0
    %v4629 = vadd.f32 %v4626, %v4628
    %vm4630 = vcmp.eq.s32.totalorder %v189, 3
    %v4631 = vsel %vm4630, %v2744, 0.0
    %v4632 = vadd.f32 %v4629, %v4631
    %vm4633 = vcmp.eq.s32.totalorder %v189, 4
    %v4634 = vsel %vm4633, %v3212, 0.0
    %v4635 = vadd.f32 %v4632, %v4634
    %vm4636 = vcmp.eq.s32.totalorder %v189, 5
    %v4637 = vsel %vm4636, %v3680, 0.0
    %v4638 = vadd.f32 %v4635, %v4637
    %vm4639 = vcmp.eq.s32.totalorder %v189, 6
    %v4640 = vsel %vm4639, %v4150, 0.0
    %v4641 = vadd.f32 %v4638, %v4640
    %vm4642 = vcmp.eq.s32.totalorder %v189, 7
    %v4643 = vsel %vm4642, %v4620, 0.0
    %v4644 = vadd.f32 %v4641, %v4643
    %vm4645 = vcmask 57344
    %4646 = vst.msk [vmem:[#allocation14] sm:$0x1] %vm4645, %v4644
    // Predicated region
    $region46: #{tpu_custom_call.1} parent=1 // pred_check
      _
    $region47: #{tpu_custom_call.1} parent=1 // pred_check_branch
      %4648 = sbr.rel (0) target = $region49
    $region48: #{tpu_custom_call.1} parent=1 // pred_region
      %s4650 = ssub.s32 16, 16
      %4651 = vsyncadd [#allocation7], %s4650
      %s4653 = sshll.u32 [#allocation14], 4
      %s4654 = int_to_ptr.vmem [resolvable:$true] %s4653
      %4656 = dma.vmem_to_hbm [thread:$0]  %s4654, 16, %s6, [#allocation7]
    $region49: #{tpu_custom_call.1} parent=1 // pred_fallthru
      _
    // Predicated region
    $region50: #{tpu_custom_call.1} parent=1 // pred_check
      _
    $region51: #{tpu_custom_call.1} parent=1 // pred_check_branch
      %4658 = sbr.rel (0) target = $region53
    $region52: #{tpu_custom_call.1} parent=1 // pred_region
      %4659 = dma.done [#allocation7], 16
    $region53: #{tpu_custom_call.1} parent=1 // pred_fallthru
      _
    %4660 = vsyncpa [#allocation6], 1
    %4661 = vsyncpa [#allocation9], 1
    %4662 = vsyncpa [#allocation12], 1
    %4663 = vsyncpa [#allocation7], 1

</llo_original>
